<compile_context>
chip_gen: v5e
topology: v5e:2x2
jax: 0.10.0
libtpu: 0.0.40
codegen_flags: <defaults>
</compile_context>

<pallas_src>
import functools
import math

import jax
import jax.numpy as jnp
from jax.experimental import pallas as pl
from jax.experimental.pallas import tpu as pltpu

BN_EPS = 1e-5
LRELU_SLOPE = 0.2

# Tile targets: big enough to keep the MXU fed, small enough to double-buffer
# comfortably inside v7x's 64 MiB/TC VMEM (and trivially on v5e/v6e).
TM, TN, TK = 256, 256, 512

_CP_MM = pltpu.CompilerParams(
    dimension_semantics=("parallel", "parallel", "arbitrary"))
# N axis outermost + parallel (megacore); M/K sequential because the BN-stats
# output block is accumulated across the M grid axis.
_CP_MM_STATS = pltpu.CompilerParams(
    dimension_semantics=("parallel", "arbitrary", "arbitrary"))
_CP_EW = pltpu.CompilerParams(
    dimension_semantics=("parallel", "parallel"))


def _round_up(x, m):
    return (x + m - 1) // m * m


def _tile(dim, target, align):
    """Pick a tile size (<= target, aligned) and the padded dimension."""
    if dim <= target:
        t = _round_up(dim, align)
        return t, t
    return target, _round_up(dim, target)


def _pad2d(a, mp, np_):
    m, n = a.shape
    if m == mp and n == np_:
        return a
    return jnp.pad(a, ((0, mp - m), (0, np_ - n)))


# ----------------------------- Pallas kernels -----------------------------

def _mm_act_kernel(x_ref, w_ref, o_ref, acc_ref, *, act):
    """Tiled matmul with fused activation epilogue (LeakyReLU / Sigmoid / none)."""
    @pl.when(pl.program_id(2) == 0)
    def _init():
        acc_ref[...] = jnp.zeros_like(acc_ref)

    acc_ref[...] += jnp.dot(x_ref[...], w_ref[...],
                            preferred_element_type=jnp.float32)

    @pl.when(pl.program_id(2) == pl.num_programs(2) - 1)
    def _fin():
        y = acc_ref[...]
        if act == "leaky_relu":
            y = jnp.where(y >= 0.0, y, y * LRELU_SLOPE)
        elif act == "sigmoid":
            y = jax.nn.sigmoid(y)
        o_ref[...] = y.astype(o_ref.dtype)


def _mm_bnstats_kernel(x_ref, w_ref, y_ref, stats_ref, acc_ref):
    """Tiled matmul; also accumulates per-channel sum / sum-of-squares
    (rows 0 and 1 of stats) across the M grid axis (grid order: N, M, K)."""
    i = pl.program_id(1)  # M axis
    k = pl.program_id(2)  # K axis

    @pl.when((i == 0) & (k == 0))
    def _init_stats():
        stats_ref[...] = jnp.zeros_like(stats_ref)

    @pl.when(k == 0)
    def _init_acc():
        acc_ref[...] = jnp.zeros_like(acc_ref)

    acc_ref[...] += jnp.dot(x_ref[...], w_ref[...],
                            preferred_element_type=jnp.float32)

    @pl.when(k == pl.num_programs(2) - 1)
    def _fin():
        y = acc_ref[...]
        y_ref[...] = y.astype(y_ref.dtype)
        stats_ref[0:1, :] += jnp.sum(y, axis=0, keepdims=True)
        stats_ref[1:2, :] += jnp.sum(y * y, axis=0, keepdims=True)


def _bn_lrelu_kernel(y_ref, stats_ref, g_ref, b_ref, o_ref, *, inv_m):
    """Apply training-mode BatchNorm (from precomputed sums) + LeakyReLU."""
    mean = stats_ref[0:1, :] * inv_m
    var = stats_ref[1:2, :] * inv_m - mean * mean          # biased variance
    scale = g_ref[...] * jax.lax.rsqrt(var + BN_EPS)
    shift = b_ref[...] - mean * scale
    y = y_ref[...].astype(jnp.float32) * scale + shift
    o_ref[...] = jnp.where(y >= 0.0, y, y * LRELU_SLOPE).astype(o_ref.dtype)


# ----------------------------- Pallas wrappers -----------------------------

def pallas_matmul_act(x, w, *, act, out_dtype):
    M, K = x.shape
    _, N = w.shape
    tm, Mp = _tile(M, TM, 8)
    tn, Np = _tile(N, TN, 128)
    tk, Kp = _tile(K, TK, 128)
    xp = _pad2d(x, Mp, Kp)
    wp = _pad2d(w, Kp, Np)
    out = pl.pallas_call(
        functools.partial(_mm_act_kernel, act=act),
        out_shape=jax.ShapeDtypeStruct((Mp, Np), out_dtype),
        grid=(Mp // tm, Np // tn, Kp // tk),
        in_specs=[
            pl.BlockSpec((tm, tk), lambda i, j, k: (i, k)),
            pl.BlockSpec((tk, tn), lambda i, j, k: (k, j)),
        ],
        out_specs=pl.BlockSpec((tm, tn), lambda i, j, k: (i, j)),
        scratch_shapes=[pltpu.VMEM((tm, tn), jnp.float32)],
        compiler_params=_CP_MM,
    )(xp, wp)
    return out


def pallas_matmul_bnstats(x, w):
    M, K = x.shape
    _, N = w.shape
    tm, Mp = _tile(M, TM, 8)
    tn, Np = _tile(N, TN, 128)
    tk, Kp = _tile(K, TK, 128)
    xp = _pad2d(x, Mp, Kp)
    wp = _pad2d(w, Kp, Np)
    y, stats = pl.pallas_call(
        _mm_bnstats_kernel,
        out_shape=(jax.ShapeDtypeStruct((Mp, Np), jnp.float32),
                   jax.ShapeDtypeStruct((8, Np), jnp.float32)),
        grid=(Np // tn, Mp // tm, Kp // tk),       # N outermost (see kernel)
        in_specs=[
            pl.BlockSpec((tm, tk), lambda j, i, k: (i, k)),
            pl.BlockSpec((tk, tn), lambda j, i, k: (k, j)),
        ],
        out_specs=(pl.BlockSpec((tm, tn), lambda j, i, k: (i, j)),
                   pl.BlockSpec((8, tn), lambda j, i, k: (0, j))),
        scratch_shapes=[pltpu.VMEM((tm, tn), jnp.float32)],
        compiler_params=_CP_MM_STATS,
    )(xp, wp)
    return y, stats


def pallas_bn_lrelu(y, stats, gamma, beta, m_true, *, out_dtype):
    Mp, Np = y.shape
    tm, _ = _tile(Mp, TM, 8)
    tn, _ = _tile(Np, TN, 128)
    g = _pad2d(gamma.reshape(1, -1).astype(jnp.float32), 1, Np)
    b = _pad2d(beta.reshape(1, -1).astype(jnp.float32), 1, Np)
    return pl.pallas_call(
        functools.partial(_bn_lrelu_kernel, inv_m=1.0 / float(m_true)),
        out_shape=jax.ShapeDtypeStruct((Mp, Np), out_dtype),
        grid=(Mp // tm, Np // tn),
        in_specs=[
            pl.BlockSpec((tm, tn), lambda i, j: (i, j)),
            pl.BlockSpec((8, tn), lambda i, j: (0, j)),
            pl.BlockSpec((1, tn), lambda i, j: (0, j)),
            pl.BlockSpec((1, tn), lambda i, j: (0, j)),
        ],
        out_specs=pl.BlockSpec((tm, tn), lambda i, j: (i, j)),
        compiler_params=_CP_EW,
    )(y, stats, g, b)


# ----------------------------- conv glue (XLA) -----------------------------

def _im2col_s2(x_nhwc, kh=4, kw=4, stride=2, pad=1):
    """4x4 / stride-2 / pad-1 patch extraction. Returns (M, kh*kw*C) and shape."""
    n, h, w, c = x_nhwc.shape
    xp = jnp.pad(x_nhwc, ((0, 0), (pad, pad), (pad, pad), (0, 0)))
    hp, wp = h + 2 * pad, w + 2 * pad
    ho = (hp - kh) // stride + 1
    wo = (wp - kw) // stride + 1
    taps = []
    for a in range(kh):
        for b in range(kw):
            taps.append(xp[:, a:a + stride * ho:stride,
                           b:b + stride * wo:stride, :])
    xcol = jnp.concatenate(taps, axis=-1).reshape(n * ho * wo, kh * kw * c)
    return xcol, (n, ho, wo)


def _w_to_mat(w_oihw):
    cout, cin, kh, kw = w_oihw.shape
    return jnp.transpose(w_oihw, (2, 3, 1, 0)).reshape(kh * kw * cin, cout)


# ----------------------------- model -----------------------------

def init_params(key, channel_in, ndf=64):
    ks = jax.random.split(key, 4)

    def conv_w(k, cout, cin, ksz=4):
        bound = 1.0 / math.sqrt(cin * ksz * ksz)
        return jax.random.uniform(k, (cout, cin, ksz, ksz), jnp.float32,
                                  -bound, bound)

    return {
        "w1": conv_w(ks[0], ndf, channel_in),
        "w2": conv_w(ks[1], ndf * 2, ndf),
        "g2": jnp.ones((ndf * 2,), jnp.float32),
        "b2": jnp.zeros((ndf * 2,), jnp.float32),
        "w3": conv_w(ks[2], ndf * 4, ndf * 2),
        "g3": jnp.ones((ndf * 4,), jnp.float32),
        "b3": jnp.zeros((ndf * 4,), jnp.float32),
        "w4": conv_w(ks[3], 1, ndf * 4),
    }


def make_forward(channel_in, ndf=64):
    @jax.jit
    def forward(params, x_nchw):
        # NCHW (PyTorch) -> NHWC internal, bf16 matmul operands.
        x = jnp.transpose(x_nchw, (0, 2, 3, 1)).astype(jnp.bfloat16)

        # --- fe[0:2]: conv(channel_in -> ndf) + LeakyReLU (fused epilogue) ---
        xcol, (n, h, w) = _im2col_s2(x)
        y = pallas_matmul_act(xcol, _w_to_mat(params["w1"]).astype(jnp.bfloat16),
                              act="leaky_relu", out_dtype=jnp.bfloat16)
        a1 = y[:n * h * w, :ndf].reshape(n, h, w, ndf)

        # --- fe[2:5]: conv(ndf -> 2ndf) + BN(batch stats) + LeakyReLU ---
        xcol, (n, h, w) = _im2col_s2(a1)
        y, stats = pallas_matmul_bnstats(
            xcol, _w_to_mat(params["w2"]).astype(jnp.bfloat16))
        a2 = pallas_bn_lrelu(y, stats, params["g2"], params["b2"], n * h * w,
                             out_dtype=jnp.bfloat16)
        a2 = a2[:n * h * w, :2 * ndf].reshape(n, h, w, 2 * ndf)

        # --- fe[5:8]: conv(2ndf -> 4ndf) + BN(batch stats) + LeakyReLU ---
        xcol, (n, h, w) = _im2col_s2(a2)
        y, stats = pallas_matmul_bnstats(
            xcol, _w_to_mat(params["w3"]).astype(jnp.bfloat16))
        feat2d = pallas_bn_lrelu(y, stats, params["g3"], params["b3"],
                                 n * h * w, out_dtype=jnp.float32)
        feat_nhwc = feat2d[:n * h * w, :4 * ndf].reshape(n, h, w, 4 * ndf)

        # --- out_layer: conv(4ndf -> 1) + Sigmoid (fused epilogue) ---
        xcol, (n2, ho, wo) = _im2col_s2(feat_nhwc.astype(jnp.bfloat16))
        y = pallas_matmul_act(xcol, _w_to_mat(params["w4"]).astype(jnp.bfloat16),
                              act="sigmoid", out_dtype=jnp.float32)
        out = y[:n2 * ho * wo, :1]                 # == out.view(-1, 1)

        feature = jnp.transpose(feat_nhwc, (0, 3, 1, 2))   # back to NCHW
        return out, feature

    return forward


# ----------------------------- main -----------------------------

if __name__ == "__main__":
    channel_in = 4
    ndf = 64
    batch = 2
    spatial = 16

    key = jax.random.PRNGKey(0)
    kp, kx = jax.random.split(key)
    params = init_params(kp, channel_in, ndf)
    x = jax.random.normal(kx, (batch, channel_in, spatial, spatial), jnp.float32)

    fwd = make_forward(channel_in, ndf)
    out, feature = fwd(params, x)
    jax.block_until_ready((out, feature))

    assert out.shape == (batch * (spatial // 16) ** 2, 1)
    assert feature.shape == (batch, ndf * 4, spatial // 8, spatial // 8)
    assert bool(jnp.all(jnp.isfinite(out)))
    assert bool(jnp.all(jnp.isfinite(feature)))
    assert bool(jnp.all((out >= 0.0) & (out <= 1.0)))
    print("KERNEL_OK")
</pallas_src>

<mosaic_0001>
module attributes {stable_mosaic.version = 11 : i64} {
  func.func @_mm_act_kernel(%arg0: i32, %arg1: i32, %arg2: i32, %arg3: memref<128x128xbf16, #tpu.memory_space<vmem>>, %arg4: memref<128x128xbf16, #tpu.memory_space<vmem>>, %arg5: memref<128x128xbf16, #tpu.memory_space<vmem>>, %arg6: memref<128x128xf32, #tpu.memory_space<vmem>>) attributes {dimension_semantics = [#tpu.dimension_semantics<parallel>, #tpu.dimension_semantics<parallel>, #tpu.dimension_semantics<arbitrary>], iteration_bounds = array<i64: 1, 1, 1>, scalar_prefetch = 0 : i64, scratch_operands = 1 : i64, tpu.core_type = #tpu.core_type<tc>, window_params = [{transform_indices = @transform_0, window_bounds = array<i64: 128, 128>}, {transform_indices = @transform_1, window_bounds = array<i64: 128, 128>}, {transform_indices = @transform_2, window_bounds = array<i64: 128, 128>}]} {
    %c0_i32 = arith.constant 0 : i32
    %0 = arith.cmpi eq, %arg2, %c0_i32 : i32
    %1 = arith.extui %0 : i1 to i32
    %c0_i32_0 = arith.constant 0 : i32
    %2 = arith.cmpi ne, %1, %c0_i32_0 : i32
    scf.if %2 {
      %cst_10 = arith.constant 0.000000e+00 : f32
      %12 = vector.broadcast %cst_10 : f32 to vector<128x128xf32>
      %c0_11 = arith.constant 0 : index
      %c0_12 = arith.constant 0 : index
      %13 = vector.load %arg6[%c0_11, %c0_12] : memref<128x128xf32, #tpu.memory_space<vmem>>, vector<128x128xf32>
      tpu.vector_store %arg6[%c0_11, %c0_12], %12 {strides = array<i32>} : memref<128x128xf32, #tpu.memory_space<vmem>>, vector<128x128xf32>,
    } else {
    }
    %c0 = arith.constant 0 : index
    %c0_1 = arith.constant 0 : index
    %3 = vector.load %arg6[%c0, %c0_1] : memref<128x128xf32, #tpu.memory_space<vmem>>, vector<128x128xf32>
    %c0_2 = arith.constant 0 : index
    %c0_3 = arith.constant 0 : index
    %4 = vector.load %arg3[%c0_2, %c0_3] : memref<128x128xbf16, #tpu.memory_space<vmem>>, vector<128x128xbf16>
    %c0_4 = arith.constant 0 : index
    %c0_5 = arith.constant 0 : index
    %5 = vector.load %arg4[%c0_4, %c0_5] : memref<128x128xbf16, #tpu.memory_space<vmem>>, vector<128x128xbf16>
    %cst = arith.constant dense<0.000000e+00> : vector<128x128xf32>
    %6 = tpu.matmul %4, %5, %cst {dimension_numbers = #tpu.dot_dimension_numbers<[1], [0], [0], [1], [0, 0, 1, 1], [], []>} : vector<128x128xbf16>, vector<128x128xbf16>, vector<128x128xf32> -> vector<128x128xf32>
    %7 = arith.addf %3, %6 : vector<128x128xf32>
    %c0_6 = arith.constant 0 : index
    %c0_7 = arith.constant 0 : index
    %8 = vector.load %arg6[%c0_6, %c0_7] : memref<128x128xf32, #tpu.memory_space<vmem>>, vector<128x128xf32>
    tpu.vector_store %arg6[%c0_6, %c0_7], %7 {strides = array<i32>} : memref<128x128xf32, #tpu.memory_space<vmem>>, vector<128x128xf32>,
    %c0_i32_8 = arith.constant 0 : i32
    %9 = arith.cmpi eq, %arg2, %c0_i32_8 : i32
    %10 = arith.extui %9 : i1 to i32
    %c0_i32_9 = arith.constant 0 : i32
    %11 = arith.cmpi ne, %10, %c0_i32_9 : i32
    scf.if %11 {
      %c0_10 = arith.constant 0 : index
      %c0_11 = arith.constant 0 : index
      %12 = vector.load %arg6[%c0_10, %c0_11] : memref<128x128xf32, #tpu.memory_space<vmem>>, vector<128x128xf32>
      %cst_12 = arith.constant 0.000000e+00 : f32
      %13 = vector.broadcast %cst_12 : f32 to vector<128x128xf32>
      %14 = arith.cmpf oge, %12, %13 : vector<128x128xf32>
      %cst_13 = arith.constant 2.000000e-01 : f32
      %15 = vector.broadcast %cst_13 : f32 to vector<128x128xf32>
      %16 = arith.mulf %12, %15 : vector<128x128xf32>
      %17 = arith.select %14, %12, %16 : vector<128x128xi1>, vector<128x128xf32>
      %18 = arith.truncf %17 : vector<128x128xf32> to vector<128x128xbf16>
      %c0_14 = arith.constant 0 : index
      %c0_15 = arith.constant 0 : index
      %19 = vector.load %arg5[%c0_14, %c0_15] : memref<128x128xbf16, #tpu.memory_space<vmem>>, vector<128x128xbf16>
      tpu.vector_store %arg5[%c0_14, %c0_15], %18 {strides = array<i32>} : memref<128x128xbf16, #tpu.memory_space<vmem>>, vector<128x128xbf16>,
    } else {
    }
    return
  }
  func.func @transform_0(%arg0: i32, %arg1: i32, %arg2: i32) -> (i32, i32) {
    %c0_i32 = arith.constant 0 : i32
    return %arg0, %arg2 : i32, i32
  }
  func.func @transform_1(%arg0: i32, %arg1: i32, %arg2: i32) -> (i32, i32) {
    %c0_i32 = arith.constant 0 : i32
    return %arg2, %arg1 : i32, i32
  }
  func.func @transform_2(%arg0: i32, %arg1: i32, %arg2: i32) -> (i32, i32) {
    %c0_i32 = arith.constant 0 : i32
    return %arg0, %arg1 : i32, i32
  }
}

module attributes {stable_mosaic.version = 11 : i64} {
  func.func @_mm_bnstats_kernel(%arg0: i32, %arg1: i32, %arg2: i32, %arg3: memref<32x512xbf16, #tpu.memory_space<vmem>>, %arg4: memref<512x128xbf16, #tpu.memory_space<vmem>>, %arg5: memref<32x128xf32, #tpu.memory_space<vmem>>, %arg6: memref<8x128xf32, #tpu.memory_space<vmem>>, %arg7: memref<32x128xf32, #tpu.memory_space<vmem>>) attributes {dimension_semantics = [#tpu.dimension_semantics<parallel>, #tpu.dimension_semantics<arbitrary>, #tpu.dimension_semantics<arbitrary>], iteration_bounds = array<i64: 1, 1, 2>, scalar_prefetch = 0 : i64, scratch_operands = 1 : i64, tpu.core_type = #tpu.core_type<tc>, window_params = [{transform_indices = @transform_0, window_bounds = array<i64: 32, 512>}, {transform_indices = @transform_1, window_bounds = array<i64: 512, 128>}, {transform_indices = @transform_2, window_bounds = array<i64: 32, 128>}, {transform_indices = @transform_3, window_bounds = array<i64: 8, 128>}]} {
    %c0_i32 = arith.constant 0 : i32
    %0 = arith.cmpi eq, %arg1, %c0_i32 : i32
    %c0_i32_0 = arith.constant 0 : i32
    %1 = arith.cmpi eq, %arg2, %c0_i32_0 : i32
    %2 = arith.andi %0, %1 : i1
    %3 = arith.extui %2 : i1 to i32
    %c0_i32_1 = arith.constant 0 : i32
    %4 = arith.cmpi ne, %3, %c0_i32_1 : i32
    scf.if %4 {
      %cst_12 = arith.constant 0.000000e+00 : f32
      %17 = vector.broadcast %cst_12 : f32 to vector<8x128xf32>
      %c0_13 = arith.constant 0 : index
      %c0_14 = arith.constant 0 : index
      %18 = vector.load %arg6[%c0_13, %c0_14] : memref<8x128xf32, #tpu.memory_space<vmem>>, vector<8x128xf32>
      tpu.vector_store %arg6[%c0_13, %c0_14], %17 {strides = array<i32>} : memref<8x128xf32, #tpu.memory_space<vmem>>, vector<8x128xf32>,
    } else {
    }
    %c0_i32_2 = arith.constant 0 : i32
    %5 = arith.cmpi eq, %arg2, %c0_i32_2 : i32
    %6 = arith.extui %5 : i1 to i32
    %c0_i32_3 = arith.constant 0 : i32
    %7 = arith.cmpi ne, %6, %c0_i32_3 : i32
    scf.if %7 {
      %cst_12 = arith.constant 0.000000e+00 : f32
      %17 = vector.broadcast %cst_12 : f32 to vector<32x128xf32>
      %c0_13 = arith.constant 0 : index
      %c0_14 = arith.constant 0 : index
      %18 = vector.load %arg7[%c0_13, %c0_14] : memref<32x128xf32, #tpu.memory_space<vmem>>, vector<32x128xf32>
      tpu.vector_store %arg7[%c0_13, %c0_14], %17 {strides = array<i32>} : memref<32x128xf32, #tpu.memory_space<vmem>>, vector<32x128xf32>,
    } else {
    }
    %c0 = arith.constant 0 : index
    %c0_4 = arith.constant 0 : index
    %8 = vector.load %arg7[%c0, %c0_4] : memref<32x128xf32, #tpu.memory_space<vmem>>, vector<32x128xf32>
    %c0_5 = arith.constant 0 : index
    %c0_6 = arith.constant 0 : index
    %9 = vector.load %arg3[%c0_5, %c0_6] : memref<32x512xbf16, #tpu.memory_space<vmem>>, vector<32x512xbf16>
    %c0_7 = arith.constant 0 : index
    %c0_8 = arith.constant 0 : index
    %10 = vector.load %arg4[%c0_7, %c0_8] : memref<512x128xbf16, #tpu.memory_space<vmem>>, vector<512x128xbf16>
    %cst = arith.constant dense<0.000000e+00> : vector<32x128xf32>
    %11 = tpu.matmul %9, %10, %cst {dimension_numbers = #tpu.dot_dimension_numbers<[1], [0], [0], [1], [0, 0, 1, 1], [], []>} : vector<32x512xbf16>, vector<512x128xbf16>, vector<32x128xf32> -> vector<32x128xf32>
    %12 = arith.addf %8, %11 : vector<32x128xf32>
    %c0_9 = arith.constant 0 : index
    %c0_10 = arith.constant 0 : index
    %13 = vector.load %arg7[%c0_9, %c0_10] : memref<32x128xf32, #tpu.memory_space<vmem>>, vector<32x128xf32>
    tpu.vector_store %arg7[%c0_9, %c0_10], %12 {strides = array<i32>} : memref<32x128xf32, #tpu.memory_space<vmem>>, vector<32x128xf32>,
    %c1_i32 = arith.constant 1 : i32
    %14 = arith.cmpi eq, %arg2, %c1_i32 : i32
    %15 = arith.extui %14 : i1 to i32
    %c0_i32_11 = arith.constant 0 : i32
    %16 = arith.cmpi ne, %15, %c0_i32_11 : i32
    scf.if %16 {
      %c0_12 = arith.constant 0 : index
      %c0_13 = arith.constant 0 : index
      %17 = vector.load %arg7[%c0_12, %c0_13] : memref<32x128xf32, #tpu.memory_space<vmem>>, vector<32x128xf32>
      %c0_14 = arith.constant 0 : index
      %c0_15 = arith.constant 0 : index
      %18 = vector.load %arg5[%c0_14, %c0_15] : memref<32x128xf32, #tpu.memory_space<vmem>>, vector<32x128xf32>
      tpu.vector_store %arg5[%c0_14, %c0_15], %17 {strides = array<i32>} : memref<32x128xf32, #tpu.memory_space<vmem>>, vector<32x128xf32>,
      %c0_16 = arith.constant 0 : index
      %c0_17 = arith.constant 0 : index
      %19 = vector.load %arg6[%c0_16, %c0_17] : memref<8x128xf32, #tpu.memory_space<vmem>>, vector<1x128xf32>
      %cst_18 = arith.constant dense<0.000000e+00> : vector<128xf32>
      %20 = vector.multi_reduction <add>, %17, %cst_18 [0] : vector<32x128xf32> to vector<128xf32>
      %21 = vector.shape_cast %20 : vector<128xf32> to vector<1x128xf32>
      %22 = arith.addf %19, %21 : vector<1x128xf32>
      %c0_19 = arith.constant 0 : index
      %c0_20 = arith.constant 0 : index
      %23 = vector.load %arg6[%c0_19, %c0_20] : memref<8x128xf32, #tpu.memory_space<vmem>>, vector<1x128xf32>
      tpu.vector_store %arg6[%c0_19, %c0_20], %22 {strides = array<i32>} : memref<8x128xf32, #tpu.memory_space<vmem>>, vector<1x128xf32>,
      %c1 = arith.constant 1 : index
      %c0_21 = arith.constant 0 : index
      %24 = vector.load %arg6[%c1, %c0_21] : memref<8x128xf32, #tpu.memory_space<vmem>>, vector<1x128xf32>
      %25 = arith.mulf %17, %17 : vector<32x128xf32>
      %cst_22 = arith.constant dense<0.000000e+00> : vector<128xf32>
      %26 = vector.multi_reduction <add>, %25, %cst_22 [0] : vector<32x128xf32> to vector<128xf32>
      %27 = vector.shape_cast %26 : vector<128xf32> to vector<1x128xf32>
      %28 = arith.addf %24, %27 : vector<1x128xf32>
      %c1_23 = arith.constant 1 : index
      %c0_24 = arith.constant 0 : index
      %29 = vector.load %arg6[%c1_23, %c0_24] : memref<8x128xf32, #tpu.memory_space<vmem>>, vector<1x128xf32>
      tpu.vector_store %arg6[%c1_23, %c0_24], %28 {strides = array<i32>} : memref<8x128xf32, #tpu.memory_space<vmem>>, vector<1x128xf32>,
    } else {
    }
    return
  }
  func.func @transform_0(%arg0: i32, %arg1: i32, %arg2: i32) -> (i32, i32) {
    %c0_i32 = arith.constant 0 : i32
    return %arg1, %arg2 : i32, i32
  }
  func.func @transform_1(%arg0: i32, %arg1: i32, %arg2: i32) -> (i32, i32) {
    %c0_i32 = arith.constant 0 : i32
    return %arg2, %arg0 : i32, i32
  }
  func.func @transform_2(%arg0: i32, %arg1: i32, %arg2: i32) -> (i32, i32) {
    %c0_i32 = arith.constant 0 : i32
    return %arg1, %arg0 : i32, i32
  }
  func.func @transform_3(%arg0: i32, %arg1: i32, %arg2: i32) -> (i32, i32) {
    %c0_i32 = arith.constant 0 : i32
    %c0_i32_0 = arith.constant 0 : i32
    return %c0_i32, %arg0 : i32, i32
  }
}

module attributes {stable_mosaic.version = 11 : i64} {
  func.func @_bn_lrelu_kernel(%arg0: i32, %arg1: i32, %arg2: memref<32x128xf32, #tpu.memory_space<vmem>>, %arg3: memref<8x128xf32, #tpu.memory_space<vmem>>, %arg4: memref<1x128xf32, #tpu.memory_space<vmem>>, %arg5: memref<1x128xf32, #tpu.memory_space<vmem>>, %arg6: memref<32x128xbf16, #tpu.memory_space<vmem>>) attributes {dimension_semantics = [#tpu.dimension_semantics<parallel>, #tpu.dimension_semantics<parallel>], iteration_bounds = array<i64: 1, 1>, scalar_prefetch = 0 : i64, scratch_operands = 0 : i64, tpu.core_type = #tpu.core_type<tc>, window_params = [{transform_indices = @transform_0, window_bounds = array<i64: 32, 128>}, {transform_indices = @transform_1, window_bounds = array<i64: 8, 128>}, {transform_indices = @transform_2, window_bounds = array<i64: 1, 128>}, {transform_indices = @transform_3, window_bounds = array<i64: 1, 128>}, {transform_indices = @transform_4, window_bounds = array<i64: 32, 128>}]} {
    %c0 = arith.constant 0 : index
    %c0_0 = arith.constant 0 : index
    %0 = vector.load %arg3[%c0, %c0_0] : memref<8x128xf32, #tpu.memory_space<vmem>>, vector<1x128xf32>
    %cst = arith.constant 3.125000e-02 : f32
    %1 = vector.broadcast %cst : f32 to vector<1x128xf32>
    %2 = arith.mulf %0, %1 : vector<1x128xf32>
    %c1 = arith.constant 1 : index
    %c0_1 = arith.constant 0 : index
    %3 = vector.load %arg3[%c1, %c0_1] : memref<8x128xf32, #tpu.memory_space<vmem>>, vector<1x128xf32>
    %cst_2 = arith.constant 3.125000e-02 : f32
    %4 = vector.broadcast %cst_2 : f32 to vector<1x128xf32>
    %5 = arith.mulf %3, %4 : vector<1x128xf32>
    %6 = arith.mulf %2, %2 : vector<1x128xf32>
    %7 = arith.subf %5, %6 : vector<1x128xf32>
    %c0_3 = arith.constant 0 : index
    %c0_4 = arith.constant 0 : index
    %8 = vector.load %arg4[%c0_3, %c0_4] : memref<1x128xf32, #tpu.memory_space<vmem>>, vector<1x128xf32>
    %cst_5 = arith.constant 9.99999974E-6 : f32
    %9 = vector.broadcast %cst_5 : f32 to vector<1x128xf32>
    %10 = arith.addf %7, %9 : vector<1x128xf32>
    %11 = math.rsqrt %10 : vector<1x128xf32>
    %12 = arith.mulf %8, %11 : vector<1x128xf32>
    %c0_6 = arith.constant 0 : index
    %c0_7 = arith.constant 0 : index
    %13 = vector.load %arg5[%c0_6, %c0_7] : memref<1x128xf32, #tpu.memory_space<vmem>>, vector<1x128xf32>
    %14 = arith.mulf %2, %12 : vector<1x128xf32>
    %15 = arith.subf %13, %14 : vector<1x128xf32>
    %c0_8 = arith.constant 0 : index
    %c0_9 = arith.constant 0 : index
    %16 = vector.load %arg2[%c0_8, %c0_9] : memref<32x128xf32, #tpu.memory_space<vmem>>, vector<32x128xf32>
    %17 = vector.broadcast %12 : vector<1x128xf32> to vector<32x128xf32>
    %18 = arith.mulf %16, %17 : vector<32x128xf32>
    %19 = vector.broadcast %15 : vector<1x128xf32> to vector<32x128xf32>
    %20 = arith.addf %18, %19 : vector<32x128xf32>
    %cst_10 = arith.constant 0.000000e+00 : f32
    %21 = vector.broadcast %cst_10 : f32 to vector<32x128xf32>
    %22 = arith.cmpf oge, %20, %21 : vector<32x128xf32>
    %cst_11 = arith.constant 2.000000e-01 : f32
    %23 = vector.broadcast %cst_11 : f32 to vector<32x128xf32>
    %24 = arith.mulf %20, %23 : vector<32x128xf32>
    %25 = arith.select %22, %20, %24 : vector<32x128xi1>, vector<32x128xf32>
    %26 = arith.truncf %25 : vector<32x128xf32> to vector<32x128xbf16>
    %c0_12 = arith.constant 0 : index
    %c0_13 = arith.constant 0 : index
    %27 = vector.load %arg6[%c0_12, %c0_13] : memref<32x128xbf16, #tpu.memory_space<vmem>>, vector<32x128xbf16>
    tpu.vector_store %arg6[%c0_12, %c0_13], %26 {strides = array<i32>} : memref<32x128xbf16, #tpu.memory_space<vmem>>, vector<32x128xbf16>,
    return
  }
  func.func @transform_0(%arg0: i32, %arg1: i32) -> (i32, i32) {
    %c0_i32 = arith.constant 0 : i32
    return %arg0, %arg1 : i32, i32
  }
  func.func @transform_1(%arg0: i32, %arg1: i32) -> (i32, i32) {
    %c0_i32 = arith.constant 0 : i32
    %c0_i32_0 = arith.constant 0 : i32
    return %c0_i32, %arg1 : i32, i32
  }
  func.func @transform_2(%arg0: i32, %arg1: i32) -> (i32, i32) {
    %c0_i32 = arith.constant 0 : i32
    %c0_i32_0 = arith.constant 0 : i32
    return %c0_i32, %arg1 : i32, i32
  }
  func.func @transform_3(%arg0: i32, %arg1: i32) -> (i32, i32) {
    %c0_i32 = arith.constant 0 : i32
    %c0_i32_0 = arith.constant 0 : i32
    return %c0_i32, %arg1 : i32, i32
  }
  func.func @transform_4(%arg0: i32, %arg1: i32) -> (i32, i32) {
    %c0_i32 = arith.constant 0 : i32
    return %arg0, %arg1 : i32, i32
  }
}

module attributes {stable_mosaic.version = 11 : i64} {
  func.func @_bn_lrelu_kernel(%arg0: i32, %arg1: i32, %arg2: memref<8x256xf32, #tpu.memory_space<vmem>>, %arg3: memref<8x256xf32, #tpu.memory_space<vmem>>, %arg4: memref<1x256xf32, #tpu.memory_space<vmem>>, %arg5: memref<1x256xf32, #tpu.memory_space<vmem>>, %arg6: memref<8x256xf32, #tpu.memory_space<vmem>>) attributes {dimension_semantics = [#tpu.dimension_semantics<parallel>, #tpu.dimension_semantics<parallel>], iteration_bounds = array<i64: 1, 1>, scalar_prefetch = 0 : i64, scratch_operands = 0 : i64, tpu.core_type = #tpu.core_type<tc>, window_params = [{transform_indices = @transform_0, window_bounds = array<i64: 8, 256>}, {transform_indices = @transform_1, window_bounds = array<i64: 8, 256>}, {transform_indices = @transform_2, window_bounds = array<i64: 1, 256>}, {transform_indices = @transform_3, window_bounds = array<i64: 1, 256>}, {transform_indices = @transform_4, window_bounds = array<i64: 8, 256>}]} {
    %c0 = arith.constant 0 : index
    %c0_0 = arith.constant 0 : index
    %0 = vector.load %arg3[%c0, %c0_0] : memref<8x256xf32, #tpu.memory_space<vmem>>, vector<1x256xf32>
    %cst = arith.constant 1.250000e-01 : f32
    %1 = vector.broadcast %cst : f32 to vector<1x256xf32>
    %2 = arith.mulf %0, %1 : vector<1x256xf32>
    %c1 = arith.constant 1 : index
    %c0_1 = arith.constant 0 : index
    %3 = vector.load %arg3[%c1, %c0_1] : memref<8x256xf32, #tpu.memory_space<vmem>>, vector<1x256xf32>
    %cst_2 = arith.constant 1.250000e-01 : f32
    %4 = vector.broadcast %cst_2 : f32 to vector<1x256xf32>
    %5 = arith.mulf %3, %4 : vector<1x256xf32>
    %6 = arith.mulf %2, %2 : vector<1x256xf32>
    %7 = arith.subf %5, %6 : vector<1x256xf32>
    %c0_3 = arith.constant 0 : index
    %c0_4 = arith.constant 0 : index
    %8 = vector.load %arg4[%c0_3, %c0_4] : memref<1x256xf32, #tpu.memory_space<vmem>>, vector<1x256xf32>
    %cst_5 = arith.constant 9.99999974E-6 : f32
    %9 = vector.broadcast %cst_5 : f32 to vector<1x256xf32>
    %10 = arith.addf %7, %9 : vector<1x256xf32>
    %11 = math.rsqrt %10 : vector<1x256xf32>
    %12 = arith.mulf %8, %11 : vector<1x256xf32>
    %c0_6 = arith.constant 0 : index
    %c0_7 = arith.constant 0 : index
    %13 = vector.load %arg5[%c0_6, %c0_7] : memref<1x256xf32, #tpu.memory_space<vmem>>, vector<1x256xf32>
    %14 = arith.mulf %2, %12 : vector<1x256xf32>
    %15 = arith.subf %13, %14 : vector<1x256xf32>
    %c0_8 = arith.constant 0 : index
    %c0_9 = arith.constant 0 : index
    %16 = vector.load %arg2[%c0_8, %c0_9] : memref<8x256xf32, #tpu.memory_space<vmem>>, vector<8x256xf32>
    %17 = vector.broadcast %12 : vector<1x256xf32> to vector<8x256xf32>
    %18 = arith.mulf %16, %17 : vector<8x256xf32>
    %19 = vector.broadcast %15 : vector<1x256xf32> to vector<8x256xf32>
    %20 = arith.addf %18, %19 : vector<8x256xf32>
    %cst_10 = arith.constant 0.000000e+00 : f32
    %21 = vector.broadcast %cst_10 : f32 to vector<8x256xf32>
    %22 = arith.cmpf oge, %20, %21 : vector<8x256xf32>
    %cst_11 = arith.constant 2.000000e-01 : f32
    %23 = vector.broadcast %cst_11 : f32 to vector<8x256xf32>
    %24 = arith.mulf %20, %23 : vector<8x256xf32>
    %25 = arith.select %22, %20, %24 : vector<8x256xi1>, vector<8x256xf32>
    %c0_12 = arith.constant 0 : index
    %c0_13 = arith.constant 0 : index
    %26 = vector.load %arg6[%c0_12, %c0_13] : memref<8x256xf32, #tpu.memory_space<vmem>>, vector<8x256xf32>
    tpu.vector_store %arg6[%c0_12, %c0_13], %25 {strides = array<i32>} : memref<8x256xf32, #tpu.memory_space<vmem>>, vector<8x256xf32>,
    return
  }
  func.func @transform_0(%arg0: i32, %arg1: i32) -> (i32, i32) {
    %c0_i32 = arith.constant 0 : i32
    return %arg0, %arg1 : i32, i32
  }
  func.func @transform_1(%arg0: i32, %arg1: i32) -> (i32, i32) {
    %c0_i32 = arith.constant 0 : i32
    %c0_i32_0 = arith.constant 0 : i32
    return %c0_i32, %arg1 : i32, i32
  }
  func.func @transform_2(%arg0: i32, %arg1: i32) -> (i32, i32) {
    %c0_i32 = arith.constant 0 : i32
    %c0_i32_0 = arith.constant 0 : i32
    return %c0_i32, %arg1 : i32, i32
  }
  func.func @transform_3(%arg0: i32, %arg1: i32) -> (i32, i32) {
    %c0_i32 = arith.constant 0 : i32
    %c0_i32_0 = arith.constant 0 : i32
    return %c0_i32, %arg1 : i32, i32
  }
  func.func @transform_4(%arg0: i32, %arg1: i32) -> (i32, i32) {
    %c0_i32 = arith.constant 0 : i32
    return %arg0, %arg1 : i32, i32
  }
}

module attributes {stable_mosaic.version = 11 : i64} {
  func.func @_mm_bnstats_kernel(%arg0: i32, %arg1: i32, %arg2: i32, %arg3: memref<8x512xbf16, #tpu.memory_space<vmem>>, %arg4: memref<512x256xbf16, #tpu.memory_space<vmem>>, %arg5: memref<8x256xf32, #tpu.memory_space<vmem>>, %arg6: memref<8x256xf32, #tpu.memory_space<vmem>>, %arg7: memref<8x256xf32, #tpu.memory_space<vmem>>) attributes {dimension_semantics = [#tpu.dimension_semantics<parallel>, #tpu.dimension_semantics<arbitrary>, #tpu.dimension_semantics<arbitrary>], iteration_bounds = array<i64: 1, 1, 4>, scalar_prefetch = 0 : i64, scratch_operands = 1 : i64, tpu.core_type = #tpu.core_type<tc>, window_params = [{transform_indices = @transform_0, window_bounds = array<i64: 8, 512>}, {transform_indices = @transform_1, window_bounds = array<i64: 512, 256>}, {transform_indices = @transform_2, window_bounds = array<i64: 8, 256>}, {transform_indices = @transform_3, window_bounds = array<i64: 8, 256>}]} {
    %c0_i32 = arith.constant 0 : i32
    %0 = arith.cmpi eq, %arg1, %c0_i32 : i32
    %c0_i32_0 = arith.constant 0 : i32
    %1 = arith.cmpi eq, %arg2, %c0_i32_0 : i32
    %2 = arith.andi %0, %1 : i1
    %3 = arith.extui %2 : i1 to i32
    %c0_i32_1 = arith.constant 0 : i32
    %4 = arith.cmpi ne, %3, %c0_i32_1 : i32
    scf.if %4 {
      %cst_12 = arith.constant 0.000000e+00 : f32
      %17 = vector.broadcast %cst_12 : f32 to vector<8x256xf32>
      %c0_13 = arith.constant 0 : index
      %c0_14 = arith.constant 0 : index
      %18 = vector.load %arg6[%c0_13, %c0_14] : memref<8x256xf32, #tpu.memory_space<vmem>>, vector<8x256xf32>
      tpu.vector_store %arg6[%c0_13, %c0_14], %17 {strides = array<i32>} : memref<8x256xf32, #tpu.memory_space<vmem>>, vector<8x256xf32>,
    } else {
    }
    %c0_i32_2 = arith.constant 0 : i32
    %5 = arith.cmpi eq, %arg2, %c0_i32_2 : i32
    %6 = arith.extui %5 : i1 to i32
    %c0_i32_3 = arith.constant 0 : i32
    %7 = arith.cmpi ne, %6, %c0_i32_3 : i32
    scf.if %7 {
      %cst_12 = arith.constant 0.000000e+00 : f32
      %17 = vector.broadcast %cst_12 : f32 to vector<8x256xf32>
      %c0_13 = arith.constant 0 : index
      %c0_14 = arith.constant 0 : index
      %18 = vector.load %arg7[%c0_13, %c0_14] : memref<8x256xf32, #tpu.memory_space<vmem>>, vector<8x256xf32>
      tpu.vector_store %arg7[%c0_13, %c0_14], %17 {strides = array<i32>} : memref<8x256xf32, #tpu.memory_space<vmem>>, vector<8x256xf32>,
    } else {
    }
    %c0 = arith.constant 0 : index
    %c0_4 = arith.constant 0 : index
    %8 = vector.load %arg7[%c0, %c0_4] : memref<8x256xf32, #tpu.memory_space<vmem>>, vector<8x256xf32>
    %c0_5 = arith.constant 0 : index
    %c0_6 = arith.constant 0 : index
    %9 = vector.load %arg3[%c0_5, %c0_6] : memref<8x512xbf16, #tpu.memory_space<vmem>>, vector<8x512xbf16>
    %c0_7 = arith.constant 0 : index
    %c0_8 = arith.constant 0 : index
    %10 = vector.load %arg4[%c0_7, %c0_8] : memref<512x256xbf16, #tpu.memory_space<vmem>>, vector<512x256xbf16>
    %cst = arith.constant dense<0.000000e+00> : vector<8x256xf32>
    %11 = tpu.matmul %9, %10, %cst {dimension_numbers = #tpu.dot_dimension_numbers<[1], [0], [0], [1], [0, 0, 1, 1], [], []>} : vector<8x512xbf16>, vector<512x256xbf16>, vector<8x256xf32> -> vector<8x256xf32>
    %12 = arith.addf %8, %11 : vector<8x256xf32>
    %c0_9 = arith.constant 0 : index
    %c0_10 = arith.constant 0 : index
    %13 = vector.load %arg7[%c0_9, %c0_10] : memref<8x256xf32, #tpu.memory_space<vmem>>, vector<8x256xf32>
    tpu.vector_store %arg7[%c0_9, %c0_10], %12 {strides = array<i32>} : memref<8x256xf32, #tpu.memory_space<vmem>>, vector<8x256xf32>,
    %c3_i32 = arith.constant 3 : i32
    %14 = arith.cmpi eq, %arg2, %c3_i32 : i32
    %15 = arith.extui %14 : i1 to i32
    %c0_i32_11 = arith.constant 0 : i32
    %16 = arith.cmpi ne, %15, %c0_i32_11 : i32
    scf.if %16 {
      %c0_12 = arith.constant 0 : index
      %c0_13 = arith.constant 0 : index
      %17 = vector.load %arg7[%c0_12, %c0_13] : memref<8x256xf32, #tpu.memory_space<vmem>>, vector<8x256xf32>
      %c0_14 = arith.constant 0 : index
      %c0_15 = arith.constant 0 : index
      %18 = vector.load %arg5[%c0_14, %c0_15] : memref<8x256xf32, #tpu.memory_space<vmem>>, vector<8x256xf32>
      tpu.vector_store %arg5[%c0_14, %c0_15], %17 {strides = array<i32>} : memref<8x256xf32, #tpu.memory_space<vmem>>, vector<8x256xf32>,
      %c0_16 = arith.constant 0 : index
      %c0_17 = arith.constant 0 : index
      %19 = vector.load %arg6[%c0_16, %c0_17] : memref<8x256xf32, #tpu.memory_space<vmem>>, vector<1x256xf32>
      %cst_18 = arith.constant dense<0.000000e+00> : vector<256xf32>
      %20 = vector.multi_reduction <add>, %17, %cst_18 [0] : vector<8x256xf32> to vector<256xf32>
      %21 = vector.shape_cast %20 : vector<256xf32> to vector<1x256xf32>
      %22 = arith.addf %19, %21 : vector<1x256xf32>
      %c0_19 = arith.constant 0 : index
      %c0_20 = arith.constant 0 : index
      %23 = vector.load %arg6[%c0_19, %c0_20] : memref<8x256xf32, #tpu.memory_space<vmem>>, vector<1x256xf32>
      tpu.vector_store %arg6[%c0_19, %c0_20], %22 {strides = array<i32>} : memref<8x256xf32, #tpu.memory_space<vmem>>, vector<1x256xf32>,
      %c1 = arith.constant 1 : index
      %c0_21 = arith.constant 0 : index
      %24 = vector.load %arg6[%c1, %c0_21] : memref<8x256xf32, #tpu.memory_space<vmem>>, vector<1x256xf32>
      %25 = arith.mulf %17, %17 : vector<8x256xf32>
      %cst_22 = arith.constant dense<0.000000e+00> : vector<256xf32>
      %26 = vector.multi_reduction <add>, %25, %cst_22 [0] : vector<8x256xf32> to vector<256xf32>
      %27 = vector.shape_cast %26 : vector<256xf32> to vector<1x256xf32>
      %28 = arith.addf %24, %27 : vector<1x256xf32>
      %c1_23 = arith.constant 1 : index
      %c0_24 = arith.constant 0 : index
      %29 = vector.load %arg6[%c1_23, %c0_24] : memref<8x256xf32, #tpu.memory_space<vmem>>, vector<1x256xf32>
      tpu.vector_store %arg6[%c1_23, %c0_24], %28 {strides = array<i32>} : memref<8x256xf32, #tpu.memory_space<vmem>>, vector<1x256xf32>,
    } else {
    }
    return
  }
  func.func @transform_0(%arg0: i32, %arg1: i32, %arg2: i32) -> (i32, i32) {
    %c0_i32 = arith.constant 0 : i32
    return %arg1, %arg2 : i32, i32
  }
  func.func @transform_1(%arg0: i32, %arg1: i32, %arg2: i32) -> (i32, i32) {
    %c0_i32 = arith.constant 0 : i32
    return %arg2, %arg0 : i32, i32
  }
  func.func @transform_2(%arg0: i32, %arg1: i32, %arg2: i32) -> (i32, i32) {
    %c0_i32 = arith.constant 0 : i32
    return %arg1, %arg0 : i32, i32
  }
  func.func @transform_3(%arg0: i32, %arg1: i32, %arg2: i32) -> (i32, i32) {
    %c0_i32 = arith.constant 0 : i32
    %c0_i32_0 = arith.constant 0 : i32
    return %c0_i32, %arg0 : i32, i32
  }
}

module attributes {stable_mosaic.version = 11 : i64} {
  func.func @_mm_act_kernel(%arg0: i32, %arg1: i32, %arg2: i32, %arg3: memref<8x512xbf16, #tpu.memory_space<vmem>>, %arg4: memref<512x128xbf16, #tpu.memory_space<vmem>>, %arg5: memref<8x128xf32, #tpu.memory_space<vmem>>, %arg6: memref<8x128xf32, #tpu.memory_space<vmem>>) attributes {dimension_semantics = [#tpu.dimension_semantics<parallel>, #tpu.dimension_semantics<parallel>, #tpu.dimension_semantics<arbitrary>], iteration_bounds = array<i64: 1, 1, 8>, scalar_prefetch = 0 : i64, scratch_operands = 1 : i64, tpu.core_type = #tpu.core_type<tc>, window_params = [{transform_indices = @transform_0, window_bounds = array<i64: 8, 512>}, {transform_indices = @transform_1, window_bounds = array<i64: 512, 128>}, {transform_indices = @transform_2, window_bounds = array<i64: 8, 128>}]} {
    %c0_i32 = arith.constant 0 : i32
    %0 = arith.cmpi eq, %arg2, %c0_i32 : i32
    %1 = arith.extui %0 : i1 to i32
    %c0_i32_0 = arith.constant 0 : i32
    %2 = arith.cmpi ne, %1, %c0_i32_0 : i32
    scf.if %2 {
      %cst_9 = arith.constant 0.000000e+00 : f32
      %12 = vector.broadcast %cst_9 : f32 to vector<8x128xf32>
      %c0_10 = arith.constant 0 : index
      %c0_11 = arith.constant 0 : index
      %13 = vector.load %arg6[%c0_10, %c0_11] : memref<8x128xf32, #tpu.memory_space<vmem>>, vector<8x128xf32>
      tpu.vector_store %arg6[%c0_10, %c0_11], %12 {strides = array<i32>} : memref<8x128xf32, #tpu.memory_space<vmem>>, vector<8x128xf32>,
    } else {
    }
    %c0 = arith.constant 0 : index
    %c0_1 = arith.constant 0 : index
    %3 = vector.load %arg6[%c0, %c0_1] : memref<8x128xf32, #tpu.memory_space<vmem>>, vector<8x128xf32>
    %c0_2 = arith.constant 0 : index
    %c0_3 = arith.constant 0 : index
    %4 = vector.load %arg3[%c0_2, %c0_3] : memref<8x512xbf16, #tpu.memory_space<vmem>>, vector<8x512xbf16>
    %c0_4 = arith.constant 0 : index
    %c0_5 = arith.constant 0 : index
    %5 = vector.load %arg4[%c0_4, %c0_5] : memref<512x128xbf16, #tpu.memory_space<vmem>>, vector<512x128xbf16>
    %cst = arith.constant dense<0.000000e+00> : vector<8x128xf32>
    %6 = tpu.matmul %4, %5, %cst {dimension_numbers = #tpu.dot_dimension_numbers<[1], [0], [0], [1], [0, 0, 1, 1], [], []>} : vector<8x512xbf16>, vector<512x128xbf16>, vector<8x128xf32> -> vector<8x128xf32>
    %7 = arith.addf %3, %6 : vector<8x128xf32>
    %c0_6 = arith.constant 0 : index
    %c0_7 = arith.constant 0 : index
    %8 = vector.load %arg6[%c0_6, %c0_7] : memref<8x128xf32, #tpu.memory_space<vmem>>, vector<8x128xf32>
    tpu.vector_store %arg6[%c0_6, %c0_7], %7 {strides = array<i32>} : memref<8x128xf32, #tpu.memory_space<vmem>>, vector<8x128xf32>,
    %c7_i32 = arith.constant 7 : i32
    %9 = arith.cmpi eq, %arg2, %c7_i32 : i32
    %10 = arith.extui %9 : i1 to i32
    %c0_i32_8 = arith.constant 0 : i32
    %11 = arith.cmpi ne, %10, %c0_i32_8 : i32
    scf.if %11 {
      %c0_9 = arith.constant 0 : index
      %c0_10 = arith.constant 0 : index
      %12 = vector.load %arg6[%c0_9, %c0_10] : memref<8x128xf32, #tpu.memory_space<vmem>>, vector<8x128xf32>
      %13 = arith.negf %12 : vector<8x128xf32>
      %14 = math.exp %13 : vector<8x128xf32>
      %cst_11 = arith.constant 1.000000e+00 : f32
      %15 = vector.broadcast %cst_11 : f32 to vector<8x128xf32>
      %16 = arith.addf %15, %14 : vector<8x128xf32>
      %17 = arith.divf %15, %16 : vector<8x128xf32>
      %c0_12 = arith.constant 0 : index
      %c0_13 = arith.constant 0 : index
      %18 = vector.load %arg5[%c0_12, %c0_13] : memref<8x128xf32, #tpu.memory_space<vmem>>, vector<8x128xf32>
      tpu.vector_store %arg5[%c0_12, %c0_13], %17 {strides = array<i32>} : memref<8x128xf32, #tpu.memory_space<vmem>>, vector<8x128xf32>,
    } else {
    }
    return
  }
  func.func @transform_0(%arg0: i32, %arg1: i32, %arg2: i32) -> (i32, i32) {
    %c0_i32 = arith.constant 0 : i32
    return %arg0, %arg2 : i32, i32
  }
  func.func @transform_1(%arg0: i32, %arg1: i32, %arg2: i32) -> (i32, i32) {
    %c0_i32 = arith.constant 0 : i32
    return %arg2, %arg1 : i32, i32
  }
  func.func @transform_2(%arg0: i32, %arg1: i32, %arg2: i32) -> (i32, i32) {
    %c0_i32 = arith.constant 0 : i32
    return %arg0, %arg1 : i32, i32
  }
}

</mosaic_0001>

<llo_original>
// kernel: forward.6
$region0: #{forward.6}
  #allocation0 [shape = 'u32[]', space=smem, size = 0x4, offset = 0x4, fixed_abs, tag = 'smem constant byte address 0x4 - core index']
  #allocation1 [shape = 'u32[72,128]{1,0:T(1,128)}', space=vmem, size = 0x9000, scoped, tag = 'internal scratch']
  #allocation2 [shape = 'f32[128,128]{1,0:T(8,128)}', space=vmem, size = 0x10000, scoped, tag = 'scratch operand']
  %s0 = inlined_call_operand.vmem [shape: bf16[128,128], index: 0, kind: input, shape index: {}]
  %s1 = inlined_call_operand.vmem [shape: bf16[128,128], index: 1, kind: input, shape index: {}]
  %s2 = inlined_call_operand.vmem [shape: bf16[128,128], index: 2, kind: output, shape index: {}]
  %s3 = sld [smem:[#allocation0]]
  $region26: #{forward.6} parent=0
    _
  %s5 = ssub.s32 1, %s3
  %s6 = scalar_select 0, %s5, %s3
  // Predicated region
  $region2: #{forward.6} parent=0 // pred_check
    _
  $region3: #{forward.6} parent=0 // pred_check_branch
    %8 = sbr.rel (0) target = $region5
  $region4: #{forward.6} parent=0 // pred_region
    _
  $region5: #{forward.6} parent=0 // pred_fallthru
    _
  // Predicated region
  $region6: #{forward.6} parent=0 // pred_check
    _
  $region7: #{forward.6} parent=0 // pred_check_branch
    %10 = sbr.rel (0) target = $region9
  $region8: #{forward.6} parent=0 // pred_region
    _
  $region9: #{forward.6} parent=0 // pred_fallthru
    _
  %p11 = scmp.eq.s32.totalorder 0, 0
  // Predicated region
  $region10: #{forward.6} parent=0 // pred_check
    %p12 = pneg %p11
  $region11: #{forward.6} parent=0 // pred_check_branch
    %14 = sbr.rel (%p12) target = $region13
  $region12: #{forward.6} parent=0 // pred_region
    %15 = vst [vmem:[#allocation2] sm:$0xff] 0.0
    %16 = vst [vmem:[#allocation2 + $0x8] sm:$0xff] 0.0
    %17 = vst [vmem:[#allocation2 + $0x10] sm:$0xff] 0.0
    %18 = vst [vmem:[#allocation2 + $0x18] sm:$0xff] 0.0
    %19 = vst [vmem:[#allocation2 + $0x20] sm:$0xff] 0.0
    %20 = vst [vmem:[#allocation2 + $0x28] sm:$0xff] 0.0
    %21 = vst [vmem:[#allocation2 + $0x30] sm:$0xff] 0.0
    %22 = vst [vmem:[#allocation2 + $0x38] sm:$0xff] 0.0
    %23 = vst [vmem:[#allocation2 + $0x40] sm:$0xff] 0.0
    %24 = vst [vmem:[#allocation2 + $0x48] sm:$0xff] 0.0
    %25 = vst [vmem:[#allocation2 + $0x50] sm:$0xff] 0.0
    %26 = vst [vmem:[#allocation2 + $0x58] sm:$0xff] 0.0
    %27 = vst [vmem:[#allocation2 + $0x60] sm:$0xff] 0.0
    %28 = vst [vmem:[#allocation2 + $0x68] sm:$0xff] 0.0
    %29 = vst [vmem:[#allocation2 + $0x70] sm:$0xff] 0.0
    %30 = vst [vmem:[#allocation2 + $0x78] sm:$0xff] 0.0
  $region13: #{forward.6} parent=0 // pred_fallthru
    _
  %v31 = vld [vmem:[#allocation2] sm:$0xff]
  %v32 = vld [vmem:[#allocation2 + $0x8] sm:$0xff]
  %v33 = vld [vmem:[#allocation2 + $0x10] sm:$0xff]
  %v34 = vld [vmem:[#allocation2 + $0x18] sm:$0xff]
  %v35 = vld [vmem:[#allocation2 + $0x20] sm:$0xff]
  %v36 = vld [vmem:[#allocation2 + $0x28] sm:$0xff]
  %v37 = vld [vmem:[#allocation2 + $0x30] sm:$0xff]
  %v38 = vld [vmem:[#allocation2 + $0x38] sm:$0xff]
  %v39 = vld [vmem:[#allocation2 + $0x40] sm:$0xff]
  %v40 = vld [vmem:[#allocation2 + $0x48] sm:$0xff]
  %v41 = vld [vmem:[#allocation2 + $0x50] sm:$0xff]
  %v42 = vld [vmem:[#allocation2 + $0x58] sm:$0xff]
  %v43 = vld [vmem:[#allocation2 + $0x60] sm:$0xff]
  %v44 = vld [vmem:[#allocation2 + $0x68] sm:$0xff]
  %v45 = vld [vmem:[#allocation2 + $0x70] sm:$0xff]
  %v46 = vld [vmem:[#allocation2 + $0x78] sm:$0xff]
  %v47 = vld [vmem:[%s0] sm:$0xf]
  %v48 = vld [vmem:[%s0 + $0x4] sm:$0xf]
  %v49 = vld [vmem:[%s0 + $0x8] sm:$0xf]
  %v50 = vld [vmem:[%s0 + $0xc] sm:$0xf]
  %v51 = vld [vmem:[%s0 + $0x10] sm:$0xf]
  %v52 = vld [vmem:[%s0 + $0x14] sm:$0xf]
  %v53 = vld [vmem:[%s0 + $0x18] sm:$0xf]
  %v54 = vld [vmem:[%s0 + $0x1c] sm:$0xf]
  %v55 = vld [vmem:[%s0 + $0x20] sm:$0xf]
  %v56 = vld [vmem:[%s0 + $0x24] sm:$0xf]
  %v57 = vld [vmem:[%s0 + $0x28] sm:$0xf]
  %v58 = vld [vmem:[%s0 + $0x2c] sm:$0xf]
  %v59 = vld [vmem:[%s0 + $0x30] sm:$0xf]
  %v60 = vld [vmem:[%s0 + $0x34] sm:$0xf]
  %v61 = vld [vmem:[%s0 + $0x38] sm:$0xf]
  %v62 = vld [vmem:[%s0 + $0x3c] sm:$0xf]
  %v63 = vld [vmem:[%s1] sm:$0xf]
  %v64 = vld [vmem:[%s1 + $0x4] sm:$0xf]
  %v65 = vld [vmem:[%s1 + $0x8] sm:$0xf]
  %v66 = vld [vmem:[%s1 + $0xc] sm:$0xf]
  %v67 = vld [vmem:[%s1 + $0x10] sm:$0xf]
  %v68 = vld [vmem:[%s1 + $0x14] sm:$0xf]
  %v69 = vld [vmem:[%s1 + $0x18] sm:$0xf]
  %v70 = vld [vmem:[%s1 + $0x1c] sm:$0xf]
  %v71 = vld [vmem:[%s1 + $0x20] sm:$0xf]
  %v72 = vld [vmem:[%s1 + $0x24] sm:$0xf]
  %v73 = vld [vmem:[%s1 + $0x28] sm:$0xf]
  %v74 = vld [vmem:[%s1 + $0x2c] sm:$0xf]
  %v75 = vld [vmem:[%s1 + $0x30] sm:$0xf]
  %v76 = vld [vmem:[%s1 + $0x34] sm:$0xf]
  %v77 = vld [vmem:[%s1 + $0x38] sm:$0xf]
  %v78 = vld [vmem:[%s1 + $0x3c] sm:$0xf]
  %v95 = vunpack.c.l.b16 %v47
  %v96 = vunpack.c.l.b16 %v48
  %v97 = vunpack.c.l.b16 %v49
  %v98 = vunpack.c.l.b16 %v50
  %v99 = vunpack.c.l.b16 %v51
  %v100 = vunpack.c.l.b16 %v52
  %v101 = vunpack.c.l.b16 %v53
  %v102 = vunpack.c.l.b16 %v54
  %v103 = vunpack.c.l.b16 %v55
  %v104 = vunpack.c.l.b16 %v56
  %v105 = vunpack.c.l.b16 %v57
  %v106 = vunpack.c.l.b16 %v58
  %v107 = vunpack.c.l.b16 %v59
  %v108 = vunpack.c.l.b16 %v60
  %v109 = vunpack.c.l.b16 %v61
  %v110 = vunpack.c.l.b16 %v62
  %v111 = vpack.c.b16 %v96, %v95
  %v112 = vpack.c.b16 %v98, %v97
  %v113 = vpack.c.b16 %v100, %v99
  %v114 = vpack.c.b16 %v102, %v101
  %v115 = vpack.c.b16 %v104, %v103
  %v116 = vpack.c.b16 %v106, %v105
  %v117 = vpack.c.b16 %v108, %v107
  %v118 = vpack.c.b16 %v110, %v109
  %v143 = vunpack.c.l.b16 %v63
  %v144 = vunpack.c.l.b16 %v64
  %v145 = vunpack.c.l.b16 %v65
  %v146 = vunpack.c.l.b16 %v66
  %v147 = vunpack.c.l.b16 %v67
  %v148 = vunpack.c.l.b16 %v68
  %v149 = vunpack.c.l.b16 %v69
  %v150 = vunpack.c.l.b16 %v70
  %v151 = vunpack.c.l.b16 %v71
  %v152 = vunpack.c.l.b16 %v72
  %v153 = vunpack.c.l.b16 %v73
  %v154 = vunpack.c.l.b16 %v74
  %v155 = vunpack.c.l.b16 %v75
  %v156 = vunpack.c.l.b16 %v76
  %v157 = vunpack.c.l.b16 %v77
  %v158 = vunpack.c.l.b16 %v78
  %v159 = vpack.c.b16 %v144, %v143
  %v160 = vpack.c.b16 %v146, %v145
  %v161 = vpack.c.b16 %v148, %v147
  %v162 = vpack.c.b16 %v150, %v149
  %v163 = vpack.c.b16 %v152, %v151
  %v164 = vpack.c.b16 %v154, %v153
  %v165 = vpack.c.b16 %v156, %v155
  %v166 = vpack.c.b16 %v158, %v157
  %175 = vmatpush.bf16.msra.mxu0 %v166
  %176 = vmatpush.bf16.msra.mxu0 %v165
  %177 = vmatpush.bf16.msra.mxu0 %v164
  %178 = vmatpush.bf16.msra.mxu0 %v163
  %179 = vmatpush.bf16.msra.mxu0 %v162
  %180 = vmatpush.bf16.msra.mxu0 %v161
  %181 = vmatpush.bf16.msra.mxu0 %v160
  %182 = vmatpush.bf16.msra.mxu0 %v159
  %183 = vmatmul.bf16.gmra.mxu0 %v111
  %v184 = vpop.f32.mrf.mxu0
  %v185 = vadd.f32 0.0, %v184
  %v186 = vpop.f32.mrf.mxu0
  %v187 = vadd.f32 0.0, %v186
  %188 = vmatmul.bf16.gmra.mxu0 %v112
  %v189 = vpop.f32.mrf.mxu0
  %v190 = vadd.f32 0.0, %v189
  %v191 = vpop.f32.mrf.mxu0
  %v192 = vadd.f32 0.0, %v191
  %193 = vmatmul.bf16.gmra.mxu0 %v113
  %v194 = vpop.f32.mrf.mxu0
  %v195 = vadd.f32 0.0, %v194
  %v196 = vpop.f32.mrf.mxu0
  %v197 = vadd.f32 0.0, %v196
  %198 = vmatmul.bf16.gmra.mxu0 %v114
  %v199 = vpop.f32.mrf.mxu0
  %v200 = vadd.f32 0.0, %v199
  %v201 = vpop.f32.mrf.mxu0
  %v202 = vadd.f32 0.0, %v201
  %203 = vmatmul.bf16.gmra.mxu0 %v115
  %v204 = vpop.f32.mrf.mxu0
  %v205 = vadd.f32 0.0, %v204
  %v206 = vpop.f32.mrf.mxu0
  %v207 = vadd.f32 0.0, %v206
  %208 = vmatmul.bf16.gmra.mxu0 %v116
  %v209 = vpop.f32.mrf.mxu0
  %v210 = vadd.f32 0.0, %v209
  %v211 = vpop.f32.mrf.mxu0
  %v212 = vadd.f32 0.0, %v211
  %213 = vmatmul.bf16.gmra.mxu0 %v117
  %v214 = vpop.f32.mrf.mxu0
  %v215 = vadd.f32 0.0, %v214
  %v216 = vpop.f32.mrf.mxu0
  %v217 = vadd.f32 0.0, %v216
  %218 = vmatmul.bf16.gmra.mxu0 %v118
  %v219 = vpop.f32.mrf.mxu0
  %v220 = vadd.f32 0.0, %v219
  %v221 = vpop.f32.mrf.mxu0
  %v222 = vadd.f32 0.0, %v221
  %223 = vdwg.mxu0
  %v224 = vadd.f32 %v31, %v185
  %v225 = vadd.f32 %v32, %v187
  %v226 = vadd.f32 %v33, %v190
  %v227 = vadd.f32 %v34, %v192
  %v228 = vadd.f32 %v35, %v195
  %v229 = vadd.f32 %v36, %v197
  %v230 = vadd.f32 %v37, %v200
  %v231 = vadd.f32 %v38, %v202
  %v232 = vadd.f32 %v39, %v205
  %v233 = vadd.f32 %v40, %v207
  %v234 = vadd.f32 %v41, %v210
  %v235 = vadd.f32 %v42, %v212
  %v236 = vadd.f32 %v43, %v215
  %v237 = vadd.f32 %v44, %v217
  %v238 = vadd.f32 %v45, %v220
  %v239 = vadd.f32 %v46, %v222
  %240 = vst [vmem:[#allocation2] sm:$0xff] %v224
  %241 = vst [vmem:[#allocation2 + $0x8] sm:$0xff] %v225
  %242 = vst [vmem:[#allocation2 + $0x10] sm:$0xff] %v226
  %243 = vst [vmem:[#allocation2 + $0x18] sm:$0xff] %v227
  %244 = vst [vmem:[#allocation2 + $0x20] sm:$0xff] %v228
  %245 = vst [vmem:[#allocation2 + $0x28] sm:$0xff] %v229
  %246 = vst [vmem:[#allocation2 + $0x30] sm:$0xff] %v230
  %247 = vst [vmem:[#allocation2 + $0x38] sm:$0xff] %v231
  %248 = vst [vmem:[#allocation2 + $0x40] sm:$0xff] %v232
  %249 = vst [vmem:[#allocation2 + $0x48] sm:$0xff] %v233
  %250 = vst [vmem:[#allocation2 + $0x50] sm:$0xff] %v234
  %251 = vst [vmem:[#allocation2 + $0x58] sm:$0xff] %v235
  %252 = vst [vmem:[#allocation2 + $0x60] sm:$0xff] %v236
  %253 = vst [vmem:[#allocation2 + $0x68] sm:$0xff] %v237
  %254 = vst [vmem:[#allocation2 + $0x70] sm:$0xff] %v238
  %255 = vst [vmem:[#allocation2 + $0x78] sm:$0xff] %v239
  // Predicated region
  $region14: #{forward.6} parent=0 // pred_check
    %p256 = pneg %p11
  $region15: #{forward.6} parent=0 // pred_check_branch
    %258 = sbr.rel (%p256) target = $region17
  $region16: #{forward.6} parent=0 // pred_region
    %v259 = vld [vmem:[#allocation2] sm:$0xff]
    %v260 = vld [vmem:[#allocation2 + $0x8] sm:$0xff]
    %v261 = vld [vmem:[#allocation2 + $0x10] sm:$0xff]
    %v262 = vld [vmem:[#allocation2 + $0x18] sm:$0xff]
    %v263 = vld [vmem:[#allocation2 + $0x20] sm:$0xff]
    %v264 = vld [vmem:[#allocation2 + $0x28] sm:$0xff]
    %v265 = vld [vmem:[#allocation2 + $0x30] sm:$0xff]
    %v266 = vld [vmem:[#allocation2 + $0x38] sm:$0xff]
    %v267 = vld [vmem:[#allocation2 + $0x40] sm:$0xff]
    %v268 = vld [vmem:[#allocation2 + $0x48] sm:$0xff]
    %v269 = vld [vmem:[#allocation2 + $0x50] sm:$0xff]
    %v270 = vld [vmem:[#allocation2 + $0x58] sm:$0xff]
    %v271 = vld [vmem:[#allocation2 + $0x60] sm:$0xff]
    %v272 = vld [vmem:[#allocation2 + $0x68] sm:$0xff]
    %v273 = vld [vmem:[#allocation2 + $0x70] sm:$0xff]
    %v274 = vld [vmem:[#allocation2 + $0x78] sm:$0xff]
    %vm275 = vcmp.ge.f32.partialorder %v259, 0.0
    %vm276 = vcmp.ge.f32.partialorder %v260, 0.0
    %vm277 = vcmp.ge.f32.partialorder %v261, 0.0
    %vm278 = vcmp.ge.f32.partialorder %v262, 0.0
    %vm279 = vcmp.ge.f32.partialorder %v263, 0.0
    %vm280 = vcmp.ge.f32.partialorder %v264, 0.0
    %vm281 = vcmp.ge.f32.partialorder %v265, 0.0
    %vm282 = vcmp.ge.f32.partialorder %v266, 0.0
    %vm283 = vcmp.ge.f32.partialorder %v267, 0.0
    %vm284 = vcmp.ge.f32.partialorder %v268, 0.0
    %vm285 = vcmp.ge.f32.partialorder %v269, 0.0
    %vm286 = vcmp.ge.f32.partialorder %v270, 0.0
    %vm287 = vcmp.ge.f32.partialorder %v271, 0.0
    %vm288 = vcmp.ge.f32.partialorder %v272, 0.0
    %vm289 = vcmp.ge.f32.partialorder %v273, 0.0
    %vm290 = vcmp.ge.f32.partialorder %v274, 0.0
    %v291 = vmul.f32 %v259, 0.2
    %v292 = vmul.f32 %v260, 0.2
    %v293 = vmul.f32 %v261, 0.2
    %v294 = vmul.f32 %v262, 0.2
    %v295 = vmul.f32 %v263, 0.2
    %v296 = vmul.f32 %v264, 0.2
    %v297 = vmul.f32 %v265, 0.2
    %v298 = vmul.f32 %v266, 0.2
    %v299 = vmul.f32 %v267, 0.2
    %v300 = vmul.f32 %v268, 0.2
    %v301 = vmul.f32 %v269, 0.2
    %v302 = vmul.f32 %v270, 0.2
    %v303 = vmul.f32 %v271, 0.2
    %v304 = vmul.f32 %v272, 0.2
    %v305 = vmul.f32 %v273, 0.2
    %v306 = vmul.f32 %v274, 0.2
    %v307 = vsel %vm275, %v259, %v291
    %v308 = vsel %vm276, %v260, %v292
    %v309 = vsel %vm277, %v261, %v293
    %v310 = vsel %vm278, %v262, %v294
    %v311 = vsel %vm279, %v263, %v295
    %v312 = vsel %vm280, %v264, %v296
    %v313 = vsel %vm281, %v265, %v297
    %v314 = vsel %vm282, %v266, %v298
    %v315 = vsel %vm283, %v267, %v299
    %v316 = vsel %vm284, %v268, %v300
    %v317 = vsel %vm285, %v269, %v301
    %v318 = vsel %vm286, %v270, %v302
    %v319 = vsel %vm287, %v271, %v303
    %v320 = vsel %vm288, %v272, %v304
    %v321 = vsel %vm289, %v273, %v305
    %v322 = vsel %vm290, %v274, %v306
    %v323 = vpack.c.bf16 %v307, %v307
    %v324 = vpack.c.bf16 %v308, %v308
    %v325 = vpack.c.bf16 %v309, %v309
    %v326 = vpack.c.bf16 %v310, %v310
    %v327 = vpack.c.bf16 %v311, %v311
    %v328 = vpack.c.bf16 %v312, %v312
    %v329 = vpack.c.bf16 %v313, %v313
    %v330 = vpack.c.bf16 %v314, %v314
    %v331 = vpack.c.bf16 %v315, %v315
    %v332 = vpack.c.bf16 %v316, %v316
    %v333 = vpack.c.bf16 %v317, %v317
    %v334 = vpack.c.bf16 %v318, %v318
    %v335 = vpack.c.bf16 %v319, %v319
    %v336 = vpack.c.bf16 %v320, %v320
    %v337 = vpack.c.bf16 %v321, %v321
    %v338 = vpack.c.bf16 %v322, %v322
    %339 = vst [vmem:[%s2] sm:$0xf] %v323
    %340 = vst [vmem:[%s2 + $0x4] sm:$0xf] %v324
    %341 = vst [vmem:[%s2 + $0x8] sm:$0xf] %v325
    %342 = vst [vmem:[%s2 + $0xc] sm:$0xf] %v326
    %343 = vst [vmem:[%s2 + $0x10] sm:$0xf] %v327
    %344 = vst [vmem:[%s2 + $0x14] sm:$0xf] %v328
    %345 = vst [vmem:[%s2 + $0x18] sm:$0xf] %v329
    %346 = vst [vmem:[%s2 + $0x1c] sm:$0xf] %v330
    %347 = vst [vmem:[%s2 + $0x20] sm:$0xf] %v331
    %348 = vst [vmem:[%s2 + $0x24] sm:$0xf] %v332
    %349 = vst [vmem:[%s2 + $0x28] sm:$0xf] %v333
    %350 = vst [vmem:[%s2 + $0x2c] sm:$0xf] %v334
    %351 = vst [vmem:[%s2 + $0x30] sm:$0xf] %v335
    %352 = vst [vmem:[%s2 + $0x34] sm:$0xf] %v336
    %353 = vst [vmem:[%s2 + $0x38] sm:$0xf] %v337
    %354 = vst [vmem:[%s2 + $0x3c] sm:$0xf] %v338
  $region17: #{forward.6} parent=0 // pred_fallthru
    _
  // Predicated region
  $region18: #{forward.6} parent=0 // pred_check
    _
  $region19: #{forward.6} parent=0 // pred_check_branch
    %356 = sbr.rel (0) target = $region21
  $region20: #{forward.6} parent=0 // pred_region
    _
  $region21: #{forward.6} parent=0 // pred_fallthru
    _
  // Predicated region
  $region22: #{forward.6} parent=0 // pred_check
    _
  $region23: #{forward.6} parent=0 // pred_check_branch
    %358 = sbr.rel (0) target = $region25
  $region24: #{forward.6} parent=0 // pred_region
    _
  $region25: #{forward.6} parent=0 // pred_fallthru
    _

// kernel: forward.7
$region0: #{forward.7}
  #allocation0 [shape = 'u32[]', space=smem, size = 0x4, offset = 0x4, fixed_abs, tag = 'smem constant byte address 0x4 - core index']
  #allocation1 [shape = 'u32[72,128]{1,0:T(1,128)}', space=vmem, size = 0x9000, scoped, tag = 'internal scratch']
  #allocation2 [shape = 'f32[32,128]{1,0:T(8,128)}', space=vmem, size = 0x4000, scoped, tag = 'scratch operand']
  %s0 = inlined_call_operand.vmem [shape: bf16[32,1024], index: 0, kind: input, shape index: {}]
  %s1 = inlined_call_operand.vmem [shape: bf16[1024,128], index: 1, kind: input, shape index: {}]
  %s2 = inlined_call_operand.vmem [shape: f32[32,128], index: 2, kind: output, shape index: {0}]
  %s3 = inlined_call_operand.vmem [shape: f32[8,128], index: 3, kind: output, shape index: {1}]
  %4 = xla_tuple %s2, %s3
  %s5 = sld [smem:[#allocation0]]
  $region84: #{forward.7} parent=0
    _
  %s7 = ssub.s32 1, %s5
  %s8 = scalar_select 0, %s7, %s5
  $region1: #{forward.7} parent=0
    #allocation3 [shape = 'u8[65536]{0}', space=vmem, size = 0x10000, scoped, tag = 'input window, operand 0']
    loop: start=0, step=1, limit=4
    $region2: #{forward.7} parent=1 // loop_pre_header
      _
    $region3: #{forward.7} parent=1 // loop_header
      %s10 = sphi 0, %s14
      %p11 = scmp.ge.s32.totalorder %s10, 4
      %s17 = sphi 0, %s36
      %s18 = sphi 0, %s32
      %s19 = sphi 0, %s28
      %s20 = sphi 0, %s17
      %s21 = sphi 0, %s18
      %s22 = sphi 0, %s19
      %s23 = sphi 0, %s20
      %s24 = sphi 0, %s21
      %s25 = sphi 0, %s22
      %s41 = sphi 0, %s43
      %s44 = sphi 0, %s41
      %s45 = sphi 0, %s44
      %s61 = sphi 0, %s45
      %s69 = sphi 0, %s71
      %s72 = sphi 0, %s69
      %s73 = sphi 0, %s72
      %s89 = sphi 0, %s73
      %s97 = sphi 0, %s99
      %s100 = sphi 0, %s97
      %s101 = sphi 0, %s100
      %s117 = sphi 0, %s101
      %s123 = sphi 0, %s125
      %s126 = sphi 0, %s123
      %s127 = sphi 0, %s126
      %s143 = sphi 0, %s127
    $region4: #{forward.7} parent=1 // loop_header_branch
      %13 = sbr.rel (%p11) target = $region8
    $region5: #{forward.7} parent=1 // loop_body
      %s15 = ssub.s32 %s10, 1
      %s16 = ssub.s32 %s10, 2
      %s26 = sadd.s32 1, %s19
      %p27 = scmp.ge.s32.totalorder %s26, 2
      %s28 = scalar_select %p27, 0, %s26
      %s29 = sadd.s32 1, %s18
      %s30 = scalar_select %p27, %s29, %s18
      %p31 = scmp.ge.s32.totalorder %s30, 1
      %s32 = scalar_select %p31, 0, %s30
      %s33 = sadd.s32 1, %s17
      %s34 = scalar_select %p31, %s33, %s17
      %p35 = scmp.ge.s32.totalorder %s34, 1
      %s36 = scalar_select %p35, 0, %s34
      %s37 = ssub.s32 %s18, %s32
      %s38 = ssub.s32 %s19, %s28
      %s39 = sor.u32 %s37, %s38
      %p40 = scmp.eq.s32.totalorder %s39, 0
      %s42 = sadd.s32 %s41, 1
      %s43 = scalar_select %p40, %s41, %s42
      %p46 = pneg %p40
      %p47 = scmp.eq.s32.totalorder %s10, 1
      %p48 = por %p46, %p47
      %p49 = scmp.ne.s32.totalorder %s41, %s44
      %p50 = scmp.eq.s32.totalorder %s10, 0
      %p51 = por %p49, %p50
      %p52 = scmp.ne.s32.totalorder %s41, %s44
      %p53 = scmp.eq.s32.totalorder %s15, 1
      %p54 = por %p52, %p53
      %p55 = scmp.ne.s32.totalorder %s44, %s45
      %p56 = scmp.eq.s32.totalorder %s15, 0
      %p57 = por %p55, %p56
      %p58 = scmp.ne.s32.totalorder %s44, %s45
      %p59 = scmp.eq.s32.totalorder %s16, 1
      %p60 = por %p58, %p59
      %p62 = scmp.ne.s32.totalorder %s45, %s61
      %p63 = scmp.eq.s32.totalorder %s16, 0
      %p64 = por %p62, %p63
      %s65 = ssub.s32 %s19, %s28
      %s66 = ssub.s32 %s17, %s36
      %s67 = sor.u32 %s65, %s66
      %p68 = scmp.eq.s32.totalorder %s67, 0
      %s70 = sadd.s32 %s69, 1
      %s71 = scalar_select %p68, %s69, %s70
      %p74 = pneg %p68
      %p75 = scmp.eq.s32.totalorder %s10, 1
      %p76 = por %p74, %p75
      %p77 = scmp.ne.s32.totalorder %s69, %s72
      %p78 = scmp.eq.s32.totalorder %s10, 0
      %p79 = por %p77, %p78
      %p80 = scmp.ne.s32.totalorder %s69, %s72
      %p81 = scmp.eq.s32.totalorder %s15, 1
      %p82 = por %p80, %p81
      %p83 = scmp.ne.s32.totalorder %s72, %s73
      %p84 = scmp.eq.s32.totalorder %s15, 0
      %p85 = por %p83, %p84
      %p86 = scmp.ne.s32.totalorder %s72, %s73
      %p87 = scmp.eq.s32.totalorder %s16, 1
      %p88 = por %p86, %p87
      %p90 = scmp.ne.s32.totalorder %s73, %s89
      %p91 = scmp.eq.s32.totalorder %s16, 0
      %p92 = por %p90, %p91
      %s93 = ssub.s32 %s18, %s32
      %s94 = ssub.s32 %s17, %s36
      %s95 = sor.u32 %s93, %s94
      %p96 = scmp.eq.s32.totalorder %s95, 0
      %s98 = sadd.s32 %s97, 1
      %s99 = scalar_select %p96, %s97, %s98
      %p102 = pneg %p96
      %p103 = scmp.eq.s32.totalorder %s10, 1
      %p104 = por %p102, %p103
      %p105 = scmp.ne.s32.totalorder %s97, %s100
      %p106 = scmp.eq.s32.totalorder %s10, 0
      %p107 = por %p105, %p106
      %p108 = scmp.ne.s32.totalorder %s97, %s100
      %p109 = scmp.eq.s32.totalorder %s15, 1
      %p110 = por %p108, %p109
      %p111 = scmp.ne.s32.totalorder %s100, %s101
      %p112 = scmp.eq.s32.totalorder %s15, 0
      %p113 = por %p111, %p112
      %p114 = scmp.ne.s32.totalorder %s100, %s101
      %p115 = scmp.eq.s32.totalorder %s16, 1
      %p116 = por %p114, %p115
      %p118 = scmp.ne.s32.totalorder %s101, %s117
      %p119 = scmp.eq.s32.totalorder %s16, 0
      %p120 = por %p118, %p119
      %s121 = ssub.s32 %s17, %s36
      %p122 = scmp.eq.s32.totalorder %s121, 0
      %s124 = sadd.s32 %s123, 1
      %s125 = scalar_select %p122, %s123, %s124
      %p128 = pneg %p122
      %p129 = scmp.eq.s32.totalorder %s10, 1
      %p130 = por %p128, %p129
      %p131 = scmp.ne.s32.totalorder %s123, %s126
      %p132 = scmp.eq.s32.totalorder %s10, 0
      %p133 = por %p131, %p132
      %p134 = scmp.ne.s32.totalorder %s123, %s126
      %p135 = scmp.eq.s32.totalorder %s15, 1
      %p136 = por %p134, %p135
      %p137 = scmp.ne.s32.totalorder %s126, %s127
      %p138 = scmp.eq.s32.totalorder %s15, 0
      %p139 = por %p137, %p138
      %p140 = scmp.ne.s32.totalorder %s126, %s127
      %p141 = scmp.eq.s32.totalorder %s16, 1
      %p142 = por %p140, %p141
      %p144 = scmp.ne.s32.totalorder %s127, %s143
      %p145 = scmp.eq.s32.totalorder %s16, 0
      %p146 = por %p144, %p145
      %p147 = scmp.le.s32.totalorder 1, %s10
      %p148 = scmp.lt.s32.totalorder %s10, 3
      %p149 = pnand %p147, %p148
      %p150 = pneg %p149
      // Predicated region
      $region9: #{forward.7} parent=5 // pred_check
        _
      $region10: #{forward.7} parent=5 // pred_check_branch
        %152 = sbr.rel (%p149) target = $region12
      $region11: #{forward.7} parent=5 // pred_region
        %s153 = ssub.s32 %s10, 1
      $region12: #{forward.7} parent=5 // pred_fallthru
        _
      %p154 = scmp.lt.s32.totalorder %s10, 2
      // Predicated region
      $region13: #{forward.7} parent=5 // pred_check
        %p155 = pneg %p154
      $region14: #{forward.7} parent=5 // pred_check_branch
        %157 = sbr.rel (%p155) target = $region16
      $region15: #{forward.7} parent=5 // pred_region
        // Predicated region
        $region17: #{forward.7} parent=15 // pred_check
          %p158 = pneg %p51
        $region18: #{forward.7} parent=15 // pred_check_branch
          %160 = sbr.rel (%p158) target = $region20
        $region19: #{forward.7} parent=15 // pred_region
          %s161 = sand.u32 %s41, 1
          %s162 = sand.u32 %s41, 1
          %s163 = smul.addr %s162, 64
          %s164 = scalar_lea.vmem [#allocation3], %s163
          %s165 = smul.u32 4, %s18
          %s166 = smul.u32 4, %s19
          %s167 = smul.addr %s165, 8
          %s168 = sadd.s32 %s166, %s167
          %s169 = smul.addr %s168, 4
          %s170 = scalar_lea.vmem %s0, %s169
          // Predicated region
          $region21: #{forward.7} parent=19 // pred_check
            _
          $region22: #{forward.7} parent=19 // pred_check_branch
            %172 = sbr.rel (0) target = $region24
          $region23: #{forward.7} parent=19 // pred_region
            // Predicated region
            $region25: #{forward.7} parent=23 // pred_check
              _
            $region26: #{forward.7} parent=23 // pred_check_branch
              %174 = sbr.rel (0) target = $region28
            $region27: #{forward.7} parent=23 // pred_region
              loop: start=0, step=1, limit=1
              $region29: #{forward.7} parent=27 // loop_pre_header
                _
              $region30: #{forward.7} parent=27 // loop_header
                %s176 = sphi 0, %s180
                %p177 = scmp.ge.s32.totalorder %s176, 1
                %s181 = sphi %s170, %s170
                %s182 = sphi %s164, %s164
              $region31: #{forward.7} parent=27 // loop_header_branch
                %179 = sbr.rel (%p177) target = $region35
              $region32: #{forward.7} parent=27 // loop_body
                %v183 = vld [vmem:[%s181] sm:$0xff]
                %184 = vst [vmem:[%s182] sm:$0xff] %v183
                %v185 = vld [vmem:[%s181 + $0x8] sm:$0xff]
                %186 = vst [vmem:[%s182 + $0x8] sm:$0xff] %v185
                %v187 = vld [vmem:[%s181 + $0x20] sm:$0xff]
                %188 = vst [vmem:[%s182 + $0x10] sm:$0xff] %v187
                %v189 = vld [vmem:[%s181 + $0x28] sm:$0xff]
                %190 = vst [vmem:[%s182 + $0x18] sm:$0xff] %v189
                %v191 = vld [vmem:[%s181 + $0x40] sm:$0xff]
                %192 = vst [vmem:[%s182 + $0x20] sm:$0xff] %v191
                %v193 = vld [vmem:[%s181 + $0x48] sm:$0xff]
                %194 = vst [vmem:[%s182 + $0x28] sm:$0xff] %v193
                %v195 = vld [vmem:[%s181 + $0x60] sm:$0xff]
                %196 = vst [vmem:[%s182 + $0x30] sm:$0xff] %v195
                %v197 = vld [vmem:[%s181 + $0x68] sm:$0xff]
                %198 = vst [vmem:[%s182 + $0x38] sm:$0xff] %v197
              $region33: #{forward.7} parent=27 // loop_footer
                %s180 = sadd.s32 1, %s176
              $region34: #{forward.7} parent=27 // loop_footer_branch
                %175 = sbr.rel target = $region30
              $region35: #{forward.7} parent=27 // loop_exit
                _
            $region28: #{forward.7} parent=23 // pred_fallthru
              _
            // Predicated region
            $region36: #{forward.7} parent=23 // pred_check
              _
            $region37: #{forward.7} parent=23 // pred_check_branch
              %200 = sbr.rel target = $region39
            $region38: #{forward.7} parent=23 // pred_region
              _
            $region39: #{forward.7} parent=23 // pred_fallthru
              _
          $region24: #{forward.7} parent=19 // pred_fallthru
            _
          %201 = vnop
        $region20: #{forward.7} parent=15 // pred_fallthru
          _
        // Predicated region
        $region40: #{forward.7} parent=15 // pred_check
          %p202 = pneg %p79
        $region41: #{forward.7} parent=15 // pred_check_branch
          %204 = sbr.rel (%p202) target = $region43
        $region42: #{forward.7} parent=15 // pred_region
          %s205 = smul.u32 64, %s19
          %p206 = scmp.lt.s32.totalorder %s205, 127
          %s207 = scalar_select %p206, %s205, 127
          %p208 = scmp.lt.s32.totalorder %s17, 0
          %s209 = scalar_select %p208, %s17, 0
          %s210 = sadd.s32 %s209, %s207
          %s211 = smul.addr %s210, 4
          %s212 = scalar_lea.vmem %s1, %s211
          %s213 = smul.u32 64, %s19
        $region43: #{forward.7} parent=15 // pred_fallthru
          _
      $region16: #{forward.7} parent=5 // pred_fallthru
        _
      %p214 = scmp.le.s32.totalorder 1, %s10
      %p215 = scmp.lt.s32.totalorder %s10, 3
      %p216 = pnand %p214, %p215
      %p217 = pneg %p216
      // Predicated region
      $region44: #{forward.7} parent=5 // pred_check
        _
      $region45: #{forward.7} parent=5 // pred_check_branch
        %219 = sbr.rel (%p216) target = $region47
      $region46: #{forward.7} parent=5 // pred_region
        %s220 = ssub.s32 %s10, 1
        %s221 = sand.u32 %s44, 1
        %s222 = sand.u32 %s44, 1
        %s223 = smul.addr %s222, 64
        %s224 = scalar_lea.vmem [#allocation3], %s223
        // Predicated region
        $region48: #{forward.7} parent=46 // pred_check
          %p225 = pneg %p57
        $region49: #{forward.7} parent=46 // pred_check_branch
          %227 = sbr.rel (%p225) target = $region51
        $region50: #{forward.7} parent=46 // pred_region
          _
        $region51: #{forward.7} parent=46 // pred_fallthru
          _
        %s228 = sand.u32 %s44, 1
        %s229 = sand.u32 %s44, 1
        %s230 = smul.addr %s229, 64
        %s231 = scalar_lea.vmem [#allocation3], %s230
        %p232 = pneg %p57
        %p233 = pneg %p54
        %s234 = smul.u32 64, %s22
        %p235 = scmp.lt.s32.totalorder %s234, 127
        %s236 = scalar_select %p235, %s234, 127
        %p237 = scmp.lt.s32.totalorder %s20, 0
        %s238 = scalar_select %p237, %s20, 0
        %s239 = sadd.s32 %s238, %s236
        %s240 = smul.addr %s239, 4
        %s241 = scalar_lea.vmem %s1, %s240
        %p242 = pneg %p85
        %p243 = pneg %p82
        %p244 = pneg %p113
        %p245 = pneg %p110
        %s246 = smul.u32 4, %s21
        %p247 = scmp.lt.s32.totalorder %s246, 3
        %s248 = scalar_select %p247, %s246, 3
        %p249 = scmp.lt.s32.totalorder %s20, 0
        %s250 = scalar_select %p249, %s20, 0
        %s251 = sadd.s32 %s250, %s248
        %s252 = smul.addr %s251, 8
        %s253 = scalar_lea.vmem %s2, %s252
        %p254 = pneg %p139
        %p255 = pneg %p136
        %p256 = scmp.lt.s32.totalorder %s20, 0
        %s257 = scalar_select %p256, %s20, 0
        %s258 = smul.addr %s257, 8
        %s259 = scalar_lea.vmem %s3, %s258
        %s260 = smul.u32 4, %s21
        %s261 = smul.u32 4, %s22
        %s262 = smul.u32 64, %s22
        %p263 = scmp.lt.s32.totalorder %s262, 127
        %s264 = scalar_select %p263, %s262, 127
        %p265 = scmp.lt.s32.totalorder %s20, 0
        %s266 = scalar_select %p265, %s20, 0
        %s267 = sadd.s32 %s266, %s264
        %s268 = smul.addr %s267, 4
        %s269 = scalar_lea.vmem %s1, %s268
        %s270 = smul.u32 64, %s22
        %s271 = smul.u32 4, %s21
        %p272 = scmp.lt.s32.totalorder %s271, 3
        %s273 = scalar_select %p272, %s271, 3
        %p274 = scmp.lt.s32.totalorder %s20, 0
        %s275 = scalar_select %p274, %s20, 0
        %s276 = sadd.s32 %s275, %s273
        %s277 = smul.addr %s276, 8
        %s278 = scalar_lea.vmem %s2, %s277
        %s279 = smul.u32 4, %s21
        %p280 = scmp.lt.s32.totalorder %s20, 0
        %s281 = scalar_select %p280, %s20, 0
        %s282 = smul.addr %s281, 8
        %s283 = scalar_lea.vmem %s3, %s282
        %p284 = scmp.eq.s32.totalorder %s21, 0
        %p285 = scmp.eq.s32.totalorder %s22, 0
        %p286 = pnand %p284, %p285
        %p287 = pneg %p286
        // Predicated region
        $region52: #{forward.7} parent=46 // pred_check
          _
        $region53: #{forward.7} parent=46 // pred_check_branch
          %289 = sbr.rel (%p286) target = $region55
        $region54: #{forward.7} parent=46 // pred_region
          %290 = vst [vmem:[%s283] sm:$0xff] 0.0
        $region55: #{forward.7} parent=46 // pred_fallthru
          _
        // Predicated region
        $region56: #{forward.7} parent=46 // pred_check
          %p291 = pneg %p285
        $region57: #{forward.7} parent=46 // pred_check_branch
          %293 = sbr.rel (%p291) target = $region59
        $region58: #{forward.7} parent=46 // pred_region
          %294 = vst [vmem:[#allocation2] sm:$0xff] 0.0
          %295 = vst [vmem:[#allocation2 + $0x8] sm:$0xff] 0.0
          %296 = vst [vmem:[#allocation2 + $0x10] sm:$0xff] 0.0
          %297 = vst [vmem:[#allocation2 + $0x18] sm:$0xff] 0.0
        $region59: #{forward.7} parent=46 // pred_fallthru
          _
        %v298 = vld [vmem:[#allocation2] sm:$0xff]
        %v299 = vld [vmem:[#allocation2 + $0x8] sm:$0xff]
        %v300 = vld [vmem:[#allocation2 + $0x10] sm:$0xff]
        %v301 = vld [vmem:[#allocation2 + $0x18] sm:$0xff]
        %v302 = vld [vmem:[%s224] sm:$0xff]
        %v303 = vld [vmem:[%s224 + $0x8] sm:$0xff]
        %v304 = vld [vmem:[%s224 + $0x10] sm:$0xff]
        %v305 = vld [vmem:[%s224 + $0x18] sm:$0xff]
        %v306 = vld [vmem:[%s224 + $0x20] sm:$0xff]
        %v307 = vld [vmem:[%s224 + $0x28] sm:$0xff]
        %v308 = vld [vmem:[%s224 + $0x30] sm:$0xff]
        %v309 = vld [vmem:[%s224 + $0x38] sm:$0xff]
        %v310 = vld [vmem:[%s269] sm:$0xf]
        %v311 = vld [vmem:[%s269 + $0x4] sm:$0xf]
        %v312 = vld [vmem:[%s269 + $0x8] sm:$0xf]
        %v313 = vld [vmem:[%s269 + $0xc] sm:$0xf]
        %v314 = vld [vmem:[%s269 + $0x10] sm:$0xf]
        %v315 = vld [vmem:[%s269 + $0x14] sm:$0xf]
        %v316 = vld [vmem:[%s269 + $0x18] sm:$0xf]
        %v317 = vld [vmem:[%s269 + $0x1c] sm:$0xf]
        %v318 = vld [vmem:[%s269 + $0x20] sm:$0xf]
        %v319 = vld [vmem:[%s269 + $0x24] sm:$0xf]
        %v320 = vld [vmem:[%s269 + $0x28] sm:$0xf]
        %v321 = vld [vmem:[%s269 + $0x2c] sm:$0xf]
        %v322 = vld [vmem:[%s269 + $0x30] sm:$0xf]
        %v323 = vld [vmem:[%s269 + $0x34] sm:$0xf]
        %v324 = vld [vmem:[%s269 + $0x38] sm:$0xf]
        %v325 = vld [vmem:[%s269 + $0x3c] sm:$0xf]
        %v326 = vld [vmem:[%s269 + $0x40] sm:$0xf]
        %v327 = vld [vmem:[%s269 + $0x44] sm:$0xf]
        %v328 = vld [vmem:[%s269 + $0x48] sm:$0xf]
        %v329 = vld [vmem:[%s269 + $0x4c] sm:$0xf]
        %v330 = vld [vmem:[%s269 + $0x50] sm:$0xf]
        %v331 = vld [vmem:[%s269 + $0x54] sm:$0xf]
        %v332 = vld [vmem:[%s269 + $0x58] sm:$0xf]
        %v333 = vld [vmem:[%s269 + $0x5c] sm:$0xf]
        %v334 = vld [vmem:[%s269 + $0x60] sm:$0xf]
        %v335 = vld [vmem:[%s269 + $0x64] sm:$0xf]
        %v336 = vld [vmem:[%s269 + $0x68] sm:$0xf]
        %v337 = vld [vmem:[%s269 + $0x6c] sm:$0xf]
        %v338 = vld [vmem:[%s269 + $0x70] sm:$0xf]
        %v339 = vld [vmem:[%s269 + $0x74] sm:$0xf]
        %v340 = vld [vmem:[%s269 + $0x78] sm:$0xf]
        %v341 = vld [vmem:[%s269 + $0x7c] sm:$0xf]
        %v342 = vld [vmem:[%s269 + $0x80] sm:$0xf]
        %v343 = vld [vmem:[%s269 + $0x84] sm:$0xf]
        %v344 = vld [vmem:[%s269 + $0x88] sm:$0xf]
        %v345 = vld [vmem:[%s269 + $0x8c] sm:$0xf]
        %v346 = vld [vmem:[%s269 + $0x90] sm:$0xf]
        %v347 = vld [vmem:[%s269 + $0x94] sm:$0xf]
        %v348 = vld [vmem:[%s269 + $0x98] sm:$0xf]
        %v349 = vld [vmem:[%s269 + $0x9c] sm:$0xf]
        %v350 = vld [vmem:[%s269 + $0xa0] sm:$0xf]
        %v351 = vld [vmem:[%s269 + $0xa4] sm:$0xf]
        %v352 = vld [vmem:[%s269 + $0xa8] sm:$0xf]
        %v353 = vld [vmem:[%s269 + $0xac] sm:$0xf]
        %v354 = vld [vmem:[%s269 + $0xb0] sm:$0xf]
        %v355 = vld [vmem:[%s269 + $0xb4] sm:$0xf]
        %v356 = vld [vmem:[%s269 + $0xb8] sm:$0xf]
        %v357 = vld [vmem:[%s269 + $0xbc] sm:$0xf]
        %v358 = vld [vmem:[%s269 + $0xc0] sm:$0xf]
        %v359 = vld [vmem:[%s269 + $0xc4] sm:$0xf]
        %v360 = vld [vmem:[%s269 + $0xc8] sm:$0xf]
        %v361 = vld [vmem:[%s269 + $0xcc] sm:$0xf]
        %v362 = vld [vmem:[%s269 + $0xd0] sm:$0xf]
        %v363 = vld [vmem:[%s269 + $0xd4] sm:$0xf]
        %v364 = vld [vmem:[%s269 + $0xd8] sm:$0xf]
        %v365 = vld [vmem:[%s269 + $0xdc] sm:$0xf]
        %v366 = vld [vmem:[%s269 + $0xe0] sm:$0xf]
        %v367 = vld [vmem:[%s269 + $0xe4] sm:$0xf]
        %v368 = vld [vmem:[%s269 + $0xe8] sm:$0xf]
        %v369 = vld [vmem:[%s269 + $0xec] sm:$0xf]
        %v370 = vld [vmem:[%s269 + $0xf0] sm:$0xf]
        %v371 = vld [vmem:[%s269 + $0xf4] sm:$0xf]
        %v372 = vld [vmem:[%s269 + $0xf8] sm:$0xf]
        %v373 = vld [vmem:[%s269 + $0xfc] sm:$0xf]
        %v382 = vunpack.c.l.b16 %v302
        %v383 = vunpack.c.h.b16 %v302
        %v384 = vunpack.c.l.b16 %v303
        %v385 = vunpack.c.h.b16 %v303
        %v386 = vunpack.c.l.b16 %v304
        %v387 = vunpack.c.h.b16 %v304
        %v388 = vunpack.c.l.b16 %v305
        %v389 = vunpack.c.h.b16 %v305
        %v390 = vunpack.c.l.b16 %v306
        %v391 = vunpack.c.h.b16 %v306
        %v392 = vunpack.c.l.b16 %v307
        %v393 = vunpack.c.h.b16 %v307
        %v394 = vunpack.c.l.b16 %v308
        %v395 = vunpack.c.h.b16 %v308
        %v396 = vunpack.c.l.b16 %v309
        %v397 = vunpack.c.h.b16 %v309
        %v398 = vpack.c.b16 %v386, %v382
        %v399 = vpack.c.b16 %v387, %v383
        %v400 = vpack.c.b16 %v388, %v384
        %v401 = vpack.c.b16 %v389, %v385
        %v402 = vpack.c.b16 %v394, %v390
        %v403 = vpack.c.b16 %v395, %v391
        %v404 = vpack.c.b16 %v396, %v392
        %v405 = vpack.c.b16 %v397, %v393
        %v478 = vunpack.c.l.b16 %v310
        %v479 = vunpack.c.l.b16 %v311
        %v480 = vunpack.c.l.b16 %v312
        %v481 = vunpack.c.l.b16 %v313
        %v482 = vunpack.c.l.b16 %v314
        %v483 = vunpack.c.l.b16 %v315
        %v484 = vunpack.c.l.b16 %v316
        %v485 = vunpack.c.l.b16 %v317
        %v486 = vunpack.c.l.b16 %v318
        %v487 = vunpack.c.l.b16 %v319
        %v488 = vunpack.c.l.b16 %v320
        %v489 = vunpack.c.l.b16 %v321
        %v490 = vunpack.c.l.b16 %v322
        %v491 = vunpack.c.l.b16 %v323
        %v492 = vunpack.c.l.b16 %v324
        %v493 = vunpack.c.l.b16 %v325
        %v494 = vunpack.c.l.b16 %v326
        %v495 = vunpack.c.l.b16 %v327
        %v496 = vunpack.c.l.b16 %v328
        %v497 = vunpack.c.l.b16 %v329
        %v498 = vunpack.c.l.b16 %v330
        %v499 = vunpack.c.l.b16 %v331
        %v500 = vunpack.c.l.b16 %v332
        %v501 = vunpack.c.l.b16 %v333
        %v502 = vunpack.c.l.b16 %v334
        %v503 = vunpack.c.l.b16 %v335
        %v504 = vunpack.c.l.b16 %v336
        %v505 = vunpack.c.l.b16 %v337
        %v506 = vunpack.c.l.b16 %v338
        %v507 = vunpack.c.l.b16 %v339
        %v508 = vunpack.c.l.b16 %v340
        %v509 = vunpack.c.l.b16 %v341
        %v510 = vunpack.c.l.b16 %v342
        %v511 = vunpack.c.l.b16 %v343
        %v512 = vunpack.c.l.b16 %v344
        %v513 = vunpack.c.l.b16 %v345
        %v514 = vunpack.c.l.b16 %v346
        %v515 = vunpack.c.l.b16 %v347
        %v516 = vunpack.c.l.b16 %v348
        %v517 = vunpack.c.l.b16 %v349
        %v518 = vunpack.c.l.b16 %v350
        %v519 = vunpack.c.l.b16 %v351
        %v520 = vunpack.c.l.b16 %v352
        %v521 = vunpack.c.l.b16 %v353
        %v522 = vunpack.c.l.b16 %v354
        %v523 = vunpack.c.l.b16 %v355
        %v524 = vunpack.c.l.b16 %v356
        %v525 = vunpack.c.l.b16 %v357
        %v526 = vunpack.c.l.b16 %v358
        %v527 = vunpack.c.l.b16 %v359
        %v528 = vunpack.c.l.b16 %v360
        %v529 = vunpack.c.l.b16 %v361
        %v530 = vunpack.c.l.b16 %v362
        %v531 = vunpack.c.l.b16 %v363
        %v532 = vunpack.c.l.b16 %v364
        %v533 = vunpack.c.l.b16 %v365
        %v534 = vunpack.c.l.b16 %v366
        %v535 = vunpack.c.l.b16 %v367
        %v536 = vunpack.c.l.b16 %v368
        %v537 = vunpack.c.l.b16 %v369
        %v538 = vunpack.c.l.b16 %v370
        %v539 = vunpack.c.l.b16 %v371
        %v540 = vunpack.c.l.b16 %v372
        %v541 = vunpack.c.l.b16 %v373
        %v542 = vpack.c.b16 %v479, %v478
        %v543 = vpack.c.b16 %v481, %v480
        %v544 = vpack.c.b16 %v483, %v482
        %v545 = vpack.c.b16 %v485, %v484
        %v546 = vpack.c.b16 %v487, %v486
        %v547 = vpack.c.b16 %v489, %v488
        %v548 = vpack.c.b16 %v491, %v490
        %v549 = vpack.c.b16 %v493, %v492
        %v550 = vpack.c.b16 %v495, %v494
        %v551 = vpack.c.b16 %v497, %v496
        %v552 = vpack.c.b16 %v499, %v498
        %v553 = vpack.c.b16 %v501, %v500
        %v554 = vpack.c.b16 %v503, %v502
        %v555 = vpack.c.b16 %v505, %v504
        %v556 = vpack.c.b16 %v507, %v506
        %v557 = vpack.c.b16 %v509, %v508
        %v558 = vpack.c.b16 %v511, %v510
        %v559 = vpack.c.b16 %v513, %v512
        %v560 = vpack.c.b16 %v515, %v514
        %v561 = vpack.c.b16 %v517, %v516
        %v562 = vpack.c.b16 %v519, %v518
        %v563 = vpack.c.b16 %v521, %v520
        %v564 = vpack.c.b16 %v523, %v522
        %v565 = vpack.c.b16 %v525, %v524
        %v566 = vpack.c.b16 %v527, %v526
        %v567 = vpack.c.b16 %v529, %v528
        %v568 = vpack.c.b16 %v531, %v530
        %v569 = vpack.c.b16 %v533, %v532
        %v570 = vpack.c.b16 %v535, %v534
        %v571 = vpack.c.b16 %v537, %v536
        %v572 = vpack.c.b16 %v539, %v538
        %v573 = vpack.c.b16 %v541, %v540
        %606 = vmatpush.bf16.msra.mxu0 %v549
        %607 = vmatpush.bf16.msra.mxu0 %v548
        %608 = vmatpush.bf16.msra.mxu0 %v547
        %609 = vmatpush.bf16.msra.mxu0 %v546
        %610 = vmatpush.bf16.msra.mxu0 %v545
        %611 = vmatpush.bf16.msra.mxu0 %v544
        %612 = vmatpush.bf16.msra.mxu0 %v543
        %613 = vmatpush.bf16.msra.mxu0 %v542
        %614 = vmatmul.bf16.gmra.mxu0 %v398
        %v615 = vpop.f32.mrf.mxu0
        %v616 = vadd.f32 0.0, %v615
        %v617 = vpop.f32.mrf.mxu0
        %v618 = vadd.f32 0.0, %v617
        %619 = vmatmul.bf16.gmra.mxu0 %v402
        %v620 = vpop.f32.mrf.mxu0
        %v621 = vadd.f32 0.0, %v620
        %v622 = vpop.f32.mrf.mxu0
        %v623 = vadd.f32 0.0, %v622
        %624 = vdwg.mxu0
        %625 = vmatpush.bf16.msra.mxu0 %v557
        %626 = vmatpush.bf16.msra.mxu0 %v556
        %627 = vmatpush.bf16.msra.mxu0 %v555
        %628 = vmatpush.bf16.msra.mxu0 %v554
        %629 = vmatpush.bf16.msra.mxu0 %v553
        %630 = vmatpush.bf16.msra.mxu0 %v552
        %631 = vmatpush.bf16.msra.mxu0 %v551
        %632 = vmatpush.bf16.msra.mxu0 %v550
        %633 = vmatmul.bf16.gmra.mxu0 %v399
        %v634 = vpop.f32.mrf.mxu0
        %v635 = vadd.f32 %v616, %v634
        %v636 = vpop.f32.mrf.mxu0
        %v637 = vadd.f32 %v618, %v636
        %638 = vmatmul.bf16.gmra.mxu0 %v403
        %v639 = vpop.f32.mrf.mxu0
        %v640 = vadd.f32 %v621, %v639
        %v641 = vpop.f32.mrf.mxu0
        %v642 = vadd.f32 %v623, %v641
        %643 = vdwg.mxu0
        %644 = vmatpush.bf16.msra.mxu0 %v565
        %645 = vmatpush.bf16.msra.mxu0 %v564
        %646 = vmatpush.bf16.msra.mxu0 %v563
        %647 = vmatpush.bf16.msra.mxu0 %v562
        %648 = vmatpush.bf16.msra.mxu0 %v561
        %649 = vmatpush.bf16.msra.mxu0 %v560
        %650 = vmatpush.bf16.msra.mxu0 %v559
        %651 = vmatpush.bf16.msra.mxu0 %v558
        %652 = vmatmul.bf16.gmra.mxu0 %v400
        %v653 = vpop.f32.mrf.mxu0
        %v654 = vadd.f32 %v635, %v653
        %v655 = vpop.f32.mrf.mxu0
        %v656 = vadd.f32 %v637, %v655
        %657 = vmatmul.bf16.gmra.mxu0 %v404
        %v658 = vpop.f32.mrf.mxu0
        %v659 = vadd.f32 %v640, %v658
        %v660 = vpop.f32.mrf.mxu0
        %v661 = vadd.f32 %v642, %v660
        %662 = vdwg.mxu0
        %663 = vmatpush.bf16.msra.mxu0 %v573
        %664 = vmatpush.bf16.msra.mxu0 %v572
        %665 = vmatpush.bf16.msra.mxu0 %v571
        %666 = vmatpush.bf16.msra.mxu0 %v570
        %667 = vmatpush.bf16.msra.mxu0 %v569
        %668 = vmatpush.bf16.msra.mxu0 %v568
        %669 = vmatpush.bf16.msra.mxu0 %v567
        %670 = vmatpush.bf16.msra.mxu0 %v566
        %671 = vmatmul.bf16.gmra.mxu0 %v401
        %v672 = vpop.f32.mrf.mxu0
        %v673 = vadd.f32 %v654, %v672
        %v674 = vpop.f32.mrf.mxu0
        %v675 = vadd.f32 %v656, %v674
        %676 = vmatmul.bf16.gmra.mxu0 %v405
        %v677 = vpop.f32.mrf.mxu0
        %v678 = vadd.f32 %v659, %v677
        %v679 = vpop.f32.mrf.mxu0
        %v680 = vadd.f32 %v661, %v679
        %681 = vdwg.mxu0
        %v682 = vadd.f32 %v298, %v673
        %v683 = vadd.f32 %v299, %v675
        %v684 = vadd.f32 %v300, %v678
        %v685 = vadd.f32 %v301, %v680
        %686 = vst [vmem:[#allocation2] sm:$0xff] %v682
        %687 = vst [vmem:[#allocation2 + $0x8] sm:$0xff] %v683
        %688 = vst [vmem:[#allocation2 + $0x10] sm:$0xff] %v684
        %689 = vst [vmem:[#allocation2 + $0x18] sm:$0xff] %v685
        %p690 = scmp.eq.s32.totalorder %s22, 1
        // Predicated region
        $region60: #{forward.7} parent=46 // pred_check
          %p691 = pneg %p690
        $region61: #{forward.7} parent=46 // pred_check_branch
          %693 = sbr.rel (%p691) target = $region63
        $region62: #{forward.7} parent=46 // pred_region
          %v694 = vld [vmem:[#allocation2] sm:$0xff]
          %v695 = vld [vmem:[#allocation2 + $0x8] sm:$0xff]
          %v696 = vld [vmem:[#allocation2 + $0x10] sm:$0xff]
          %v697 = vld [vmem:[#allocation2 + $0x18] sm:$0xff]
          %698 = vst [vmem:[%s278] sm:$0xff] %v694
          %699 = vst [vmem:[%s278 + $0x8] sm:$0xff] %v695
          %700 = vst [vmem:[%s278 + $0x10] sm:$0xff] %v696
          %701 = vst [vmem:[%s278 + $0x18] sm:$0xff] %v697
          %v702 = vld [vmem:[%s283] sm:$0x1]
          %v703 = vadd.f32 %v694, %v695
          %v704 = vadd.f32 %v703, %v696
          %v705 = vadd.f32 %v704, %v697
          %v706 = vrot.slane %v705, 4
          %v707 = vadd.f32 %v705, %v706
          %v708 = vrot.slane %v707, 2
          %v709 = vadd.f32 %v707, %v708
          %v710 = vrot.slane %v709, 1
          %v711 = vadd.f32 %v709, %v710
          %v712 = vadd.f32 %v702, %v711
          %713 = vst [vmem:[%s283] sm:$0x1] %v712
          %v714 = vld [vmem:[%s283 + $0x1] sm:$0x1]
          %v715 = vmul.f32 %v694, %v694
          %v716 = vmul.f32 %v695, %v695
          %v717 = vmul.f32 %v696, %v696
          %v718 = vmul.f32 %v697, %v697
          %v719 = vadd.f32 %v715, %v716
          %v720 = vadd.f32 %v719, %v717
          %v721 = vadd.f32 %v720, %v718
          %v722 = vrot.slane %v721, 4
          %v723 = vadd.f32 %v721, %v722
          %v724 = vrot.slane %v723, 2
          %v725 = vadd.f32 %v723, %v724
          %v726 = vrot.slane %v725, 1
          %v727 = vadd.f32 %v725, %v726
          %v728 = vadd.f32 %v714, %v727
          %729 = vst [vmem:[%s283 + $0x1] sm:$0x1] %v728
        $region63: #{forward.7} parent=46 // pred_fallthru
          _
        %s730 = smul.u32 4, %s21
        %p731 = scmp.lt.s32.totalorder %s730, 3
        %s732 = scalar_select %p731, %s730, 3
        %p733 = scmp.lt.s32.totalorder %s20, 0
        %s734 = scalar_select %p733, %s20, 0
        %s735 = sadd.s32 %s734, %s732
        %s736 = smul.addr %s735, 8
        %s737 = scalar_lea.vmem %s2, %s736
        %p738 = scmp.lt.s32.totalorder %s20, 0
        %s739 = scalar_select %p738, %s20, 0
        %s740 = smul.addr %s739, 8
        %s741 = scalar_lea.vmem %s3, %s740
        // Predicated region
        $region64: #{forward.7} parent=46 // pred_check
          %p742 = pneg %p110
        $region65: #{forward.7} parent=46 // pred_check_branch
          %744 = sbr.rel (%p742) target = $region67
        $region66: #{forward.7} parent=46 // pred_region
          %s745 = smul.u32 4, %s21
        $region67: #{forward.7} parent=46 // pred_fallthru
          _
        // Predicated region
        $region68: #{forward.7} parent=46 // pred_check
          %p746 = pneg %p136
        $region69: #{forward.7} parent=46 // pred_check_branch
          %748 = sbr.rel (%p746) target = $region71
        $region70: #{forward.7} parent=46 // pred_region
          _
        $region71: #{forward.7} parent=46 // pred_fallthru
          _
        // Predicated region
        $region72: #{forward.7} parent=46 // pred_check
          %p749 = pneg %p110
        $region73: #{forward.7} parent=46 // pred_check_branch
          %751 = sbr.rel (%p749) target = $region75
        $region74: #{forward.7} parent=46 // pred_region
          %s752 = smul.u32 4, %s21
          %p753 = scmp.lt.s32.totalorder %s752, 3
          %s754 = scalar_select %p753, %s752, 3
          %p755 = scmp.lt.s32.totalorder %s20, 0
          %s756 = scalar_select %p755, %s20, 0
          %s757 = sadd.s32 %s756, %s754
          %s758 = smul.addr %s757, 8
          %s759 = scalar_lea.vmem %s2, %s758
        $region75: #{forward.7} parent=46 // pred_fallthru
          _
        // Predicated region
        $region76: #{forward.7} parent=46 // pred_check
          %p760 = pneg %p136
        $region77: #{forward.7} parent=46 // pred_check_branch
          %762 = sbr.rel (%p760) target = $region79
        $region78: #{forward.7} parent=46 // pred_region
          %p763 = scmp.lt.s32.totalorder %s20, 0
          %s764 = scalar_select %p763, %s20, 0
          %s765 = smul.addr %s764, 8
          %s766 = scalar_lea.vmem %s3, %s765
        $region79: #{forward.7} parent=46 // pred_fallthru
          _
      $region47: #{forward.7} parent=5 // pred_fallthru
        _
      %p767 = scmp.le.s32.totalorder 2, %s10
      // Predicated region
      $region80: #{forward.7} parent=5 // pred_check
        %p768 = pneg %p767
      $region81: #{forward.7} parent=5 // pred_check_branch
        %770 = sbr.rel (%p768) target = $region83
      $region82: #{forward.7} parent=5 // pred_region
        %s771 = ssub.s32 %s10, 2
      $region83: #{forward.7} parent=5 // pred_fallthru
        _
    $region6: #{forward.7} parent=1 // loop_footer
      %s14 = sadd.s32 1, %s10
    $region7: #{forward.7} parent=1 // loop_footer_branch
      %9 = sbr.rel target = $region3
    $region8: #{forward.7} parent=1 // loop_exit
      _

// kernel: forward.8
$region0: #{forward.8}
  #allocation0 [shape = 'u32[]', space=smem, size = 0x4, offset = 0x4, fixed_abs, tag = 'smem constant byte address 0x4 - core index']
  #allocation1 [shape = 'u32[72,128]{1,0:T(1,128)}', space=vmem, size = 0x9000, scoped, tag = 'internal scratch']
  %s0 = inlined_call_operand.vmem [shape: f32[32,128], index: 0, kind: input, shape index: {}]
  %s1 = inlined_call_operand.vmem [shape: f32[8,128], index: 1, kind: input, shape index: {}]
  %s2 = inlined_call_operand.vmem [shape: f32[1,128], index: 2, kind: input, shape index: {}]
  %s3 = inlined_call_operand.vmem [shape: f32[1,128], index: 3, kind: input, shape index: {}]
  %s4 = inlined_call_operand.vmem [shape: bf16[32,128], index: 4, kind: output, shape index: {}]
  %s5 = sld [smem:[#allocation0]]
  $region26: #{forward.8} parent=0
    _
  %s7 = ssub.s32 1, %s5
  %s8 = scalar_select 0, %s7, %s5
  // Predicated region
  $region2: #{forward.8} parent=0 // pred_check
    _
  $region3: #{forward.8} parent=0 // pred_check_branch
    %10 = sbr.rel (0) target = $region5
  $region4: #{forward.8} parent=0 // pred_region
    _
  $region5: #{forward.8} parent=0 // pred_fallthru
    _
  // Predicated region
  $region6: #{forward.8} parent=0 // pred_check
    _
  $region7: #{forward.8} parent=0 // pred_check_branch
    %12 = sbr.rel (0) target = $region9
  $region8: #{forward.8} parent=0 // pred_region
    _
  $region9: #{forward.8} parent=0 // pred_fallthru
    _
  // Predicated region
  $region10: #{forward.8} parent=0 // pred_check
    _
  $region11: #{forward.8} parent=0 // pred_check_branch
    %14 = sbr.rel (0) target = $region13
  $region12: #{forward.8} parent=0 // pred_region
    _
  $region13: #{forward.8} parent=0 // pred_fallthru
    _
  // Predicated region
  $region14: #{forward.8} parent=0 // pred_check
    _
  $region15: #{forward.8} parent=0 // pred_check_branch
    %16 = sbr.rel (0) target = $region17
  $region16: #{forward.8} parent=0 // pred_region
    _
  $region17: #{forward.8} parent=0 // pred_fallthru
    _
  %v17 = vld [vmem:[%s1] sm:$0x1]
  %v18 = vmul.f32 %v17, 0.03125
  %v19 = vld [vmem:[%s1 + $0x1] sm:$0x1]
  %v20 = vmul.f32 %v19, 0.03125
  %v21 = vmul.f32 %v18, %v18
  %v22 = vsub.f32 %v20, %v21
  %v23 = vld [vmem:[%s2] sm:$0x1]
  %v24 = vadd.f32 %v22, 1e-05
  %v25 = vrsqrt.pop %v24
  %v26 = vmul.f32 %v25, %v24
  %v27 = vmul.f32 %v26, %v25
  %v28 = vmul.f32 0.5, %v27
  %v29 = vsub.f32 1.5, %v28
  %v30 = vmul.f32 %v25, %v29
  %vm31 = vweird.f32 %v24
  %vm32 = vweird.f32 %v25
  %vm33 = vmor %vm31, %vm32
  %v34 = vsel %vm33, %v25, %v30
  %v35 = vmul.f32 %v23, %v34
  %v36 = vld [vmem:[%s3] sm:$0x1]
  %v37 = vmul.f32 %v18, %v35
  %v38 = vsub.f32 %v36, %v37
  %v39 = vld [vmem:[%s0] sm:$0xff]
  %v40 = vld [vmem:[%s0 + $0x8] sm:$0xff]
  %v41 = vld [vmem:[%s0 + $0x10] sm:$0xff]
  %v42 = vld [vmem:[%s0 + $0x18] sm:$0xff]
  %v44 = vperm.slane %v35, 0
  %v46 = vmul.f32 %v39, %v44
  %v47 = vmul.f32 %v40, %v44
  %v48 = vmul.f32 %v41, %v44
  %v49 = vmul.f32 %v42, %v44
  %v51 = vperm.slane %v38, 0
  %v53 = vadd.f32 %v46, %v51
  %v54 = vadd.f32 %v47, %v51
  %v55 = vadd.f32 %v48, %v51
  %v56 = vadd.f32 %v49, %v51
  %vm57 = vcmp.ge.f32.partialorder %v53, 0.0
  %vm58 = vcmp.ge.f32.partialorder %v54, 0.0
  %vm59 = vcmp.ge.f32.partialorder %v55, 0.0
  %vm60 = vcmp.ge.f32.partialorder %v56, 0.0
  %v61 = vmul.f32 %v53, 0.2
  %v62 = vmul.f32 %v54, 0.2
  %v63 = vmul.f32 %v55, 0.2
  %v64 = vmul.f32 %v56, 0.2
  %v65 = vsel %vm57, %v53, %v61
  %v66 = vsel %vm58, %v54, %v62
  %v67 = vsel %vm59, %v55, %v63
  %v68 = vsel %vm60, %v56, %v64
  %v69 = vpack.c.bf16 %v65, %v65
  %v70 = vpack.c.bf16 %v66, %v66
  %v71 = vpack.c.bf16 %v67, %v67
  %v72 = vpack.c.bf16 %v68, %v68
  %73 = vst [vmem:[%s4] sm:$0xf] %v69
  %74 = vst [vmem:[%s4 + $0x4] sm:$0xf] %v70
  %75 = vst [vmem:[%s4 + $0x8] sm:$0xf] %v71
  %76 = vst [vmem:[%s4 + $0xc] sm:$0xf] %v72
  // Predicated region
  $region18: #{forward.8} parent=0 // pred_check
    _
  $region19: #{forward.8} parent=0 // pred_check_branch
    %78 = sbr.rel (0) target = $region21
  $region20: #{forward.8} parent=0 // pred_region
    _
  $region21: #{forward.8} parent=0 // pred_fallthru
    _
  // Predicated region
  $region22: #{forward.8} parent=0 // pred_check
    _
  $region23: #{forward.8} parent=0 // pred_check_branch
    %80 = sbr.rel (0) target = $region25
  $region24: #{forward.8} parent=0 // pred_region
    _
  $region25: #{forward.8} parent=0 // pred_fallthru
    _

// kernel: forward.10
$region0: #{forward.10}
  #allocation0 [shape = 'u32[]', space=smem, size = 0x4, offset = 0x4, fixed_abs, tag = 'smem constant byte address 0x4 - core index']
  #allocation1 [shape = 'u32[72,128]{1,0:T(1,128)}', space=vmem, size = 0x9000, scoped, tag = 'internal scratch']
  %s0 = inlined_call_operand.vmem [shape: f32[8,256], index: 0, kind: input, shape index: {}]
  %s1 = inlined_call_operand.vmem [shape: f32[8,256], index: 1, kind: input, shape index: {}]
  %s2 = inlined_call_operand.vmem [shape: f32[1,256], index: 2, kind: input, shape index: {}]
  %s3 = inlined_call_operand.vmem [shape: f32[1,256], index: 3, kind: input, shape index: {}]
  %s4 = inlined_call_operand.vmem [shape: f32[8,256], index: 4, kind: output, shape index: {}]
  %s5 = sld [smem:[#allocation0]]
  $region26: #{forward.10} parent=0
    _
  %s7 = ssub.s32 1, %s5
  %s8 = scalar_select 0, %s7, %s5
  // Predicated region
  $region2: #{forward.10} parent=0 // pred_check
    _
  $region3: #{forward.10} parent=0 // pred_check_branch
    %10 = sbr.rel (0) target = $region5
  $region4: #{forward.10} parent=0 // pred_region
    _
  $region5: #{forward.10} parent=0 // pred_fallthru
    _
  // Predicated region
  $region6: #{forward.10} parent=0 // pred_check
    _
  $region7: #{forward.10} parent=0 // pred_check_branch
    %12 = sbr.rel (0) target = $region9
  $region8: #{forward.10} parent=0 // pred_region
    _
  $region9: #{forward.10} parent=0 // pred_fallthru
    _
  // Predicated region
  $region10: #{forward.10} parent=0 // pred_check
    _
  $region11: #{forward.10} parent=0 // pred_check_branch
    %14 = sbr.rel (0) target = $region13
  $region12: #{forward.10} parent=0 // pred_region
    _
  $region13: #{forward.10} parent=0 // pred_fallthru
    _
  // Predicated region
  $region14: #{forward.10} parent=0 // pred_check
    _
  $region15: #{forward.10} parent=0 // pred_check_branch
    %16 = sbr.rel (0) target = $region17
  $region16: #{forward.10} parent=0 // pred_region
    _
  $region17: #{forward.10} parent=0 // pred_fallthru
    _
  %v17 = vld [vmem:[%s1] ss:$8 sm:$0x3]
  %v18 = vmul.f32 %v17, 0.125
  %s19 = scalar_lea.vmem %s1, 1
  %v20 = vld [vmem:[%s19] ss:$8 sm:$0x3]
  %v21 = vmul.f32 %v20, 0.125
  %v22 = vmul.f32 %v18, %v18
  %v23 = vsub.f32 %v21, %v22
  %v24 = vld [vmem:[%s2] sm:$0x3]
  %v25 = vadd.f32 %v23, 1e-05
  %v26 = vrsqrt.pop %v25
  %v27 = vmul.f32 %v26, %v25
  %v28 = vmul.f32 %v27, %v26
  %v29 = vmul.f32 0.5, %v28
  %v30 = vsub.f32 1.5, %v29
  %v31 = vmul.f32 %v26, %v30
  %vm32 = vweird.f32 %v25
  %vm33 = vweird.f32 %v26
  %vm34 = vmor %vm32, %vm33
  %v35 = vsel %vm34, %v26, %v31
  %v36 = vmul.f32 %v24, %v35
  %v37 = vld [vmem:[%s3] sm:$0x3]
  %v38 = vmul.f32 %v18, %v36
  %v39 = vsub.f32 %v37, %v38
  %v40 = vld [vmem:[%s0] sm:$0xff]
  %v41 = vld [vmem:[%s0 + $0x8] sm:$0xff]
  %v43 = vperm.slane %v36, 0
  %v44 = vperm.slane %v36, 1
  %v47 = vmul.f32 %v40, %v43
  %v48 = vmul.f32 %v41, %v44
  %v50 = vperm.slane %v39, 0
  %v51 = vperm.slane %v39, 1
  %v54 = vadd.f32 %v47, %v50
  %v55 = vadd.f32 %v48, %v51
  %vm56 = vcmp.ge.f32.partialorder %v54, 0.0
  %vm57 = vcmp.ge.f32.partialorder %v55, 0.0
  %v58 = vmul.f32 %v54, 0.2
  %v59 = vmul.f32 %v55, 0.2
  %v60 = vsel %vm56, %v54, %v58
  %v61 = vsel %vm57, %v55, %v59
  %62 = vst [vmem:[%s4] sm:$0xff] %v60
  %63 = vst [vmem:[%s4 + $0x8] sm:$0xff] %v61
  // Predicated region
  $region18: #{forward.10} parent=0 // pred_check
    _
  $region19: #{forward.10} parent=0 // pred_check_branch
    %65 = sbr.rel (0) target = $region21
  $region20: #{forward.10} parent=0 // pred_region
    _
  $region21: #{forward.10} parent=0 // pred_fallthru
    _
  // Predicated region
  $region22: #{forward.10} parent=0 // pred_check
    _
  $region23: #{forward.10} parent=0 // pred_check_branch
    %67 = sbr.rel (0) target = $region25
  $region24: #{forward.10} parent=0 // pred_region
    _
  $region25: #{forward.10} parent=0 // pred_fallthru
    _

// kernel: forward.9
$region0: #{forward.9}
  #allocation0 [shape = 'u32[]', space=smem, size = 0x4, offset = 0x4, fixed_abs, tag = 'smem constant byte address 0x4 - core index']
  #allocation1 [shape = 'u32[72,128]{1,0:T(1,128)}', space=vmem, size = 0x9000, scoped, tag = 'internal scratch']
  #allocation2 [shape = 'f32[8,256]{1,0:T(8,128)}', space=vmem, size = 0x2000, scoped, tag = 'scratch operand']
  %s0 = inlined_call_operand.vmem [shape: bf16[8,2048], index: 0, kind: input, shape index: {}]
  %s1 = inlined_call_operand.vmem [shape: bf16[2048,256], index: 1, kind: input, shape index: {}]
  %s2 = inlined_call_operand.vmem [shape: f32[8,256], index: 2, kind: output, shape index: {0}]
  %s3 = inlined_call_operand.vmem [shape: f32[8,256], index: 3, kind: output, shape index: {1}]
  %4 = xla_tuple %s2, %s3
  %s5 = sld [smem:[#allocation0]]
  $region61: #{forward.9} parent=0
    _
  %s7 = ssub.s32 1, %s5
  %s8 = scalar_select 0, %s7, %s5
  loop: start=0, step=1, limit=6
  $region2: #{forward.9} parent=0 // loop_pre_header
    _
  $region3: #{forward.9} parent=0 // loop_header
    %s10 = sphi 0, %s14
    %p11 = scmp.ge.s32.totalorder %s10, 6
    %s17 = sphi 0, %s36
    %s18 = sphi 0, %s32
    %s19 = sphi 0, %s28
    %s20 = sphi 0, %s17
    %s21 = sphi 0, %s18
    %s22 = sphi 0, %s19
    %s23 = sphi 0, %s20
    %s24 = sphi 0, %s21
    %s25 = sphi 0, %s22
    %s41 = sphi 0, %s43
    %s44 = sphi 0, %s41
    %s45 = sphi 0, %s44
    %s61 = sphi 0, %s45
    %s69 = sphi 0, %s71
    %s72 = sphi 0, %s69
    %s73 = sphi 0, %s72
    %s89 = sphi 0, %s73
    %s97 = sphi 0, %s99
    %s100 = sphi 0, %s97
    %s101 = sphi 0, %s100
    %s117 = sphi 0, %s101
    %s123 = sphi 0, %s125
    %s126 = sphi 0, %s123
    %s127 = sphi 0, %s126
    %s143 = sphi 0, %s127
  $region4: #{forward.9} parent=0 // loop_header_branch
    %13 = sbr.rel (%p11) target = $region8
  $region5: #{forward.9} parent=0 // loop_body
    %s15 = ssub.s32 %s10, 1
    %s16 = ssub.s32 %s10, 2
    %s26 = sadd.s32 1, %s19
    %p27 = scmp.ge.s32.totalorder %s26, 4
    %s28 = scalar_select %p27, 0, %s26
    %s29 = sadd.s32 1, %s18
    %s30 = scalar_select %p27, %s29, %s18
    %p31 = scmp.ge.s32.totalorder %s30, 1
    %s32 = scalar_select %p31, 0, %s30
    %s33 = sadd.s32 1, %s17
    %s34 = scalar_select %p31, %s33, %s17
    %p35 = scmp.ge.s32.totalorder %s34, 1
    %s36 = scalar_select %p35, 0, %s34
    %s37 = ssub.s32 %s18, %s32
    %s38 = ssub.s32 %s19, %s28
    %s39 = sor.u32 %s37, %s38
    %p40 = scmp.eq.s32.totalorder %s39, 0
    %s42 = sadd.s32 %s41, 1
    %s43 = scalar_select %p40, %s41, %s42
    %p46 = pneg %p40
    %p47 = scmp.eq.s32.totalorder %s10, 3
    %p48 = por %p46, %p47
    %p49 = scmp.ne.s32.totalorder %s41, %s44
    %p50 = scmp.eq.s32.totalorder %s10, 0
    %p51 = por %p49, %p50
    %p52 = scmp.ne.s32.totalorder %s41, %s44
    %p53 = scmp.eq.s32.totalorder %s15, 3
    %p54 = por %p52, %p53
    %p55 = scmp.ne.s32.totalorder %s44, %s45
    %p56 = scmp.eq.s32.totalorder %s15, 0
    %p57 = por %p55, %p56
    %p58 = scmp.ne.s32.totalorder %s44, %s45
    %p59 = scmp.eq.s32.totalorder %s16, 3
    %p60 = por %p58, %p59
    %p62 = scmp.ne.s32.totalorder %s45, %s61
    %p63 = scmp.eq.s32.totalorder %s16, 0
    %p64 = por %p62, %p63
    %s65 = ssub.s32 %s19, %s28
    %s66 = ssub.s32 %s17, %s36
    %s67 = sor.u32 %s65, %s66
    %p68 = scmp.eq.s32.totalorder %s67, 0
    %s70 = sadd.s32 %s69, 1
    %s71 = scalar_select %p68, %s69, %s70
    %p74 = pneg %p68
    %p75 = scmp.eq.s32.totalorder %s10, 3
    %p76 = por %p74, %p75
    %p77 = scmp.ne.s32.totalorder %s69, %s72
    %p78 = scmp.eq.s32.totalorder %s10, 0
    %p79 = por %p77, %p78
    %p80 = scmp.ne.s32.totalorder %s69, %s72
    %p81 = scmp.eq.s32.totalorder %s15, 3
    %p82 = por %p80, %p81
    %p83 = scmp.ne.s32.totalorder %s72, %s73
    %p84 = scmp.eq.s32.totalorder %s15, 0
    %p85 = por %p83, %p84
    %p86 = scmp.ne.s32.totalorder %s72, %s73
    %p87 = scmp.eq.s32.totalorder %s16, 3
    %p88 = por %p86, %p87
    %p90 = scmp.ne.s32.totalorder %s73, %s89
    %p91 = scmp.eq.s32.totalorder %s16, 0
    %p92 = por %p90, %p91
    %s93 = ssub.s32 %s18, %s32
    %s94 = ssub.s32 %s17, %s36
    %s95 = sor.u32 %s93, %s94
    %p96 = scmp.eq.s32.totalorder %s95, 0
    %s98 = sadd.s32 %s97, 1
    %s99 = scalar_select %p96, %s97, %s98
    %p102 = pneg %p96
    %p103 = scmp.eq.s32.totalorder %s10, 3
    %p104 = por %p102, %p103
    %p105 = scmp.ne.s32.totalorder %s97, %s100
    %p106 = scmp.eq.s32.totalorder %s10, 0
    %p107 = por %p105, %p106
    %p108 = scmp.ne.s32.totalorder %s97, %s100
    %p109 = scmp.eq.s32.totalorder %s15, 3
    %p110 = por %p108, %p109
    %p111 = scmp.ne.s32.totalorder %s100, %s101
    %p112 = scmp.eq.s32.totalorder %s15, 0
    %p113 = por %p111, %p112
    %p114 = scmp.ne.s32.totalorder %s100, %s101
    %p115 = scmp.eq.s32.totalorder %s16, 3
    %p116 = por %p114, %p115
    %p118 = scmp.ne.s32.totalorder %s101, %s117
    %p119 = scmp.eq.s32.totalorder %s16, 0
    %p120 = por %p118, %p119
    %s121 = ssub.s32 %s17, %s36
    %p122 = scmp.eq.s32.totalorder %s121, 0
    %s124 = sadd.s32 %s123, 1
    %s125 = scalar_select %p122, %s123, %s124
    %p128 = pneg %p122
    %p129 = scmp.eq.s32.totalorder %s10, 3
    %p130 = por %p128, %p129
    %p131 = scmp.ne.s32.totalorder %s123, %s126
    %p132 = scmp.eq.s32.totalorder %s10, 0
    %p133 = por %p131, %p132
    %p134 = scmp.ne.s32.totalorder %s123, %s126
    %p135 = scmp.eq.s32.totalorder %s15, 3
    %p136 = por %p134, %p135
    %p137 = scmp.ne.s32.totalorder %s126, %s127
    %p138 = scmp.eq.s32.totalorder %s15, 0
    %p139 = por %p137, %p138
    %p140 = scmp.ne.s32.totalorder %s126, %s127
    %p141 = scmp.eq.s32.totalorder %s16, 3
    %p142 = por %p140, %p141
    %p144 = scmp.ne.s32.totalorder %s127, %s143
    %p145 = scmp.eq.s32.totalorder %s16, 0
    %p146 = por %p144, %p145
    %p147 = scmp.le.s32.totalorder 1, %s10
    %p148 = scmp.lt.s32.totalorder %s10, 5
    %p149 = pnand %p147, %p148
    %p150 = pneg %p149
    // Predicated region
    $region9: #{forward.9} parent=5 // pred_check
      _
    $region10: #{forward.9} parent=5 // pred_check_branch
      %152 = sbr.rel (%p149) target = $region12
    $region11: #{forward.9} parent=5 // pred_region
      %s153 = ssub.s32 %s10, 1
    $region12: #{forward.9} parent=5 // pred_fallthru
      _
    %p154 = scmp.lt.s32.totalorder %s10, 4
    // Predicated region
    $region13: #{forward.9} parent=5 // pred_check
      %p155 = pneg %p154
    $region14: #{forward.9} parent=5 // pred_check_branch
      %157 = sbr.rel (%p155) target = $region16
    $region15: #{forward.9} parent=5 // pred_region
      // Predicated region
      $region17: #{forward.9} parent=15 // pred_check
        %p158 = pneg %p51
      $region18: #{forward.9} parent=15 // pred_check_branch
        %160 = sbr.rel (%p158) target = $region20
      $region19: #{forward.9} parent=15 // pred_region
        %s161 = smul.u32 4, %s19
        %p162 = scmp.lt.s32.totalorder %s18, 0
        %s163 = scalar_select %p162, %s18, 0
        %p164 = scmp.lt.s32.totalorder %s161, 15
        %s165 = scalar_select %p164, %s161, 15
        %s166 = smul.addr %s163, 16
        %s167 = sadd.s32 %s165, %s166
        %s168 = smul.addr %s167, 4
        %s169 = scalar_lea.vmem %s0, %s168
        %s170 = smul.u32 4, %s19
      $region20: #{forward.9} parent=15 // pred_fallthru
        _
      // Predicated region
      $region21: #{forward.9} parent=15 // pred_check
        %p171 = pneg %p79
      $region22: #{forward.9} parent=15 // pred_check_branch
        %173 = sbr.rel (%p171) target = $region24
      $region23: #{forward.9} parent=15 // pred_region
        %s174 = smul.u32 64, %s19
        %s175 = smul.u32 2, %s17
        %p176 = scmp.lt.s32.totalorder %s174, 255
        %s177 = scalar_select %p176, %s174, 255
        %p178 = scmp.lt.s32.totalorder %s175, 1
        %s179 = scalar_select %p178, %s175, 1
        %s180 = smul.addr %s177, 2
        %s181 = sadd.s32 %s179, %s180
        %s182 = smul.addr %s181, 4
        %s183 = scalar_lea.vmem %s1, %s182
        %s184 = smul.u32 64, %s19
        %s185 = smul.u32 2, %s17
      $region24: #{forward.9} parent=15 // pred_fallthru
        _
    $region16: #{forward.9} parent=5 // pred_fallthru
      _
    %p186 = scmp.le.s32.totalorder 1, %s10
    %p187 = scmp.lt.s32.totalorder %s10, 5
    %p188 = pnand %p186, %p187
    %p189 = pneg %p188
    // Predicated region
    $region25: #{forward.9} parent=5 // pred_check
      _
    $region26: #{forward.9} parent=5 // pred_check_branch
      %191 = sbr.rel (%p188) target = $region28
    $region27: #{forward.9} parent=5 // pred_region
      %s192 = ssub.s32 %s10, 1
      %s193 = smul.u32 4, %s22
      %p194 = scmp.lt.s32.totalorder %s21, 0
      %s195 = scalar_select %p194, %s21, 0
      %p196 = scmp.lt.s32.totalorder %s193, 15
      %s197 = scalar_select %p196, %s193, 15
      %s198 = smul.addr %s195, 16
      %s199 = sadd.s32 %s197, %s198
      %s200 = smul.addr %s199, 4
      %s201 = scalar_lea.vmem %s0, %s200
      %p202 = pneg %p57
      %p203 = pneg %p54
      %s204 = smul.u32 64, %s22
      %s205 = smul.u32 2, %s20
      %p206 = scmp.lt.s32.totalorder %s204, 255
      %s207 = scalar_select %p206, %s204, 255
      %p208 = scmp.lt.s32.totalorder %s205, 1
      %s209 = scalar_select %p208, %s205, 1
      %s210 = smul.addr %s207, 2
      %s211 = sadd.s32 %s209, %s210
      %s212 = smul.addr %s211, 4
      %s213 = scalar_lea.vmem %s1, %s212
      %p214 = pneg %p85
      %p215 = pneg %p82
      %p216 = pneg %p113
      %p217 = pneg %p110
      %s218 = smul.u32 2, %s20
      %p219 = scmp.lt.s32.totalorder %s21, 0
      %s220 = scalar_select %p219, %s21, 0
      %p221 = scmp.lt.s32.totalorder %s218, 1
      %s222 = scalar_select %p221, %s218, 1
      %s223 = smul.addr %s220, 2
      %s224 = sadd.s32 %s222, %s223
      %s225 = smul.addr %s224, 8
      %s226 = scalar_lea.vmem %s2, %s225
      %p227 = pneg %p139
      %p228 = pneg %p136
      %s229 = smul.u32 2, %s20
      %p230 = scmp.lt.s32.totalorder %s229, 1
      %s231 = scalar_select %p230, %s229, 1
      %s232 = smul.addr %s231, 8
      %s233 = scalar_lea.vmem %s3, %s232
      %s234 = smul.u32 4, %s22
      %p235 = scmp.lt.s32.totalorder %s21, 0
      %s236 = scalar_select %p235, %s21, 0
      %p237 = scmp.lt.s32.totalorder %s234, 15
      %s238 = scalar_select %p237, %s234, 15
      %s239 = smul.addr %s236, 16
      %s240 = sadd.s32 %s238, %s239
      %s241 = smul.addr %s240, 4
      %s242 = scalar_lea.vmem %s0, %s241
      %s243 = smul.u32 4, %s22
      %s244 = smul.u32 64, %s22
      %s245 = smul.u32 2, %s20
      %p246 = scmp.lt.s32.totalorder %s244, 255
      %s247 = scalar_select %p246, %s244, 255
      %p248 = scmp.lt.s32.totalorder %s245, 1
      %s249 = scalar_select %p248, %s245, 1
      %s250 = smul.addr %s247, 2
      %s251 = sadd.s32 %s249, %s250
      %s252 = smul.addr %s251, 4
      %s253 = scalar_lea.vmem %s1, %s252
      %s254 = smul.u32 64, %s22
      %s255 = smul.u32 2, %s20
      %s256 = smul.u32 2, %s20
      %p257 = scmp.lt.s32.totalorder %s21, 0
      %s258 = scalar_select %p257, %s21, 0
      %p259 = scmp.lt.s32.totalorder %s256, 1
      %s260 = scalar_select %p259, %s256, 1
      %s261 = smul.addr %s258, 2
      %s262 = sadd.s32 %s260, %s261
      %s263 = smul.addr %s262, 8
      %s264 = scalar_lea.vmem %s2, %s263
      %s265 = smul.u32 2, %s20
      %s266 = smul.u32 2, %s20
      %p267 = scmp.lt.s32.totalorder %s266, 1
      %s268 = scalar_select %p267, %s266, 1
      %s269 = smul.addr %s268, 8
      %s270 = scalar_lea.vmem %s3, %s269
      %s271 = smul.u32 2, %s20
      %p272 = scmp.eq.s32.totalorder %s21, 0
      %p273 = scmp.eq.s32.totalorder %s22, 0
      %p274 = pnand %p272, %p273
      %p275 = pneg %p274
      // Predicated region
      $region29: #{forward.9} parent=27 // pred_check
        _
      $region30: #{forward.9} parent=27 // pred_check_branch
        %277 = sbr.rel (%p274) target = $region32
      $region31: #{forward.9} parent=27 // pred_region
        %278 = vst [vmem:[%s270] sm:$0xff] 0.0
        %279 = vst [vmem:[%s270 + $0x8] sm:$0xff] 0.0
      $region32: #{forward.9} parent=27 // pred_fallthru
        _
      // Predicated region
      $region33: #{forward.9} parent=27 // pred_check
        %p280 = pneg %p273
      $region34: #{forward.9} parent=27 // pred_check_branch
        %282 = sbr.rel (%p280) target = $region36
      $region35: #{forward.9} parent=27 // pred_region
        %283 = vst [vmem:[#allocation2] sm:$0xff] 0.0
        %284 = vst [vmem:[#allocation2 + $0x8] sm:$0xff] 0.0
      $region36: #{forward.9} parent=27 // pred_fallthru
        _
      %v285 = vld [vmem:[#allocation2] sm:$0xff]
      %v286 = vld [vmem:[#allocation2 + $0x8] sm:$0xff]
      %v287 = vld [vmem:[%s242] sm:$0xff]
      %v288 = vld [vmem:[%s242 + $0x8] sm:$0xff]
      %v289 = vld [vmem:[%s253] sm:$0xff]
      %v290 = vld [vmem:[%s253 + $0x8] sm:$0xff]
      %v291 = vld [vmem:[%s253 + $0x10] sm:$0xff]
      %v292 = vld [vmem:[%s253 + $0x18] sm:$0xff]
      %v293 = vld [vmem:[%s253 + $0x20] sm:$0xff]
      %v294 = vld [vmem:[%s253 + $0x28] sm:$0xff]
      %v295 = vld [vmem:[%s253 + $0x30] sm:$0xff]
      %v296 = vld [vmem:[%s253 + $0x38] sm:$0xff]
      %v297 = vld [vmem:[%s253 + $0x40] sm:$0xff]
      %v298 = vld [vmem:[%s253 + $0x48] sm:$0xff]
      %v299 = vld [vmem:[%s253 + $0x50] sm:$0xff]
      %v300 = vld [vmem:[%s253 + $0x58] sm:$0xff]
      %v301 = vld [vmem:[%s253 + $0x60] sm:$0xff]
      %v302 = vld [vmem:[%s253 + $0x68] sm:$0xff]
      %v303 = vld [vmem:[%s253 + $0x70] sm:$0xff]
      %v304 = vld [vmem:[%s253 + $0x78] sm:$0xff]
      %v305 = vld [vmem:[%s253 + $0x80] sm:$0xff]
      %v306 = vld [vmem:[%s253 + $0x88] sm:$0xff]
      %v307 = vld [vmem:[%s253 + $0x90] sm:$0xff]
      %v308 = vld [vmem:[%s253 + $0x98] sm:$0xff]
      %v309 = vld [vmem:[%s253 + $0xa0] sm:$0xff]
      %v310 = vld [vmem:[%s253 + $0xa8] sm:$0xff]
      %v311 = vld [vmem:[%s253 + $0xb0] sm:$0xff]
      %v312 = vld [vmem:[%s253 + $0xb8] sm:$0xff]
      %v313 = vld [vmem:[%s253 + $0xc0] sm:$0xff]
      %v314 = vld [vmem:[%s253 + $0xc8] sm:$0xff]
      %v315 = vld [vmem:[%s253 + $0xd0] sm:$0xff]
      %v316 = vld [vmem:[%s253 + $0xd8] sm:$0xff]
      %v317 = vld [vmem:[%s253 + $0xe0] sm:$0xff]
      %v318 = vld [vmem:[%s253 + $0xe8] sm:$0xff]
      %v319 = vld [vmem:[%s253 + $0xf0] sm:$0xff]
      %v320 = vld [vmem:[%s253 + $0xf8] sm:$0xff]
      %v321 = vld [vmem:[%s253 + $0x100] sm:$0xff]
      %v322 = vld [vmem:[%s253 + $0x108] sm:$0xff]
      %v323 = vld [vmem:[%s253 + $0x110] sm:$0xff]
      %v324 = vld [vmem:[%s253 + $0x118] sm:$0xff]
      %v325 = vld [vmem:[%s253 + $0x120] sm:$0xff]
      %v326 = vld [vmem:[%s253 + $0x128] sm:$0xff]
      %v327 = vld [vmem:[%s253 + $0x130] sm:$0xff]
      %v328 = vld [vmem:[%s253 + $0x138] sm:$0xff]
      %v329 = vld [vmem:[%s253 + $0x140] sm:$0xff]
      %v330 = vld [vmem:[%s253 + $0x148] sm:$0xff]
      %v331 = vld [vmem:[%s253 + $0x150] sm:$0xff]
      %v332 = vld [vmem:[%s253 + $0x158] sm:$0xff]
      %v333 = vld [vmem:[%s253 + $0x160] sm:$0xff]
      %v334 = vld [vmem:[%s253 + $0x168] sm:$0xff]
      %v335 = vld [vmem:[%s253 + $0x170] sm:$0xff]
      %v336 = vld [vmem:[%s253 + $0x178] sm:$0xff]
      %v337 = vld [vmem:[%s253 + $0x180] sm:$0xff]
      %v338 = vld [vmem:[%s253 + $0x188] sm:$0xff]
      %v339 = vld [vmem:[%s253 + $0x190] sm:$0xff]
      %v340 = vld [vmem:[%s253 + $0x198] sm:$0xff]
      %v341 = vld [vmem:[%s253 + $0x1a0] sm:$0xff]
      %v342 = vld [vmem:[%s253 + $0x1a8] sm:$0xff]
      %v343 = vld [vmem:[%s253 + $0x1b0] sm:$0xff]
      %v344 = vld [vmem:[%s253 + $0x1b8] sm:$0xff]
      %v345 = vld [vmem:[%s253 + $0x1c0] sm:$0xff]
      %v346 = vld [vmem:[%s253 + $0x1c8] sm:$0xff]
      %v347 = vld [vmem:[%s253 + $0x1d0] sm:$0xff]
      %v348 = vld [vmem:[%s253 + $0x1d8] sm:$0xff]
      %v349 = vld [vmem:[%s253 + $0x1e0] sm:$0xff]
      %v350 = vld [vmem:[%s253 + $0x1e8] sm:$0xff]
      %v351 = vld [vmem:[%s253 + $0x1f0] sm:$0xff]
      %v352 = vld [vmem:[%s253 + $0x1f8] sm:$0xff]
      %v355 = vunpack.c.l.b16 %v287
      %v356 = vunpack.c.h.b16 %v287
      %v357 = vunpack.c.l.b16 %v288
      %v358 = vunpack.c.h.b16 %v288
      %v359 = vpack.c.b16 %v355, %v355
      %v360 = vpack.c.b16 %v356, %v356
      %v361 = vpack.c.b16 %v357, %v357
      %v362 = vpack.c.b16 %v358, %v358
      %v431 = vunpack.c.l.b16 %v289
      %v432 = vunpack.c.h.b16 %v289
      %v433 = vunpack.c.l.b16 %v290
      %v434 = vunpack.c.h.b16 %v290
      %v435 = vunpack.c.l.b16 %v291
      %v436 = vunpack.c.h.b16 %v291
      %v437 = vunpack.c.l.b16 %v292
      %v438 = vunpack.c.h.b16 %v292
      %v439 = vunpack.c.l.b16 %v293
      %v440 = vunpack.c.h.b16 %v293
      %v441 = vunpack.c.l.b16 %v294
      %v442 = vunpack.c.h.b16 %v294
      %v443 = vunpack.c.l.b16 %v295
      %v444 = vunpack.c.h.b16 %v295
      %v445 = vunpack.c.l.b16 %v296
      %v446 = vunpack.c.h.b16 %v296
      %v447 = vunpack.c.l.b16 %v297
      %v448 = vunpack.c.h.b16 %v297
      %v449 = vunpack.c.l.b16 %v298
      %v450 = vunpack.c.h.b16 %v298
      %v451 = vunpack.c.l.b16 %v299
      %v452 = vunpack.c.h.b16 %v299
      %v453 = vunpack.c.l.b16 %v300
      %v454 = vunpack.c.h.b16 %v300
      %v455 = vunpack.c.l.b16 %v301
      %v456 = vunpack.c.h.b16 %v301
      %v457 = vunpack.c.l.b16 %v302
      %v458 = vunpack.c.h.b16 %v302
      %v459 = vunpack.c.l.b16 %v303
      %v460 = vunpack.c.h.b16 %v303
      %v461 = vunpack.c.l.b16 %v304
      %v462 = vunpack.c.h.b16 %v304
      %v463 = vunpack.c.l.b16 %v305
      %v464 = vunpack.c.h.b16 %v305
      %v465 = vunpack.c.l.b16 %v306
      %v466 = vunpack.c.h.b16 %v306
      %v467 = vunpack.c.l.b16 %v307
      %v468 = vunpack.c.h.b16 %v307
      %v469 = vunpack.c.l.b16 %v308
      %v470 = vunpack.c.h.b16 %v308
      %v471 = vunpack.c.l.b16 %v309
      %v472 = vunpack.c.h.b16 %v309
      %v473 = vunpack.c.l.b16 %v310
      %v474 = vunpack.c.h.b16 %v310
      %v475 = vunpack.c.l.b16 %v311
      %v476 = vunpack.c.h.b16 %v311
      %v477 = vunpack.c.l.b16 %v312
      %v478 = vunpack.c.h.b16 %v312
      %v479 = vunpack.c.l.b16 %v313
      %v480 = vunpack.c.h.b16 %v313
      %v481 = vunpack.c.l.b16 %v314
      %v482 = vunpack.c.h.b16 %v314
      %v483 = vunpack.c.l.b16 %v315
      %v484 = vunpack.c.h.b16 %v315
      %v485 = vunpack.c.l.b16 %v316
      %v486 = vunpack.c.h.b16 %v316
      %v487 = vunpack.c.l.b16 %v317
      %v488 = vunpack.c.h.b16 %v317
      %v489 = vunpack.c.l.b16 %v318
      %v490 = vunpack.c.h.b16 %v318
      %v491 = vunpack.c.l.b16 %v319
      %v492 = vunpack.c.h.b16 %v319
      %v493 = vunpack.c.l.b16 %v320
      %v494 = vunpack.c.h.b16 %v320
      %v495 = vunpack.c.l.b16 %v321
      %v496 = vunpack.c.h.b16 %v321
      %v497 = vunpack.c.l.b16 %v322
      %v498 = vunpack.c.h.b16 %v322
      %v499 = vunpack.c.l.b16 %v323
      %v500 = vunpack.c.h.b16 %v323
      %v501 = vunpack.c.l.b16 %v324
      %v502 = vunpack.c.h.b16 %v324
      %v503 = vunpack.c.l.b16 %v325
      %v504 = vunpack.c.h.b16 %v325
      %v505 = vunpack.c.l.b16 %v326
      %v506 = vunpack.c.h.b16 %v326
      %v507 = vunpack.c.l.b16 %v327
      %v508 = vunpack.c.h.b16 %v327
      %v509 = vunpack.c.l.b16 %v328
      %v510 = vunpack.c.h.b16 %v328
      %v511 = vunpack.c.l.b16 %v329
      %v512 = vunpack.c.h.b16 %v329
      %v513 = vunpack.c.l.b16 %v330
      %v514 = vunpack.c.h.b16 %v330
      %v515 = vunpack.c.l.b16 %v331
      %v516 = vunpack.c.h.b16 %v331
      %v517 = vunpack.c.l.b16 %v332
      %v518 = vunpack.c.h.b16 %v332
      %v519 = vunpack.c.l.b16 %v333
      %v520 = vunpack.c.h.b16 %v333
      %v521 = vunpack.c.l.b16 %v334
      %v522 = vunpack.c.h.b16 %v334
      %v523 = vunpack.c.l.b16 %v335
      %v524 = vunpack.c.h.b16 %v335
      %v525 = vunpack.c.l.b16 %v336
      %v526 = vunpack.c.h.b16 %v336
      %v527 = vunpack.c.l.b16 %v337
      %v528 = vunpack.c.h.b16 %v337
      %v529 = vunpack.c.l.b16 %v338
      %v530 = vunpack.c.h.b16 %v338
      %v531 = vunpack.c.l.b16 %v339
      %v532 = vunpack.c.h.b16 %v339
      %v533 = vunpack.c.l.b16 %v340
      %v534 = vunpack.c.h.b16 %v340
      %v535 = vunpack.c.l.b16 %v341
      %v536 = vunpack.c.h.b16 %v341
      %v537 = vunpack.c.l.b16 %v342
      %v538 = vunpack.c.h.b16 %v342
      %v539 = vunpack.c.l.b16 %v343
      %v540 = vunpack.c.h.b16 %v343
      %v541 = vunpack.c.l.b16 %v344
      %v542 = vunpack.c.h.b16 %v344
      %v543 = vunpack.c.l.b16 %v345
      %v544 = vunpack.c.h.b16 %v345
      %v545 = vunpack.c.l.b16 %v346
      %v546 = vunpack.c.h.b16 %v346
      %v547 = vunpack.c.l.b16 %v347
      %v548 = vunpack.c.h.b16 %v347
      %v549 = vunpack.c.l.b16 %v348
      %v550 = vunpack.c.h.b16 %v348
      %v551 = vunpack.c.l.b16 %v349
      %v552 = vunpack.c.h.b16 %v349
      %v553 = vunpack.c.l.b16 %v350
      %v554 = vunpack.c.h.b16 %v350
      %v555 = vunpack.c.l.b16 %v351
      %v556 = vunpack.c.h.b16 %v351
      %v557 = vunpack.c.l.b16 %v352
      %v558 = vunpack.c.h.b16 %v352
      %v559 = vpack.c.b16 %v433, %v431
      %v560 = vpack.c.b16 %v434, %v432
      %v561 = vpack.c.b16 %v437, %v435
      %v562 = vpack.c.b16 %v438, %v436
      %v563 = vpack.c.b16 %v441, %v439
      %v564 = vpack.c.b16 %v442, %v440
      %v565 = vpack.c.b16 %v445, %v443
      %v566 = vpack.c.b16 %v446, %v444
      %v567 = vpack.c.b16 %v449, %v447
      %v568 = vpack.c.b16 %v450, %v448
      %v569 = vpack.c.b16 %v453, %v451
      %v570 = vpack.c.b16 %v454, %v452
      %v571 = vpack.c.b16 %v457, %v455
      %v572 = vpack.c.b16 %v458, %v456
      %v573 = vpack.c.b16 %v461, %v459
      %v574 = vpack.c.b16 %v462, %v460
      %v575 = vpack.c.b16 %v465, %v463
      %v576 = vpack.c.b16 %v466, %v464
      %v577 = vpack.c.b16 %v469, %v467
      %v578 = vpack.c.b16 %v470, %v468
      %v579 = vpack.c.b16 %v473, %v471
      %v580 = vpack.c.b16 %v474, %v472
      %v581 = vpack.c.b16 %v477, %v475
      %v582 = vpack.c.b16 %v478, %v476
      %v583 = vpack.c.b16 %v481, %v479
      %v584 = vpack.c.b16 %v482, %v480
      %v585 = vpack.c.b16 %v485, %v483
      %v586 = vpack.c.b16 %v486, %v484
      %v587 = vpack.c.b16 %v489, %v487
      %v588 = vpack.c.b16 %v490, %v488
      %v589 = vpack.c.b16 %v493, %v491
      %v590 = vpack.c.b16 %v494, %v492
      %v591 = vpack.c.b16 %v497, %v495
      %v592 = vpack.c.b16 %v498, %v496
      %v593 = vpack.c.b16 %v501, %v499
      %v594 = vpack.c.b16 %v502, %v500
      %v595 = vpack.c.b16 %v505, %v503
      %v596 = vpack.c.b16 %v506, %v504
      %v597 = vpack.c.b16 %v509, %v507
      %v598 = vpack.c.b16 %v510, %v508
      %v599 = vpack.c.b16 %v513, %v511
      %v600 = vpack.c.b16 %v514, %v512
      %v601 = vpack.c.b16 %v517, %v515
      %v602 = vpack.c.b16 %v518, %v516
      %v603 = vpack.c.b16 %v521, %v519
      %v604 = vpack.c.b16 %v522, %v520
      %v605 = vpack.c.b16 %v525, %v523
      %v606 = vpack.c.b16 %v526, %v524
      %v607 = vpack.c.b16 %v529, %v527
      %v608 = vpack.c.b16 %v530, %v528
      %v609 = vpack.c.b16 %v533, %v531
      %v610 = vpack.c.b16 %v534, %v532
      %v611 = vpack.c.b16 %v537, %v535
      %v612 = vpack.c.b16 %v538, %v536
      %v613 = vpack.c.b16 %v541, %v539
      %v614 = vpack.c.b16 %v542, %v540
      %v615 = vpack.c.b16 %v545, %v543
      %v616 = vpack.c.b16 %v546, %v544
      %v617 = vpack.c.b16 %v549, %v547
      %v618 = vpack.c.b16 %v550, %v548
      %v619 = vpack.c.b16 %v553, %v551
      %v620 = vpack.c.b16 %v554, %v552
      %v621 = vpack.c.b16 %v557, %v555
      %v622 = vpack.c.b16 %v558, %v556
      %687 = vmatpush.bf16.msra.mxu0 %v573
      %688 = vmatpush.bf16.msra.mxu0 %v571
      %689 = vmatpush.bf16.msra.mxu0 %v569
      %690 = vmatpush.bf16.msra.mxu0 %v567
      %691 = vmatpush.bf16.msra.mxu0 %v565
      %692 = vmatpush.bf16.msra.mxu0 %v563
      %693 = vmatpush.bf16.msra.mxu0 %v561
      %694 = vmatpush.bf16.msra.mxu0 %v559
      %695 = vmatmul.bf16.gmra.mxu0 %v359
      %v696 = vpop.f32.mrf.mxu0
      %v697 = vadd.f32 0.0, %v696
      %v698 = vpop.f32.mrf.mxu0
      %699 = vdwg.mxu0
      %700 = vmatpush.bf16.msra.mxu0 %v589
      %701 = vmatpush.bf16.msra.mxu0 %v587
      %702 = vmatpush.bf16.msra.mxu0 %v585
      %703 = vmatpush.bf16.msra.mxu0 %v583
      %704 = vmatpush.bf16.msra.mxu0 %v581
      %705 = vmatpush.bf16.msra.mxu0 %v579
      %706 = vmatpush.bf16.msra.mxu0 %v577
      %707 = vmatpush.bf16.msra.mxu0 %v575
      %708 = vmatmul.bf16.gmra.mxu0 %v360
      %v709 = vpop.f32.mrf.mxu0
      %v710 = vadd.f32 %v697, %v709
      %v711 = vpop.f32.mrf.mxu0
      %712 = vdwg.mxu0
      %713 = vmatpush.bf16.msra.mxu0 %v605
      %714 = vmatpush.bf16.msra.mxu0 %v603
      %715 = vmatpush.bf16.msra.mxu0 %v601
      %716 = vmatpush.bf16.msra.mxu0 %v599
      %717 = vmatpush.bf16.msra.mxu0 %v597
      %718 = vmatpush.bf16.msra.mxu0 %v595
      %719 = vmatpush.bf16.msra.mxu0 %v593
      %720 = vmatpush.bf16.msra.mxu0 %v591
      %721 = vmatmul.bf16.gmra.mxu0 %v361
      %v722 = vpop.f32.mrf.mxu0
      %v723 = vadd.f32 %v710, %v722
      %v724 = vpop.f32.mrf.mxu0
      %725 = vdwg.mxu0
      %726 = vmatpush.bf16.msra.mxu0 %v621
      %727 = vmatpush.bf16.msra.mxu0 %v619
      %728 = vmatpush.bf16.msra.mxu0 %v617
      %729 = vmatpush.bf16.msra.mxu0 %v615
      %730 = vmatpush.bf16.msra.mxu0 %v613
      %731 = vmatpush.bf16.msra.mxu0 %v611
      %732 = vmatpush.bf16.msra.mxu0 %v609
      %733 = vmatpush.bf16.msra.mxu0 %v607
      %734 = vmatmul.bf16.gmra.mxu0 %v362
      %v735 = vpop.f32.mrf.mxu0
      %v736 = vadd.f32 %v723, %v735
      %v737 = vpop.f32.mrf.mxu0
      %738 = vdwg.mxu0
      %739 = vmatpush.bf16.msra.mxu0 %v574
      %740 = vmatpush.bf16.msra.mxu0 %v572
      %741 = vmatpush.bf16.msra.mxu0 %v570
      %742 = vmatpush.bf16.msra.mxu0 %v568
      %743 = vmatpush.bf16.msra.mxu0 %v566
      %744 = vmatpush.bf16.msra.mxu0 %v564
      %745 = vmatpush.bf16.msra.mxu0 %v562
      %746 = vmatpush.bf16.msra.mxu0 %v560
      %747 = vmatmul.bf16.gmra.mxu0 %v359
      %v748 = vpop.f32.mrf.mxu0
      %v749 = vadd.f32 0.0, %v748
      %v750 = vpop.f32.mrf.mxu0
      %751 = vdwg.mxu0
      %752 = vmatpush.bf16.msra.mxu0 %v590
      %753 = vmatpush.bf16.msra.mxu0 %v588
      %754 = vmatpush.bf16.msra.mxu0 %v586
      %755 = vmatpush.bf16.msra.mxu0 %v584
      %756 = vmatpush.bf16.msra.mxu0 %v582
      %757 = vmatpush.bf16.msra.mxu0 %v580
      %758 = vmatpush.bf16.msra.mxu0 %v578
      %759 = vmatpush.bf16.msra.mxu0 %v576
      %760 = vmatmul.bf16.gmra.mxu0 %v360
      %v761 = vpop.f32.mrf.mxu0
      %v762 = vadd.f32 %v749, %v761
      %v763 = vpop.f32.mrf.mxu0
      %764 = vdwg.mxu0
      %765 = vmatpush.bf16.msra.mxu0 %v606
      %766 = vmatpush.bf16.msra.mxu0 %v604
      %767 = vmatpush.bf16.msra.mxu0 %v602
      %768 = vmatpush.bf16.msra.mxu0 %v600
      %769 = vmatpush.bf16.msra.mxu0 %v598
      %770 = vmatpush.bf16.msra.mxu0 %v596
      %771 = vmatpush.bf16.msra.mxu0 %v594
      %772 = vmatpush.bf16.msra.mxu0 %v592
      %773 = vmatmul.bf16.gmra.mxu0 %v361
      %v774 = vpop.f32.mrf.mxu0
      %v775 = vadd.f32 %v762, %v774
      %v776 = vpop.f32.mrf.mxu0
      %777 = vdwg.mxu0
      %778 = vmatpush.bf16.msra.mxu0 %v622
      %779 = vmatpush.bf16.msra.mxu0 %v620
      %780 = vmatpush.bf16.msra.mxu0 %v618
      %781 = vmatpush.bf16.msra.mxu0 %v616
      %782 = vmatpush.bf16.msra.mxu0 %v614
      %783 = vmatpush.bf16.msra.mxu0 %v612
      %784 = vmatpush.bf16.msra.mxu0 %v610
      %785 = vmatpush.bf16.msra.mxu0 %v608
      %786 = vmatmul.bf16.gmra.mxu0 %v362
      %v787 = vpop.f32.mrf.mxu0
      %v788 = vadd.f32 %v775, %v787
      %v789 = vpop.f32.mrf.mxu0
      %790 = vdwg.mxu0
      %v791 = vadd.f32 %v285, %v736
      %v792 = vadd.f32 %v286, %v788
      %793 = vst [vmem:[#allocation2] sm:$0xff] %v791
      %794 = vst [vmem:[#allocation2 + $0x8] sm:$0xff] %v792
      %p795 = scmp.eq.s32.totalorder %s22, 3
      // Predicated region
      $region37: #{forward.9} parent=27 // pred_check
        %p796 = pneg %p795
      $region38: #{forward.9} parent=27 // pred_check_branch
        %798 = sbr.rel (%p796) target = $region40
      $region39: #{forward.9} parent=27 // pred_region
        %v799 = vld [vmem:[#allocation2] sm:$0xff]
        %v800 = vld [vmem:[#allocation2 + $0x8] sm:$0xff]
        %801 = vst [vmem:[%s264] sm:$0xff] %v799
        %802 = vst [vmem:[%s264 + $0x8] sm:$0xff] %v800
        %v803 = vld [vmem:[%s270] ss:$8 sm:$0x3]
        %v804 = vrot.slane %v799, 4
        %v805 = vadd.f32 %v799, %v804
        %v806 = vrot.slane %v805, 2
        %v807 = vadd.f32 %v805, %v806
        %v808 = vrot.slane %v807, 1
        %v809 = vadd.f32 %v807, %v808
        %v810 = vrot.slane %v800, 4
        %v811 = vadd.f32 %v800, %v810
        %v812 = vrot.slane %v811, 2
        %v813 = vadd.f32 %v811, %v812
        %v814 = vrot.slane %v813, 1
        %v815 = vadd.f32 %v813, %v814
        %v818 = vrot.slane %v815, 7
        %vm819 = vcmask 1040384
        %v820 = vsel %vm819, %v809, %v818
        %v822 = vadd.f32 %v803, %v820
        %v823 = vlaneseq
        %vm824 = vcmp.ge.s32.totalorder %v823, 0
        %vm825 = vcmp.lt.s32.totalorder %v823, 256
        %vm826 = vmand %vm824, %vm825
        %827 = vst.msk [vmem:[%s270] ss:$8 sm:$0x3] %vm826, %v822
        %828 = vst.msk [vmem:[%s270] ss:$8 sm:$0x0] %vm826, %v822
        %s829 = scalar_lea.vmem %s270, 1
        %v830 = vld [vmem:[%s829] ss:$8 sm:$0x3]
        %v831 = vmul.f32 %v799, %v799
        %v832 = vmul.f32 %v800, %v800
        %v833 = vrot.slane %v831, 4
        %v834 = vadd.f32 %v831, %v833
        %v835 = vrot.slane %v834, 2
        %v836 = vadd.f32 %v834, %v835
        %v837 = vrot.slane %v836, 1
        %v838 = vadd.f32 %v836, %v837
        %v839 = vrot.slane %v832, 4
        %v840 = vadd.f32 %v832, %v839
        %v841 = vrot.slane %v840, 2
        %v842 = vadd.f32 %v840, %v841
        %v843 = vrot.slane %v842, 1
        %v844 = vadd.f32 %v842, %v843
        %v847 = vrot.slane %v844, 7
        %v848 = vsel %vm819, %v838, %v847
        %v850 = vadd.f32 %v830, %v848
        %851 = vst.msk [vmem:[%s829] ss:$8 sm:$0x3] %vm826, %v850
        %852 = vst.msk [vmem:[%s829] ss:$8 sm:$0x0] %vm826, %v850
      $region40: #{forward.9} parent=27 // pred_fallthru
        _
      %s853 = smul.u32 2, %s20
      %p854 = scmp.lt.s32.totalorder %s21, 0
      %s855 = scalar_select %p854, %s21, 0
      %p856 = scmp.lt.s32.totalorder %s853, 1
      %s857 = scalar_select %p856, %s853, 1
      %s858 = smul.addr %s855, 2
      %s859 = sadd.s32 %s857, %s858
      %s860 = smul.addr %s859, 8
      %s861 = scalar_lea.vmem %s2, %s860
      %s862 = smul.u32 2, %s20
      %p863 = scmp.lt.s32.totalorder %s862, 1
      %s864 = scalar_select %p863, %s862, 1
      %s865 = smul.addr %s864, 8
      %s866 = scalar_lea.vmem %s3, %s865
      // Predicated region
      $region41: #{forward.9} parent=27 // pred_check
        %p867 = pneg %p110
      $region42: #{forward.9} parent=27 // pred_check_branch
        %869 = sbr.rel (%p867) target = $region44
      $region43: #{forward.9} parent=27 // pred_region
        %s870 = smul.u32 2, %s20
      $region44: #{forward.9} parent=27 // pred_fallthru
        _
      // Predicated region
      $region45: #{forward.9} parent=27 // pred_check
        %p871 = pneg %p136
      $region46: #{forward.9} parent=27 // pred_check_branch
        %873 = sbr.rel (%p871) target = $region48
      $region47: #{forward.9} parent=27 // pred_region
        %s874 = smul.u32 2, %s20
      $region48: #{forward.9} parent=27 // pred_fallthru
        _
      // Predicated region
      $region49: #{forward.9} parent=27 // pred_check
        %p875 = pneg %p110
      $region50: #{forward.9} parent=27 // pred_check_branch
        %877 = sbr.rel (%p875) target = $region52
      $region51: #{forward.9} parent=27 // pred_region
        %s878 = smul.u32 2, %s20
        %p879 = scmp.lt.s32.totalorder %s21, 0
        %s880 = scalar_select %p879, %s21, 0
        %p881 = scmp.lt.s32.totalorder %s878, 1
        %s882 = scalar_select %p881, %s878, 1
        %s883 = smul.addr %s880, 2
        %s884 = sadd.s32 %s882, %s883
        %s885 = smul.addr %s884, 8
        %s886 = scalar_lea.vmem %s2, %s885
      $region52: #{forward.9} parent=27 // pred_fallthru
        _
      // Predicated region
      $region53: #{forward.9} parent=27 // pred_check
        %p887 = pneg %p136
      $region54: #{forward.9} parent=27 // pred_check_branch
        %889 = sbr.rel (%p887) target = $region56
      $region55: #{forward.9} parent=27 // pred_region
        %s890 = smul.u32 2, %s20
        %p891 = scmp.lt.s32.totalorder %s890, 1
        %s892 = scalar_select %p891, %s890, 1
        %s893 = smul.addr %s892, 8
        %s894 = scalar_lea.vmem %s3, %s893
      $region56: #{forward.9} parent=27 // pred_fallthru
        _
    $region28: #{forward.9} parent=5 // pred_fallthru
      _
    %p895 = scmp.le.s32.totalorder 2, %s10
    // Predicated region
    $region57: #{forward.9} parent=5 // pred_check
      %p896 = pneg %p895
    $region58: #{forward.9} parent=5 // pred_check_branch
      %898 = sbr.rel (%p896) target = $region60
    $region59: #{forward.9} parent=5 // pred_region
      %s899 = ssub.s32 %s10, 2
    $region60: #{forward.9} parent=5 // pred_fallthru
      _
  $region6: #{forward.9} parent=0 // loop_footer
    %s14 = sadd.s32 1, %s10
  $region7: #{forward.9} parent=0 // loop_footer_branch
    %9 = sbr.rel target = $region3
  $region8: #{forward.9} parent=0 // loop_exit
    _

// kernel: forward.11
$region0: #{forward.11}
  #allocation0 [shape = 'u32[]', space=smem, size = 0x4, offset = 0x4, fixed_abs, tag = 'smem constant byte address 0x4 - core index']
  #allocation1 [shape = 'u32[72,128]{1,0:T(1,128)}', space=vmem, size = 0x9000, scoped, tag = 'internal scratch']
  #allocation2 [shape = 'f32[8,128]{1,0:T(8,128)}', space=vmem, size = 0x1000, scoped, tag = 'scratch operand']
  %s0 = inlined_call_operand.vmem [shape: bf16[8,4096], index: 0, kind: input, shape index: {}]
  %s1 = inlined_call_operand.vmem [shape: bf16[4096,128], index: 1, kind: input, shape index: {}]
  %s2 = inlined_call_operand.vmem [shape: f32[8,128], index: 2, kind: output, shape index: {}]
  %s3 = sld [smem:[#allocation0]]
  $region49: #{forward.11} parent=0
    _
  %s5 = ssub.s32 1, %s3
  %s6 = scalar_select 0, %s5, %s3
  loop: start=0, step=1, limit=10
  $region2: #{forward.11} parent=0 // loop_pre_header
    _
  $region3: #{forward.11} parent=0 // loop_header
    %s8 = sphi 0, %s12
    %p9 = scmp.ge.s32.totalorder %s8, 10
    %s15 = sphi 0, %s34
    %s16 = sphi 0, %s30
    %s17 = sphi 0, %s26
    %s18 = sphi 0, %s15
    %s19 = sphi 0, %s16
    %s20 = sphi 0, %s17
    %s21 = sphi 0, %s18
    %s22 = sphi 0, %s19
    %s23 = sphi 0, %s20
    %s39 = sphi 0, %s41
    %s42 = sphi 0, %s39
    %s43 = sphi 0, %s42
    %s59 = sphi 0, %s43
    %s67 = sphi 0, %s69
    %s70 = sphi 0, %s67
    %s71 = sphi 0, %s70
    %s87 = sphi 0, %s71
    %s95 = sphi 0, %s97
    %s98 = sphi 0, %s95
    %s99 = sphi 0, %s98
    %s115 = sphi 0, %s99
  $region4: #{forward.11} parent=0 // loop_header_branch
    %11 = sbr.rel (%p9) target = $region8
  $region5: #{forward.11} parent=0 // loop_body
    %s13 = ssub.s32 %s8, 1
    %s14 = ssub.s32 %s8, 2
    %s24 = sadd.s32 1, %s17
    %p25 = scmp.ge.s32.totalorder %s24, 8
    %s26 = scalar_select %p25, 0, %s24
    %s27 = sadd.s32 1, %s16
    %s28 = scalar_select %p25, %s27, %s16
    %p29 = scmp.ge.s32.totalorder %s28, 1
    %s30 = scalar_select %p29, 0, %s28
    %s31 = sadd.s32 1, %s15
    %s32 = scalar_select %p29, %s31, %s15
    %p33 = scmp.ge.s32.totalorder %s32, 1
    %s34 = scalar_select %p33, 0, %s32
    %s35 = ssub.s32 %s15, %s34
    %s36 = ssub.s32 %s17, %s26
    %s37 = sor.u32 %s35, %s36
    %p38 = scmp.eq.s32.totalorder %s37, 0
    %s40 = sadd.s32 %s39, 1
    %s41 = scalar_select %p38, %s39, %s40
    %p44 = pneg %p38
    %p45 = scmp.eq.s32.totalorder %s8, 7
    %p46 = por %p44, %p45
    %p47 = scmp.ne.s32.totalorder %s39, %s42
    %p48 = scmp.eq.s32.totalorder %s8, 0
    %p49 = por %p47, %p48
    %p50 = scmp.ne.s32.totalorder %s39, %s42
    %p51 = scmp.eq.s32.totalorder %s13, 7
    %p52 = por %p50, %p51
    %p53 = scmp.ne.s32.totalorder %s42, %s43
    %p54 = scmp.eq.s32.totalorder %s13, 0
    %p55 = por %p53, %p54
    %p56 = scmp.ne.s32.totalorder %s42, %s43
    %p57 = scmp.eq.s32.totalorder %s14, 7
    %p58 = por %p56, %p57
    %p60 = scmp.ne.s32.totalorder %s43, %s59
    %p61 = scmp.eq.s32.totalorder %s14, 0
    %p62 = por %p60, %p61
    %s63 = ssub.s32 %s17, %s26
    %s64 = ssub.s32 %s16, %s30
    %s65 = sor.u32 %s63, %s64
    %p66 = scmp.eq.s32.totalorder %s65, 0
    %s68 = sadd.s32 %s67, 1
    %s69 = scalar_select %p66, %s67, %s68
    %p72 = pneg %p66
    %p73 = scmp.eq.s32.totalorder %s8, 7
    %p74 = por %p72, %p73
    %p75 = scmp.ne.s32.totalorder %s67, %s70
    %p76 = scmp.eq.s32.totalorder %s8, 0
    %p77 = por %p75, %p76
    %p78 = scmp.ne.s32.totalorder %s67, %s70
    %p79 = scmp.eq.s32.totalorder %s13, 7
    %p80 = por %p78, %p79
    %p81 = scmp.ne.s32.totalorder %s70, %s71
    %p82 = scmp.eq.s32.totalorder %s13, 0
    %p83 = por %p81, %p82
    %p84 = scmp.ne.s32.totalorder %s70, %s71
    %p85 = scmp.eq.s32.totalorder %s14, 7
    %p86 = por %p84, %p85
    %p88 = scmp.ne.s32.totalorder %s71, %s87
    %p89 = scmp.eq.s32.totalorder %s14, 0
    %p90 = por %p88, %p89
    %s91 = ssub.s32 %s15, %s34
    %s92 = ssub.s32 %s16, %s30
    %s93 = sor.u32 %s91, %s92
    %p94 = scmp.eq.s32.totalorder %s93, 0
    %s96 = sadd.s32 %s95, 1
    %s97 = scalar_select %p94, %s95, %s96
    %p100 = pneg %p94
    %p101 = scmp.eq.s32.totalorder %s8, 7
    %p102 = por %p100, %p101
    %p103 = scmp.ne.s32.totalorder %s95, %s98
    %p104 = scmp.eq.s32.totalorder %s8, 0
    %p105 = por %p103, %p104
    %p106 = scmp.ne.s32.totalorder %s95, %s98
    %p107 = scmp.eq.s32.totalorder %s13, 7
    %p108 = por %p106, %p107
    %p109 = scmp.ne.s32.totalorder %s98, %s99
    %p110 = scmp.eq.s32.totalorder %s13, 0
    %p111 = por %p109, %p110
    %p112 = scmp.ne.s32.totalorder %s98, %s99
    %p113 = scmp.eq.s32.totalorder %s14, 7
    %p114 = por %p112, %p113
    %p116 = scmp.ne.s32.totalorder %s99, %s115
    %p117 = scmp.eq.s32.totalorder %s14, 0
    %p118 = por %p116, %p117
    %p119 = scmp.le.s32.totalorder 1, %s8
    %p120 = scmp.lt.s32.totalorder %s8, 9
    %p121 = pnand %p119, %p120
    %p122 = pneg %p121
    // Predicated region
    $region9: #{forward.11} parent=5 // pred_check
      _
    $region10: #{forward.11} parent=5 // pred_check_branch
      %124 = sbr.rel (%p121) target = $region12
    $region11: #{forward.11} parent=5 // pred_region
      %s125 = ssub.s32 %s8, 1
    $region12: #{forward.11} parent=5 // pred_fallthru
      _
    %p126 = scmp.lt.s32.totalorder %s8, 8
    // Predicated region
    $region13: #{forward.11} parent=5 // pred_check
      %p127 = pneg %p126
    $region14: #{forward.11} parent=5 // pred_check_branch
      %129 = sbr.rel (%p127) target = $region16
    $region15: #{forward.11} parent=5 // pred_region
      // Predicated region
      $region17: #{forward.11} parent=15 // pred_check
        %p130 = pneg %p49
      $region18: #{forward.11} parent=15 // pred_check_branch
        %132 = sbr.rel (%p130) target = $region20
      $region19: #{forward.11} parent=15 // pred_region
        %s133 = smul.u32 4, %s17
        %p134 = scmp.lt.s32.totalorder %s15, 0
        %s135 = scalar_select %p134, %s15, 0
        %p136 = scmp.lt.s32.totalorder %s133, 31
        %s137 = scalar_select %p136, %s133, 31
        %s138 = smul.addr %s135, 32
        %s139 = sadd.s32 %s137, %s138
        %s140 = smul.addr %s139, 4
        %s141 = scalar_lea.vmem %s0, %s140
        %s142 = smul.u32 4, %s17
      $region20: #{forward.11} parent=15 // pred_fallthru
        _
      // Predicated region
      $region21: #{forward.11} parent=15 // pred_check
        %p143 = pneg %p77
      $region22: #{forward.11} parent=15 // pred_check_branch
        %145 = sbr.rel (%p143) target = $region24
      $region23: #{forward.11} parent=15 // pred_region
        %s146 = smul.u32 64, %s17
        %p147 = scmp.lt.s32.totalorder %s146, 511
        %s148 = scalar_select %p147, %s146, 511
        %p149 = scmp.lt.s32.totalorder %s16, 0
        %s150 = scalar_select %p149, %s16, 0
        %s151 = sadd.s32 %s150, %s148
        %s152 = smul.addr %s151, 4
        %s153 = scalar_lea.vmem %s1, %s152
        %s154 = smul.u32 64, %s17
      $region24: #{forward.11} parent=15 // pred_fallthru
        _
    $region16: #{forward.11} parent=5 // pred_fallthru
      _
    %p155 = scmp.le.s32.totalorder 1, %s8
    %p156 = scmp.lt.s32.totalorder %s8, 9
    %p157 = pnand %p155, %p156
    %p158 = pneg %p157
    // Predicated region
    $region25: #{forward.11} parent=5 // pred_check
      _
    $region26: #{forward.11} parent=5 // pred_check_branch
      %160 = sbr.rel (%p157) target = $region28
    $region27: #{forward.11} parent=5 // pred_region
      %s161 = ssub.s32 %s8, 1
      %s162 = smul.u32 4, %s20
      %p163 = scmp.lt.s32.totalorder %s18, 0
      %s164 = scalar_select %p163, %s18, 0
      %p165 = scmp.lt.s32.totalorder %s162, 31
      %s166 = scalar_select %p165, %s162, 31
      %s167 = smul.addr %s164, 32
      %s168 = sadd.s32 %s166, %s167
      %s169 = smul.addr %s168, 4
      %s170 = scalar_lea.vmem %s0, %s169
      %p171 = pneg %p55
      %p172 = pneg %p52
      %s173 = smul.u32 64, %s20
      %p174 = scmp.lt.s32.totalorder %s173, 511
      %s175 = scalar_select %p174, %s173, 511
      %p176 = scmp.lt.s32.totalorder %s19, 0
      %s177 = scalar_select %p176, %s19, 0
      %s178 = sadd.s32 %s177, %s175
      %s179 = smul.addr %s178, 4
      %s180 = scalar_lea.vmem %s1, %s179
      %p181 = pneg %p83
      %p182 = pneg %p80
      %p183 = pneg %p111
      %p184 = pneg %p108
      %p185 = scmp.lt.s32.totalorder %s18, 0
      %s186 = scalar_select %p185, %s18, 0
      %p187 = scmp.lt.s32.totalorder %s19, 0
      %s188 = scalar_select %p187, %s19, 0
      %s189 = sadd.s32 %s188, %s186
      %s190 = smul.addr %s189, 8
      %s191 = scalar_lea.vmem %s2, %s190
      %s192 = smul.u32 4, %s20
      %p193 = scmp.lt.s32.totalorder %s18, 0
      %s194 = scalar_select %p193, %s18, 0
      %p195 = scmp.lt.s32.totalorder %s192, 31
      %s196 = scalar_select %p195, %s192, 31
      %s197 = smul.addr %s194, 32
      %s198 = sadd.s32 %s196, %s197
      %s199 = smul.addr %s198, 4
      %s200 = scalar_lea.vmem %s0, %s199
      %s201 = smul.u32 4, %s20
      %s202 = smul.u32 64, %s20
      %p203 = scmp.lt.s32.totalorder %s202, 511
      %s204 = scalar_select %p203, %s202, 511
      %p205 = scmp.lt.s32.totalorder %s19, 0
      %s206 = scalar_select %p205, %s19, 0
      %s207 = sadd.s32 %s206, %s204
      %s208 = smul.addr %s207, 4
      %s209 = scalar_lea.vmem %s1, %s208
      %s210 = smul.u32 64, %s20
      %p211 = scmp.lt.s32.totalorder %s18, 0
      %s212 = scalar_select %p211, %s18, 0
      %p213 = scmp.lt.s32.totalorder %s19, 0
      %s214 = scalar_select %p213, %s19, 0
      %s215 = sadd.s32 %s214, %s212
      %s216 = smul.addr %s215, 8
      %s217 = scalar_lea.vmem %s2, %s216
      %p218 = scmp.eq.s32.totalorder %s20, 0
      // Predicated region
      $region29: #{forward.11} parent=27 // pred_check
        %p219 = pneg %p218
      $region30: #{forward.11} parent=27 // pred_check_branch
        %221 = sbr.rel (%p219) target = $region32
      $region31: #{forward.11} parent=27 // pred_region
        %222 = vst [vmem:[#allocation2] sm:$0xff] 0.0
      $region32: #{forward.11} parent=27 // pred_fallthru
        _
      %v223 = vld [vmem:[#allocation2] sm:$0xff]
      %v224 = vld [vmem:[%s200] sm:$0xff]
      %v225 = vld [vmem:[%s200 + $0x8] sm:$0xff]
      %v226 = vld [vmem:[%s209] sm:$0xf]
      %v227 = vld [vmem:[%s209 + $0x4] sm:$0xf]
      %v228 = vld [vmem:[%s209 + $0x8] sm:$0xf]
      %v229 = vld [vmem:[%s209 + $0xc] sm:$0xf]
      %v230 = vld [vmem:[%s209 + $0x10] sm:$0xf]
      %v231 = vld [vmem:[%s209 + $0x14] sm:$0xf]
      %v232 = vld [vmem:[%s209 + $0x18] sm:$0xf]
      %v233 = vld [vmem:[%s209 + $0x1c] sm:$0xf]
      %v234 = vld [vmem:[%s209 + $0x20] sm:$0xf]
      %v235 = vld [vmem:[%s209 + $0x24] sm:$0xf]
      %v236 = vld [vmem:[%s209 + $0x28] sm:$0xf]
      %v237 = vld [vmem:[%s209 + $0x2c] sm:$0xf]
      %v238 = vld [vmem:[%s209 + $0x30] sm:$0xf]
      %v239 = vld [vmem:[%s209 + $0x34] sm:$0xf]
      %v240 = vld [vmem:[%s209 + $0x38] sm:$0xf]
      %v241 = vld [vmem:[%s209 + $0x3c] sm:$0xf]
      %v242 = vld [vmem:[%s209 + $0x40] sm:$0xf]
      %v243 = vld [vmem:[%s209 + $0x44] sm:$0xf]
      %v244 = vld [vmem:[%s209 + $0x48] sm:$0xf]
      %v245 = vld [vmem:[%s209 + $0x4c] sm:$0xf]
      %v246 = vld [vmem:[%s209 + $0x50] sm:$0xf]
      %v247 = vld [vmem:[%s209 + $0x54] sm:$0xf]
      %v248 = vld [vmem:[%s209 + $0x58] sm:$0xf]
      %v249 = vld [vmem:[%s209 + $0x5c] sm:$0xf]
      %v250 = vld [vmem:[%s209 + $0x60] sm:$0xf]
      %v251 = vld [vmem:[%s209 + $0x64] sm:$0xf]
      %v252 = vld [vmem:[%s209 + $0x68] sm:$0xf]
      %v253 = vld [vmem:[%s209 + $0x6c] sm:$0xf]
      %v254 = vld [vmem:[%s209 + $0x70] sm:$0xf]
      %v255 = vld [vmem:[%s209 + $0x74] sm:$0xf]
      %v256 = vld [vmem:[%s209 + $0x78] sm:$0xf]
      %v257 = vld [vmem:[%s209 + $0x7c] sm:$0xf]
      %v258 = vld [vmem:[%s209 + $0x80] sm:$0xf]
      %v259 = vld [vmem:[%s209 + $0x84] sm:$0xf]
      %v260 = vld [vmem:[%s209 + $0x88] sm:$0xf]
      %v261 = vld [vmem:[%s209 + $0x8c] sm:$0xf]
      %v262 = vld [vmem:[%s209 + $0x90] sm:$0xf]
      %v263 = vld [vmem:[%s209 + $0x94] sm:$0xf]
      %v264 = vld [vmem:[%s209 + $0x98] sm:$0xf]
      %v265 = vld [vmem:[%s209 + $0x9c] sm:$0xf]
      %v266 = vld [vmem:[%s209 + $0xa0] sm:$0xf]
      %v267 = vld [vmem:[%s209 + $0xa4] sm:$0xf]
      %v268 = vld [vmem:[%s209 + $0xa8] sm:$0xf]
      %v269 = vld [vmem:[%s209 + $0xac] sm:$0xf]
      %v270 = vld [vmem:[%s209 + $0xb0] sm:$0xf]
      %v271 = vld [vmem:[%s209 + $0xb4] sm:$0xf]
      %v272 = vld [vmem:[%s209 + $0xb8] sm:$0xf]
      %v273 = vld [vmem:[%s209 + $0xbc] sm:$0xf]
      %v274 = vld [vmem:[%s209 + $0xc0] sm:$0xf]
      %v275 = vld [vmem:[%s209 + $0xc4] sm:$0xf]
      %v276 = vld [vmem:[%s209 + $0xc8] sm:$0xf]
      %v277 = vld [vmem:[%s209 + $0xcc] sm:$0xf]
      %v278 = vld [vmem:[%s209 + $0xd0] sm:$0xf]
      %v279 = vld [vmem:[%s209 + $0xd4] sm:$0xf]
      %v280 = vld [vmem:[%s209 + $0xd8] sm:$0xf]
      %v281 = vld [vmem:[%s209 + $0xdc] sm:$0xf]
      %v282 = vld [vmem:[%s209 + $0xe0] sm:$0xf]
      %v283 = vld [vmem:[%s209 + $0xe4] sm:$0xf]
      %v284 = vld [vmem:[%s209 + $0xe8] sm:$0xf]
      %v285 = vld [vmem:[%s209 + $0xec] sm:$0xf]
      %v286 = vld [vmem:[%s209 + $0xf0] sm:$0xf]
      %v287 = vld [vmem:[%s209 + $0xf4] sm:$0xf]
      %v288 = vld [vmem:[%s209 + $0xf8] sm:$0xf]
      %v289 = vld [vmem:[%s209 + $0xfc] sm:$0xf]
      %v292 = vunpack.c.l.b16 %v224
      %v293 = vunpack.c.h.b16 %v224
      %v294 = vunpack.c.l.b16 %v225
      %v295 = vunpack.c.h.b16 %v225
      %v296 = vpack.c.b16 %v292, %v292
      %v297 = vpack.c.b16 %v293, %v293
      %v298 = vpack.c.b16 %v294, %v294
      %v299 = vpack.c.b16 %v295, %v295
      %v368 = vunpack.c.l.b16 %v226
      %v369 = vunpack.c.l.b16 %v227
      %v370 = vunpack.c.l.b16 %v228
      %v371 = vunpack.c.l.b16 %v229
      %v372 = vunpack.c.l.b16 %v230
      %v373 = vunpack.c.l.b16 %v231
      %v374 = vunpack.c.l.b16 %v232
      %v375 = vunpack.c.l.b16 %v233
      %v376 = vunpack.c.l.b16 %v234
      %v377 = vunpack.c.l.b16 %v235
      %v378 = vunpack.c.l.b16 %v236
      %v379 = vunpack.c.l.b16 %v237
      %v380 = vunpack.c.l.b16 %v238
      %v381 = vunpack.c.l.b16 %v239
      %v382 = vunpack.c.l.b16 %v240
      %v383 = vunpack.c.l.b16 %v241
      %v384 = vunpack.c.l.b16 %v242
      %v385 = vunpack.c.l.b16 %v243
      %v386 = vunpack.c.l.b16 %v244
      %v387 = vunpack.c.l.b16 %v245
      %v388 = vunpack.c.l.b16 %v246
      %v389 = vunpack.c.l.b16 %v247
      %v390 = vunpack.c.l.b16 %v248
      %v391 = vunpack.c.l.b16 %v249
      %v392 = vunpack.c.l.b16 %v250
      %v393 = vunpack.c.l.b16 %v251
      %v394 = vunpack.c.l.b16 %v252
      %v395 = vunpack.c.l.b16 %v253
      %v396 = vunpack.c.l.b16 %v254
      %v397 = vunpack.c.l.b16 %v255
      %v398 = vunpack.c.l.b16 %v256
      %v399 = vunpack.c.l.b16 %v257
      %v400 = vunpack.c.l.b16 %v258
      %v401 = vunpack.c.l.b16 %v259
      %v402 = vunpack.c.l.b16 %v260
      %v403 = vunpack.c.l.b16 %v261
      %v404 = vunpack.c.l.b16 %v262
      %v405 = vunpack.c.l.b16 %v263
      %v406 = vunpack.c.l.b16 %v264
      %v407 = vunpack.c.l.b16 %v265
      %v408 = vunpack.c.l.b16 %v266
      %v409 = vunpack.c.l.b16 %v267
      %v410 = vunpack.c.l.b16 %v268
      %v411 = vunpack.c.l.b16 %v269
      %v412 = vunpack.c.l.b16 %v270
      %v413 = vunpack.c.l.b16 %v271
      %v414 = vunpack.c.l.b16 %v272
      %v415 = vunpack.c.l.b16 %v273
      %v416 = vunpack.c.l.b16 %v274
      %v417 = vunpack.c.l.b16 %v275
      %v418 = vunpack.c.l.b16 %v276
      %v419 = vunpack.c.l.b16 %v277
      %v420 = vunpack.c.l.b16 %v278
      %v421 = vunpack.c.l.b16 %v279
      %v422 = vunpack.c.l.b16 %v280
      %v423 = vunpack.c.l.b16 %v281
      %v424 = vunpack.c.l.b16 %v282
      %v425 = vunpack.c.l.b16 %v283
      %v426 = vunpack.c.l.b16 %v284
      %v427 = vunpack.c.l.b16 %v285
      %v428 = vunpack.c.l.b16 %v286
      %v429 = vunpack.c.l.b16 %v287
      %v430 = vunpack.c.l.b16 %v288
      %v431 = vunpack.c.l.b16 %v289
      %v432 = vpack.c.b16 %v369, %v368
      %v433 = vpack.c.b16 %v371, %v370
      %v434 = vpack.c.b16 %v373, %v372
      %v435 = vpack.c.b16 %v375, %v374
      %v436 = vpack.c.b16 %v377, %v376
      %v437 = vpack.c.b16 %v379, %v378
      %v438 = vpack.c.b16 %v381, %v380
      %v439 = vpack.c.b16 %v383, %v382
      %v440 = vpack.c.b16 %v385, %v384
      %v441 = vpack.c.b16 %v387, %v386
      %v442 = vpack.c.b16 %v389, %v388
      %v443 = vpack.c.b16 %v391, %v390
      %v444 = vpack.c.b16 %v393, %v392
      %v445 = vpack.c.b16 %v395, %v394
      %v446 = vpack.c.b16 %v397, %v396
      %v447 = vpack.c.b16 %v399, %v398
      %v448 = vpack.c.b16 %v401, %v400
      %v449 = vpack.c.b16 %v403, %v402
      %v450 = vpack.c.b16 %v405, %v404
      %v451 = vpack.c.b16 %v407, %v406
      %v452 = vpack.c.b16 %v409, %v408
      %v453 = vpack.c.b16 %v411, %v410
      %v454 = vpack.c.b16 %v413, %v412
      %v455 = vpack.c.b16 %v415, %v414
      %v456 = vpack.c.b16 %v417, %v416
      %v457 = vpack.c.b16 %v419, %v418
      %v458 = vpack.c.b16 %v421, %v420
      %v459 = vpack.c.b16 %v423, %v422
      %v460 = vpack.c.b16 %v425, %v424
      %v461 = vpack.c.b16 %v427, %v426
      %v462 = vpack.c.b16 %v429, %v428
      %v463 = vpack.c.b16 %v431, %v430
      %496 = vmatpush.bf16.msra.mxu0 %v439
      %497 = vmatpush.bf16.msra.mxu0 %v438
      %498 = vmatpush.bf16.msra.mxu0 %v437
      %499 = vmatpush.bf16.msra.mxu0 %v436
      %500 = vmatpush.bf16.msra.mxu0 %v435
      %501 = vmatpush.bf16.msra.mxu0 %v434
      %502 = vmatpush.bf16.msra.mxu0 %v433
      %503 = vmatpush.bf16.msra.mxu0 %v432
      %504 = vmatmul.bf16.gmra.mxu0 %v296
      %v505 = vpop.f32.mrf.mxu0
      %v506 = vadd.f32 0.0, %v505
      %v507 = vpop.f32.mrf.mxu0
      %508 = vdwg.mxu0
      %509 = vmatpush.bf16.msra.mxu0 %v447
      %510 = vmatpush.bf16.msra.mxu0 %v446
      %511 = vmatpush.bf16.msra.mxu0 %v445
      %512 = vmatpush.bf16.msra.mxu0 %v444
      %513 = vmatpush.bf16.msra.mxu0 %v443
      %514 = vmatpush.bf16.msra.mxu0 %v442
      %515 = vmatpush.bf16.msra.mxu0 %v441
      %516 = vmatpush.bf16.msra.mxu0 %v440
      %517 = vmatmul.bf16.gmra.mxu0 %v297
      %v518 = vpop.f32.mrf.mxu0
      %v519 = vadd.f32 %v506, %v518
      %v520 = vpop.f32.mrf.mxu0
      %521 = vdwg.mxu0
      %522 = vmatpush.bf16.msra.mxu0 %v455
      %523 = vmatpush.bf16.msra.mxu0 %v454
      %524 = vmatpush.bf16.msra.mxu0 %v453
      %525 = vmatpush.bf16.msra.mxu0 %v452
      %526 = vmatpush.bf16.msra.mxu0 %v451
      %527 = vmatpush.bf16.msra.mxu0 %v450
      %528 = vmatpush.bf16.msra.mxu0 %v449
      %529 = vmatpush.bf16.msra.mxu0 %v448
      %530 = vmatmul.bf16.gmra.mxu0 %v298
      %v531 = vpop.f32.mrf.mxu0
      %v532 = vadd.f32 %v519, %v531
      %v533 = vpop.f32.mrf.mxu0
      %534 = vdwg.mxu0
      %535 = vmatpush.bf16.msra.mxu0 %v463
      %536 = vmatpush.bf16.msra.mxu0 %v462
      %537 = vmatpush.bf16.msra.mxu0 %v461
      %538 = vmatpush.bf16.msra.mxu0 %v460
      %539 = vmatpush.bf16.msra.mxu0 %v459
      %540 = vmatpush.bf16.msra.mxu0 %v458
      %541 = vmatpush.bf16.msra.mxu0 %v457
      %542 = vmatpush.bf16.msra.mxu0 %v456
      %543 = vmatmul.bf16.gmra.mxu0 %v299
      %v544 = vpop.f32.mrf.mxu0
      %v545 = vadd.f32 %v532, %v544
      %v546 = vpop.f32.mrf.mxu0
      %547 = vdwg.mxu0
      %v548 = vadd.f32 %v223, %v545
      %549 = vst [vmem:[#allocation2] sm:$0xff] %v548
      %p550 = scmp.eq.s32.totalorder %s20, 7
      // Predicated region
      $region33: #{forward.11} parent=27 // pred_check
        %p551 = pneg %p550
      $region34: #{forward.11} parent=27 // pred_check_branch
        %553 = sbr.rel (%p551) target = $region36
      $region35: #{forward.11} parent=27 // pred_region
        %v554 = vld [vmem:[#allocation2] sm:$0xff]
        %v555 = vxor.u32 %v554, 2147483648
        %v556 = vmul.f32 %v555, 1.442695
        %v557 = vpow.pop %v556
        %v558 = vadd.f32 %v557, 1.0
        %v559 = vrcp.pop %v558
        %v560 = vmul.f32 %v558, %v559
        %v561 = vsub.f32 1.0, %v560
        %v562 = vmul.f32 %v559, %v561
        %v563 = vadd.f32 %v559, %v562
        %vm564 = vweird.f32 %v558
        %vm565 = vweird.f32 %v559
        %vm566 = vmor %vm564, %vm565
        %v567 = vsel %vm566, %v559, %v563
        %v568 = vand.u32 2147483647, %v558
        %vm569 = vcmp.eq.f32.partialorder %v568, 8.507059e+37
        %v570 = vand.u32 %v558, 2147483648
        %v571 = vor.u32 1.1754944e-38, %v570
        %v572 = vsel %vm569, %v571, %v567
        %v573 = vmul.f32 1.0, %v572
        %574 = vst [vmem:[%s217] sm:$0xff] %v573
      $region36: #{forward.11} parent=27 // pred_fallthru
        _
      %p575 = scmp.lt.s32.totalorder %s18, 0
      %s576 = scalar_select %p575, %s18, 0
      %p577 = scmp.lt.s32.totalorder %s19, 0
      %s578 = scalar_select %p577, %s19, 0
      %s579 = sadd.s32 %s578, %s576
      %s580 = smul.addr %s579, 8
      %s581 = scalar_lea.vmem %s2, %s580
      // Predicated region
      $region37: #{forward.11} parent=27 // pred_check
        %p582 = pneg %p108
      $region38: #{forward.11} parent=27 // pred_check_branch
        %584 = sbr.rel (%p582) target = $region40
      $region39: #{forward.11} parent=27 // pred_region
        _
      $region40: #{forward.11} parent=27 // pred_fallthru
        _
      // Predicated region
      $region41: #{forward.11} parent=27 // pred_check
        %p585 = pneg %p108
      $region42: #{forward.11} parent=27 // pred_check_branch
        %587 = sbr.rel (%p585) target = $region44
      $region43: #{forward.11} parent=27 // pred_region
        %p588 = scmp.lt.s32.totalorder %s18, 0
        %s589 = scalar_select %p588, %s18, 0
        %p590 = scmp.lt.s32.totalorder %s19, 0
        %s591 = scalar_select %p590, %s19, 0
        %s592 = sadd.s32 %s591, %s589
        %s593 = smul.addr %s592, 8
        %s594 = scalar_lea.vmem %s2, %s593
      $region44: #{forward.11} parent=27 // pred_fallthru
        _
    $region28: #{forward.11} parent=5 // pred_fallthru
      _
    %p595 = scmp.le.s32.totalorder 2, %s8
    // Predicated region
    $region45: #{forward.11} parent=5 // pred_check
      %p596 = pneg %p595
    $region46: #{forward.11} parent=5 // pred_check_branch
      %598 = sbr.rel (%p596) target = $region48
    $region47: #{forward.11} parent=5 // pred_region
      %s599 = ssub.s32 %s8, 2
    $region48: #{forward.11} parent=5 // pred_fallthru
      _
  $region6: #{forward.11} parent=0 // loop_footer
    %s12 = sadd.s32 1, %s8
  $region7: #{forward.11} parent=0 // loop_footer_branch
    %7 = sbr.rel target = $region3
  $region8: #{forward.11} parent=0 // loop_exit
    _

</llo_original>
